<compile_context>
chip_gen: v7x
topology: tpu7x:2x2x1
jax: 0.10.0
libtpu: 0.0.40
codegen_flags: <defaults>
</compile_context>

<pallas_src>
import functools

import jax
import jax.numpy as jnp
from jax.experimental import pallas as pl
from jax.experimental.pallas import tpu as pltpu

K_IN = 784      # input features (28*28)
H1 = 512
H2 = 256


def _round_up(n, m):
    return ((n + m - 1) // m) * m


def _discriminator_kernel(x_ref, w1_ref, b1_ref, w2_ref, b2_ref,
                          w3_ref, b3_ref, o_ref):
    # ---- Layer 1: Linear(784 -> 512) + LeakyReLU(0.2) ----
    # f32 x tile is cast to bf16 here (VPU pack work, co-issues under the MXU);
    # MXU accumulates in f32.
    x = x_ref[...].astype(jnp.bfloat16)
    h1 = jnp.dot(x, w1_ref[...],
                 preferred_element_type=jnp.float32) + b1_ref[...]
    h1 = jnp.maximum(h1, 0.2 * h1)

    # ---- Layer 2: Linear(512 -> 256) + LeakyReLU(0.2) ----
    h2 = jnp.dot(h1.astype(jnp.bfloat16), w2_ref[...],
                 preferred_element_type=jnp.float32) + b2_ref[...]
    h2 = jnp.maximum(h2, 0.2 * h2)

    # ---- Layer 3: Linear(256 -> 1) + Sigmoid ----
    # N=1 matmul would waste the MXU; do it on the VPU/XLU instead:
    # broadcast-multiply by the (1, 256) weight row and reduce over lanes.
    logits = jnp.sum(h2 * w3_ref[...], axis=-1, keepdims=True) + b3_ref[...]
    o_ref[...] = pl.reciprocal(1.0 + jnp.exp(-logits), approx=True)


def init_params(key):
    """Raw f32 params matching PyTorch Linear default U(-1/sqrt(fan_in), +)."""
    dims = [(K_IN, H1), (H1, H2), (H2, 1)]
    params = []
    for (fan_in, fan_out) in dims:
        key, kw, kb = jax.random.split(key, 3)
        bound = 1.0 / (fan_in ** 0.5)
        w = jax.random.uniform(kw, (fan_in, fan_out), jnp.float32,
                               minval=-bound, maxval=bound)
        b = jax.random.uniform(kb, (1, fan_out), jnp.float32,
                               minval=-bound, maxval=bound)
        params.extend([w, b])
    return tuple(params)


def prepare_params(raw_params):
    """One-time (load-time) cast / relayout of the raw f32 params."""
    w1, b1, w2, b2, w3, b3 = raw_params
    return (w1.astype(jnp.bfloat16),            # (784, 512) bf16
            b1.astype(jnp.float32),              # (1, 512)
            w2.astype(jnp.bfloat16),              # (512, 256) bf16
            b2.astype(jnp.float32),               # (1, 256)
            w3.reshape(1, H2).astype(jnp.float32),  # (1, 256) row for VPU reduce
            b3.reshape(1, 1).astype(jnp.float32))   # (1, 1)


@functools.partial(jax.jit, static_argnames=("block_b",))
def discriminator_forward(x, params, *, block_b=1024):
    """x: (B, 784) float32. Returns (B, 1) float32 in [0, 1]."""
    w1, b1, w2, b2, w3_row, b3 = params
    B = x.shape[0]

    # Batch tile: multiple of 128 rows (full MXU M passes), at most block_b,
    # and small enough that the grid has >= 2 steps when B allows it
    # (so both v7x TensorCores get work under the "parallel" semantics).
    TB = min(block_b, _round_up(pl.cdiv(B, 2), 128))
    num_tiles = pl.cdiv(B, TB)          # last block may be partial (padded rows)
    grid = (num_tiles,)

    flops = 2 * num_tiles * TB * (K_IN * H1 + H1 * H2 + H2)
    bytes_accessed = (B * K_IN * 4                      # f32 x read once
                      + w1.size * 2 + w2.size * 2       # bf16 weights
                      + (b1.size + b2.size + w3_row.size + b3.size) * 4
                      + num_tiles * TB * 4)             # f32 output

    out = pl.pallas_call(
        _discriminator_kernel,
        out_shape=jax.ShapeDtypeStruct((num_tiles * TB, 1), jnp.float32),
        grid=grid,
        in_specs=[
            pl.BlockSpec((TB, K_IN), lambda i: (i, 0)),   # x tile (pipelined)
            pl.BlockSpec((K_IN, H1), lambda i: (0, 0)),   # w1 (VMEM-resident)
            pl.BlockSpec((1, H1),    lambda i: (0, 0)),   # b1
            pl.BlockSpec((H1, H2),   lambda i: (0, 0)),   # w2
            pl.BlockSpec((1, H2),    lambda i: (0, 0)),   # b2
            pl.BlockSpec((1, H2),    lambda i: (0, 0)),   # w3 row
            pl.BlockSpec((1, 1),     lambda i: (0, 0)),   # b3
        ],
        out_specs=pl.BlockSpec((TB, 1), lambda i: (i, 0)),
        compiler_params=pltpu.CompilerParams(
            dimension_semantics=("parallel",),
            vmem_limit_bytes=32 * 1024 * 1024),
        cost_estimate=pl.CostEstimate(
            flops=flops, transcendentals=num_tiles * TB,
            bytes_accessed=bytes_accessed),
    )(x, w1, b1, w2, b2, w3_row, b3)

    # Rows past B (partial last tile) are garbage but row-independent; drop them.
    return out[:B]


def _reference_forward(x, raw_params):
    """Pure-JAX reference mirroring the kernel's bf16-operand / f32-accum path."""
    w1, b1, w2, b2, w3, b3 = raw_params
    q = lambda a: a.astype(jnp.bfloat16).astype(jnp.float32)
    h = q(x) @ q(w1) + b1
    h = jnp.maximum(h, 0.2 * h)
    h = q(h) @ q(w2) + b2
    h = jnp.maximum(h, 0.2 * h)
    logits = h @ w3 + b3
    return jax.nn.sigmoid(logits)


if __name__ == "__main__":
    key = jax.random.PRNGKey(0)
    key, kx = jax.random.split(key)
    batch = 8  # flattened 28x28 "images"; kernel handles the partial tile
    x = jax.random.normal(kx, (batch, K_IN), jnp.float32)

    raw_params = init_params(key)
    params = prepare_params(raw_params)

    out = discriminator_forward(x, params)
    out = jax.block_until_ready(out)

    ref = _reference_forward(x, raw_params)
    assert out.shape == (batch, 1), out.shape
    assert bool(jnp.all(jnp.isfinite(out)))
    assert jnp.allclose(out, ref, atol=5e-3, rtol=5e-3), (
        f"max abs diff {jnp.max(jnp.abs(out - ref))}")

    print("KERNEL_OK")
</pallas_src>

<mosaic_0001>
module attributes {stable_mosaic.version = 11 : i64} {
  func.func @_discriminator_kernel(%arg0: i32, %arg1: memref<128x784xf32, #tpu.memory_space<vmem>>, %arg2: memref<784x512xbf16, #tpu.memory_space<vmem>>, %arg3: memref<1x512xf32, #tpu.memory_space<vmem>>, %arg4: memref<512x256xbf16, #tpu.memory_space<vmem>>, %arg5: memref<1x256xf32, #tpu.memory_space<vmem>>, %arg6: memref<1x256xf32, #tpu.memory_space<vmem>>, %arg7: memref<1x1xf32, #tpu.memory_space<vmem>>, %arg8: memref<128x1xf32, #tpu.memory_space<vmem>>) attributes {dimension_semantics = [#tpu.dimension_semantics<parallel>], iteration_bounds = array<i64: 1>, scalar_prefetch = 0 : i64, scratch_operands = 0 : i64, tpu.core_type = #tpu.core_type<tc>, window_params = [{transform_indices = @transform_0, window_bounds = array<i64: 128, 784>}, {pipeline_mode = #tpu.pipeline_mode<synchronous>, transform_indices = @transform_1, window_bounds = array<i64: 784, 512>}, {pipeline_mode = #tpu.pipeline_mode<synchronous>, transform_indices = @transform_2, window_bounds = array<i64: 1, 512>}, {pipeline_mode = #tpu.pipeline_mode<synchronous>, transform_indices = @transform_3, window_bounds = array<i64: 512, 256>}, {pipeline_mode = #tpu.pipeline_mode<synchronous>, transform_indices = @transform_4, window_bounds = array<i64: 1, 256>}, {pipeline_mode = #tpu.pipeline_mode<synchronous>, transform_indices = @transform_5, window_bounds = array<i64: 1, 256>}, {pipeline_mode = #tpu.pipeline_mode<synchronous>, transform_indices = @transform_6, window_bounds = array<i64: 1, 1>}, {transform_indices = @transform_7, window_bounds = array<i64: 128, 1>}]} {
    %c0 = arith.constant 0 : index
    %c0_0 = arith.constant 0 : index
    %0 = vector.load %arg1[%c0, %c0_0] : memref<128x784xf32, #tpu.memory_space<vmem>>, vector<128x784xf32>
    %1 = arith.truncf %0 : vector<128x784xf32> to vector<128x784xbf16>
    %c0_1 = arith.constant 0 : index
    %c0_2 = arith.constant 0 : index
    %2 = vector.load %arg2[%c0_1, %c0_2] : memref<784x512xbf16, #tpu.memory_space<vmem>>, vector<784x512xbf16>
    %cst = arith.constant dense<0.000000e+00> : vector<128x512xf32>
    %3 = tpu.matmul %1, %2, %cst {dimension_numbers = #tpu.dot_dimension_numbers<[1], [0], [0], [1], [0, 0, 1, 1], [], []>} : vector<128x784xbf16>, vector<784x512xbf16>, vector<128x512xf32> -> vector<128x512xf32>
    %c0_3 = arith.constant 0 : index
    %c0_4 = arith.constant 0 : index
    %4 = vector.load %arg3[%c0_3, %c0_4] : memref<1x512xf32, #tpu.memory_space<vmem>>, vector<1x512xf32>
    %5 = vector.broadcast %4 : vector<1x512xf32> to vector<128x512xf32>
    %6 = arith.addf %3, %5 : vector<128x512xf32>
    %cst_5 = arith.constant 2.000000e-01 : f32
    %7 = vector.broadcast %cst_5 : f32 to vector<128x512xf32>
    %8 = arith.mulf %7, %6 : vector<128x512xf32>
    %9 = arith.maximumf %6, %8 : vector<128x512xf32>
    %10 = arith.truncf %9 : vector<128x512xf32> to vector<128x512xbf16>
    %c0_6 = arith.constant 0 : index
    %c0_7 = arith.constant 0 : index
    %11 = vector.load %arg4[%c0_6, %c0_7] : memref<512x256xbf16, #tpu.memory_space<vmem>>, vector<512x256xbf16>
    %cst_8 = arith.constant dense<0.000000e+00> : vector<128x256xf32>
    %12 = tpu.matmul %10, %11, %cst_8 {dimension_numbers = #tpu.dot_dimension_numbers<[1], [0], [0], [1], [0, 0, 1, 1], [], []>} : vector<128x512xbf16>, vector<512x256xbf16>, vector<128x256xf32> -> vector<128x256xf32>
    %c0_9 = arith.constant 0 : index
    %c0_10 = arith.constant 0 : index
    %13 = vector.load %arg5[%c0_9, %c0_10] : memref<1x256xf32, #tpu.memory_space<vmem>>, vector<1x256xf32>
    %14 = vector.broadcast %13 : vector<1x256xf32> to vector<128x256xf32>
    %15 = arith.addf %12, %14 : vector<128x256xf32>
    %cst_11 = arith.constant 2.000000e-01 : f32
    %16 = vector.broadcast %cst_11 : f32 to vector<128x256xf32>
    %17 = arith.mulf %16, %15 : vector<128x256xf32>
    %18 = arith.maximumf %15, %17 : vector<128x256xf32>
    %c0_12 = arith.constant 0 : index
    %c0_13 = arith.constant 0 : index
    %19 = vector.load %arg6[%c0_12, %c0_13] : memref<1x256xf32, #tpu.memory_space<vmem>>, vector<1x256xf32>
    %20 = vector.broadcast %19 : vector<1x256xf32> to vector<128x256xf32>
    %21 = arith.mulf %18, %20 : vector<128x256xf32>
    %cst_14 = arith.constant dense<0.000000e+00> : vector<128xf32>
    %22 = vector.multi_reduction <add>, %21, %cst_14 [1] : vector<128x256xf32> to vector<128xf32>
    %23 = vector.shape_cast %22 : vector<128xf32> to vector<128x1xf32>
    %c0_15 = arith.constant 0 : index
    %c0_16 = arith.constant 0 : index
    %24 = vector.load %arg7[%c0_15, %c0_16] : memref<1x1xf32, #tpu.memory_space<vmem>>, vector<1x1xf32>
    %25 = vector.broadcast %24 : vector<1x1xf32> to vector<128x1xf32>
    %26 = arith.addf %23, %25 : vector<128x1xf32>
    %cst_17 = arith.constant 0.000000e+00 : f32
    %27 = vector.broadcast %cst_17 : f32 to vector<128x1xf32>
    %28 = arith.subf %27, %26 : vector<128x1xf32>
    %29 = math.exp %28 : vector<128x1xf32>
    %cst_18 = arith.constant 1.000000e+00 : f32
    %30 = vector.broadcast %cst_18 : f32 to vector<128x1xf32>
    %31 = arith.addf %30, %29 : vector<128x1xf32>
    %32 = tpu.reciprocal %31 {approx = true} : vector<128x1xf32> -> vector<128x1xf32>
    %c0_19 = arith.constant 0 : index
    %c0_20 = arith.constant 0 : index
    %33 = vector.load %arg8[%c0_19, %c0_20] : memref<128x1xf32, #tpu.memory_space<vmem>>, vector<128x1xf32>
    tpu.vector_store %arg8[%c0_19, %c0_20], %32 {strides = array<i32>} : memref<128x1xf32, #tpu.memory_space<vmem>>, vector<128x1xf32>,
    return
  }
  func.func @transform_0(%arg0: i32) -> (i32, i32) {
    %c0_i32 = arith.constant 0 : i32
    %c0_i32_0 = arith.constant 0 : i32
    return %arg0, %c0_i32 : i32, i32
  }
  func.func @transform_1(%arg0: i32) -> (i32, i32) {
    %c0_i32 = arith.constant 0 : i32
    %c0_i32_0 = arith.constant 0 : i32
    %c0_i32_1 = arith.constant 0 : i32
    return %c0_i32, %c0_i32_0 : i32, i32
  }
  func.func @transform_2(%arg0: i32) -> (i32, i32) {
    %c0_i32 = arith.constant 0 : i32
    %c0_i32_0 = arith.constant 0 : i32
    %c0_i32_1 = arith.constant 0 : i32
    return %c0_i32, %c0_i32_0 : i32, i32
  }
  func.func @transform_3(%arg0: i32) -> (i32, i32) {
    %c0_i32 = arith.constant 0 : i32
    %c0_i32_0 = arith.constant 0 : i32
    %c0_i32_1 = arith.constant 0 : i32
    return %c0_i32, %c0_i32_0 : i32, i32
  }
  func.func @transform_4(%arg0: i32) -> (i32, i32) {
    %c0_i32 = arith.constant 0 : i32
    %c0_i32_0 = arith.constant 0 : i32
    %c0_i32_1 = arith.constant 0 : i32
    return %c0_i32, %c0_i32_0 : i32, i32
  }
  func.func @transform_5(%arg0: i32) -> (i32, i32) {
    %c0_i32 = arith.constant 0 : i32
    %c0_i32_0 = arith.constant 0 : i32
    %c0_i32_1 = arith.constant 0 : i32
    return %c0_i32, %c0_i32_0 : i32, i32
  }
  func.func @transform_6(%arg0: i32) -> (i32, i32) {
    %c0_i32 = arith.constant 0 : i32
    %c0_i32_0 = arith.constant 0 : i32
    %c0_i32_1 = arith.constant 0 : i32
    return %c0_i32, %c0_i32_0 : i32, i32
  }
  func.func @transform_7(%arg0: i32) -> (i32, i32) {
    %c0_i32 = arith.constant 0 : i32
    %c0_i32_0 = arith.constant 0 : i32
    return %arg0, %c0_i32 : i32, i32
  }
}

</mosaic_0001>

<llo_original>
// kernel: discriminator_forward.1
$region0: #{discriminator_forward.1}
  #allocation0 [shape = 'u32[]', space=smem, size = 0x4, offset = 0x4, fixed_abs, tag = 'smem constant byte address 0x4 - core index']
  #allocation1 [shape = 'u32[144,128]{1,0:T(1,128)}', space=vmem, size = 0x12000, scoped, tag = 'internal scratch']
  #allocation2 [shape = 'f32[1,1]{1,0:T(1,128)S(1)}', space=vmem, size = 0x200, scoped, tag = 'scoped memory for discriminator_forward.1']
  %s0 = inlined_call_operand.hbm [shape: f32[8,784], index: 0, kind: input, shape index: {}]
  %s1 = inlined_call_operand.hbm [shape: bf16[784,512], index: 1, kind: input, shape index: {}]
  %s2 = inlined_call_operand.vmem [shape: f32[1,512], index: 2, kind: input, shape index: {}]
  %s3 = inlined_call_operand.hbm [shape: bf16[512,256], index: 3, kind: input, shape index: {}]
  %s4 = inlined_call_operand.vmem [shape: f32[1,256], index: 4, kind: input, shape index: {}]
  %s5 = inlined_call_operand.vmem [shape: f32[1,256], index: 5, kind: input, shape index: {}]
  %s6 = inlined_call_operand.<no memory space> [shape: f32[1,1], index: 6, kind: input, shape index: {}]
  %s7 = inlined_call_operand.vmem [shape: f32[128,1], index: 7, kind: output, shape index: {}]
  %s8 = sld [smem:[#allocation0]]
  $region50: #{discriminator_forward.1} parent=0
    _
  %s10 = ssub.s32 1, %s8
  %s11 = scalar_select 0, %s10, %s8
  %v12 = vstv %s6
  %13 = vst [vmem:[#allocation2] sm:$0x1] %v12
  $region1: #{discriminator_forward.1} parent=0
    #allocation3 [shape = 'u8[458752]{0}', space=vmem, size = 0x70000, scoped, tag = 'input window, operand 0, single buffered']
    #allocation4 [shape = 's32[1]{0}', space=sflag, size = 0x4, scoped, tag = 'scoped memory for discriminator_forward.1']
    #allocation5 [shape = 'u8[802816]{0}', space=vmem, size = 0xc4000, scoped, tag = 'input window, operand 1, single buffered']
    #allocation6 [shape = 's32[1]{0}', space=sflag, size = 0x4, scoped, tag = 'scoped memory for discriminator_forward.1']
    #allocation7 [shape = 'u8[262144]{0}', space=vmem, size = 0x40000, scoped, tag = 'input window, operand 3, single buffered']
    %14 = vsyncpa [#allocation4], 0
    %15 = vsyncpa [#allocation6], 0
    // Predicated region
    $region2: #{discriminator_forward.1} parent=1 // pred_check
      _
    $region3: #{discriminator_forward.1} parent=1 // pred_check_branch
      %17 = sbr.rel (0) target = $region5
    $region4: #{discriminator_forward.1} parent=1 // pred_region
      %s19 = ssub.s32 14336, 896
      %20 = vsyncadd [#allocation4], %s19
      %s21 = sshll.u32 [#allocation3], 4
      %s22 = int_to_ptr.vmem [resolvable:$true] %s21
      %27 = dma.hbm_to_vmem [thread:$0]  %s0, 896, %s22, [#allocation4], 896, 896, 56
    $region5: #{discriminator_forward.1} parent=1 // pred_fallthru
      _
    // Predicated region
    $region6: #{discriminator_forward.1} parent=1 // pred_check
      _
    $region7: #{discriminator_forward.1} parent=1 // pred_check_branch
      %29 = sbr.rel (0) target = $region9
    $region8: #{discriminator_forward.1} parent=1 // pred_region
      %s31 = ssub.s32 25088, 25088
      %32 = vsyncadd [#allocation6], %s31
      %s33 = sshll.u32 [#allocation5], 4
      %s34 = int_to_ptr.vmem [resolvable:$true] %s33
      %39 = dma.hbm_to_vmem [thread:$0]  %s1, 25088, %s34, [#allocation6], 256, 256, 16
    $region9: #{discriminator_forward.1} parent=1 // pred_fallthru
      _
    // Predicated region
    $region10: #{discriminator_forward.1} parent=1 // pred_check
      _
    $region11: #{discriminator_forward.1} parent=1 // pred_check_branch
      %41 = sbr.rel (0) target = $region13
    $region12: #{discriminator_forward.1} parent=1 // pred_region
      _
    $region13: #{discriminator_forward.1} parent=1 // pred_fallthru
      _
    // Predicated region
    $region14: #{discriminator_forward.1} parent=1 // pred_check
      _
    $region15: #{discriminator_forward.1} parent=1 // pred_check_branch
      %43 = sbr.rel (0) target = $region17
    $region16: #{discriminator_forward.1} parent=1 // pred_region
      %s45 = ssub.s32 8192, 8192
      %46 = vsyncadd [#allocation6], %s45
      %s47 = sshll.u32 [#allocation7], 4
      %s48 = int_to_ptr.vmem [resolvable:$true] %s47
      %53 = dma.hbm_to_vmem [thread:$0]  %s3, 8192, %s48, [#allocation6], 128, 128, 8
    $region17: #{discriminator_forward.1} parent=1 // pred_fallthru
      _
    // Predicated region
    $region18: #{discriminator_forward.1} parent=1 // pred_check
      _
    $region19: #{discriminator_forward.1} parent=1 // pred_check_branch
      %55 = sbr.rel (0) target = $region21
    $region20: #{discriminator_forward.1} parent=1 // pred_region
      _
    $region21: #{discriminator_forward.1} parent=1 // pred_fallthru
      _
    // Predicated region
    $region22: #{discriminator_forward.1} parent=1 // pred_check
      _
    $region23: #{discriminator_forward.1} parent=1 // pred_check_branch
      %57 = sbr.rel (0) target = $region25
    $region24: #{discriminator_forward.1} parent=1 // pred_region
      _
    $region25: #{discriminator_forward.1} parent=1 // pred_fallthru
      _
    // Predicated region
    $region26: #{discriminator_forward.1} parent=1 // pred_check
      _
    $region27: #{discriminator_forward.1} parent=1 // pred_check_branch
      %59 = sbr.rel (0) target = $region29
    $region28: #{discriminator_forward.1} parent=1 // pred_region
      _
    $region29: #{discriminator_forward.1} parent=1 // pred_fallthru
      _
    // Predicated region
    $region30: #{discriminator_forward.1} parent=1 // pred_check
      _
    $region31: #{discriminator_forward.1} parent=1 // pred_check_branch
      %61 = sbr.rel (0) target = $region33
    $region32: #{discriminator_forward.1} parent=1 // pred_region
      %62 = dma.done [#allocation4], 14336
    $region33: #{discriminator_forward.1} parent=1 // pred_fallthru
      _
    // Predicated region
    $region34: #{discriminator_forward.1} parent=1 // pred_check
      _
    $region35: #{discriminator_forward.1} parent=1 // pred_check_branch
      %64 = sbr.rel (0) target = $region37
    $region36: #{discriminator_forward.1} parent=1 // pred_region
      %65 = dma.done [#allocation6], 25088
    $region37: #{discriminator_forward.1} parent=1 // pred_fallthru
      _
    // Predicated region
    $region38: #{discriminator_forward.1} parent=1 // pred_check
      _
    $region39: #{discriminator_forward.1} parent=1 // pred_check_branch
      %67 = sbr.rel (0) target = $region41
    $region40: #{discriminator_forward.1} parent=1 // pred_region
      %68 = dma.done [#allocation6], 8192
    $region41: #{discriminator_forward.1} parent=1 // pred_fallthru
      _
    %v70 = vld [vmem:[#allocation3] sm:$0xff]
    %v71 = vld [vmem:[#allocation3 + $0x8] sm:$0xff]
    %v72 = vld [vmem:[#allocation3 + $0x10] sm:$0xff]
    %v73 = vld [vmem:[#allocation3 + $0x18] sm:$0xff]
    %v74 = vld [vmem:[#allocation3 + $0x20] sm:$0xff]
    %v75 = vld [vmem:[#allocation3 + $0x28] sm:$0xff]
    %v76 = vld [vmem:[#allocation3 + $0x30] sm:$0xff]
    %v77 = vld [vmem:[#allocation3 + $0x38] sm:$0xff]
    %v78 = vld [vmem:[#allocation3 + $0x40] sm:$0xff]
    %v79 = vld [vmem:[#allocation3 + $0x48] sm:$0xff]
    %v80 = vld [vmem:[#allocation3 + $0x50] sm:$0xff]
    %v81 = vld [vmem:[#allocation3 + $0x58] sm:$0xff]
    %v82 = vld [vmem:[#allocation3 + $0x60] sm:$0xff]
    %v83 = vld [vmem:[#allocation3 + $0x68] sm:$0xff]
    %v84 = vld [vmem:[#allocation3 + $0x70] sm:$0xff]
    %v85 = vld [vmem:[#allocation3 + $0x78] sm:$0xff]
    %v86 = vld [vmem:[#allocation3 + $0x80] sm:$0xff]
    %v87 = vld [vmem:[#allocation3 + $0x88] sm:$0xff]
    %v88 = vld [vmem:[#allocation3 + $0x90] sm:$0xff]
    %v89 = vld [vmem:[#allocation3 + $0x98] sm:$0xff]
    %v90 = vld [vmem:[#allocation3 + $0xa0] sm:$0xff]
    %v91 = vld [vmem:[#allocation3 + $0xa8] sm:$0xff]
    %v92 = vld [vmem:[#allocation3 + $0xb0] sm:$0xff]
    %v93 = vld [vmem:[#allocation3 + $0xb8] sm:$0xff]
    %v94 = vld [vmem:[#allocation3 + $0xc0] sm:$0xff]
    %v95 = vld [vmem:[#allocation3 + $0xc8] sm:$0xff]
    %v96 = vld [vmem:[#allocation3 + $0xd0] sm:$0xff]
    %v97 = vld [vmem:[#allocation3 + $0xd8] sm:$0xff]
    %v98 = vld [vmem:[#allocation3 + $0xe0] sm:$0xff]
    %v99 = vld [vmem:[#allocation3 + $0xe8] sm:$0xff]
    %v100 = vld [vmem:[#allocation3 + $0xf0] sm:$0xff]
    %v101 = vld [vmem:[#allocation3 + $0xf8] sm:$0xff]
    %v102 = vld [vmem:[#allocation3 + $0x100] sm:$0xff]
    %v103 = vld [vmem:[#allocation3 + $0x108] sm:$0xff]
    %v104 = vld [vmem:[#allocation3 + $0x110] sm:$0xff]
    %v105 = vld [vmem:[#allocation3 + $0x118] sm:$0xff]
    %v106 = vld [vmem:[#allocation3 + $0x120] sm:$0xff]
    %v107 = vld [vmem:[#allocation3 + $0x128] sm:$0xff]
    %v108 = vld [vmem:[#allocation3 + $0x130] sm:$0xff]
    %v109 = vld [vmem:[#allocation3 + $0x138] sm:$0xff]
    %v110 = vld [vmem:[#allocation3 + $0x140] sm:$0xff]
    %v111 = vld [vmem:[#allocation3 + $0x148] sm:$0xff]
    %v112 = vld [vmem:[#allocation3 + $0x150] sm:$0xff]
    %v113 = vld [vmem:[#allocation3 + $0x158] sm:$0xff]
    %v114 = vld [vmem:[#allocation3 + $0x160] sm:$0xff]
    %v115 = vld [vmem:[#allocation3 + $0x168] sm:$0xff]
    %v116 = vld [vmem:[#allocation3 + $0x170] sm:$0xff]
    %v117 = vld [vmem:[#allocation3 + $0x178] sm:$0xff]
    %v118 = vld [vmem:[#allocation3 + $0x180] sm:$0xff]
    %v119 = vld [vmem:[#allocation3 + $0x188] sm:$0xff]
    %v120 = vld [vmem:[#allocation3 + $0x190] sm:$0xff]
    %v121 = vld [vmem:[#allocation3 + $0x198] sm:$0xff]
    %v122 = vld [vmem:[#allocation3 + $0x1a0] sm:$0xff]
    %v123 = vld [vmem:[#allocation3 + $0x1a8] sm:$0xff]
    %v124 = vld [vmem:[#allocation3 + $0x1b0] sm:$0xff]
    %v125 = vld [vmem:[#allocation3 + $0x1b8] sm:$0xff]
    %v126 = vld [vmem:[#allocation3 + $0x1c0] sm:$0xff]
    %v127 = vld [vmem:[#allocation3 + $0x1c8] sm:$0xff]
    %v128 = vld [vmem:[#allocation3 + $0x1d0] sm:$0xff]
    %v129 = vld [vmem:[#allocation3 + $0x1d8] sm:$0xff]
    %v130 = vld [vmem:[#allocation3 + $0x1e0] sm:$0xff]
    %v131 = vld [vmem:[#allocation3 + $0x1e8] sm:$0xff]
    %v132 = vld [vmem:[#allocation3 + $0x1f0] sm:$0xff]
    %v133 = vld [vmem:[#allocation3 + $0x1f8] sm:$0xff]
    %v134 = vld [vmem:[#allocation3 + $0x200] sm:$0xff]
    %v135 = vld [vmem:[#allocation3 + $0x208] sm:$0xff]
    %v136 = vld [vmem:[#allocation3 + $0x210] sm:$0xff]
    %v137 = vld [vmem:[#allocation3 + $0x218] sm:$0xff]
    %v138 = vld [vmem:[#allocation3 + $0x220] sm:$0xff]
    %v139 = vld [vmem:[#allocation3 + $0x228] sm:$0xff]
    %v140 = vld [vmem:[#allocation3 + $0x230] sm:$0xff]
    %v141 = vld [vmem:[#allocation3 + $0x238] sm:$0xff]
    %v142 = vld [vmem:[#allocation3 + $0x240] sm:$0xff]
    %v143 = vld [vmem:[#allocation3 + $0x248] sm:$0xff]
    %v144 = vld [vmem:[#allocation3 + $0x250] sm:$0xff]
    %v145 = vld [vmem:[#allocation3 + $0x258] sm:$0xff]
    %v146 = vld [vmem:[#allocation3 + $0x260] sm:$0xff]
    %v147 = vld [vmem:[#allocation3 + $0x268] sm:$0xff]
    %v148 = vld [vmem:[#allocation3 + $0x270] sm:$0xff]
    %v149 = vld [vmem:[#allocation3 + $0x278] sm:$0xff]
    %v150 = vld [vmem:[#allocation3 + $0x280] sm:$0xff]
    %v151 = vld [vmem:[#allocation3 + $0x288] sm:$0xff]
    %v152 = vld [vmem:[#allocation3 + $0x290] sm:$0xff]
    %v153 = vld [vmem:[#allocation3 + $0x298] sm:$0xff]
    %v154 = vld [vmem:[#allocation3 + $0x2a0] sm:$0xff]
    %v155 = vld [vmem:[#allocation3 + $0x2a8] sm:$0xff]
    %v156 = vld [vmem:[#allocation3 + $0x2b0] sm:$0xff]
    %v157 = vld [vmem:[#allocation3 + $0x2b8] sm:$0xff]
    %v158 = vld [vmem:[#allocation3 + $0x2c0] sm:$0xff]
    %v159 = vld [vmem:[#allocation3 + $0x2c8] sm:$0xff]
    %v160 = vld [vmem:[#allocation3 + $0x2d0] sm:$0xff]
    %v161 = vld [vmem:[#allocation3 + $0x2d8] sm:$0xff]
    %v162 = vld [vmem:[#allocation3 + $0x2e0] sm:$0xff]
    %v163 = vld [vmem:[#allocation3 + $0x2e8] sm:$0xff]
    %v164 = vld [vmem:[#allocation3 + $0x2f0] sm:$0xff]
    %v165 = vld [vmem:[#allocation3 + $0x2f8] sm:$0xff]
    %v166 = vld [vmem:[#allocation3 + $0x300] sm:$0xff]
    %v167 = vld [vmem:[#allocation3 + $0x308] sm:$0xff]
    %v168 = vld [vmem:[#allocation3 + $0x310] sm:$0xff]
    %v169 = vld [vmem:[#allocation3 + $0x318] sm:$0xff]
    %v170 = vld [vmem:[#allocation3 + $0x320] sm:$0xff]
    %v171 = vld [vmem:[#allocation3 + $0x328] sm:$0xff]
    %v172 = vld [vmem:[#allocation3 + $0x330] sm:$0xff]
    %v173 = vld [vmem:[#allocation3 + $0x338] sm:$0xff]
    %v174 = vld [vmem:[#allocation3 + $0x340] sm:$0xff]
    %v175 = vld [vmem:[#allocation3 + $0x348] sm:$0xff]
    %v176 = vld [vmem:[#allocation3 + $0x350] sm:$0xff]
    %v177 = vld [vmem:[#allocation3 + $0x358] sm:$0xff]
    %v178 = vld [vmem:[#allocation3 + $0x360] sm:$0xff]
    %v179 = vld [vmem:[#allocation3 + $0x368] sm:$0xff]
    %v180 = vld [vmem:[#allocation3 + $0x370] sm:$0xff]
    %v181 = vld [vmem:[#allocation3 + $0x378] sm:$0xff]
    %v182 = vpack.c.bf16 %v77, %v70
    %v183 = vpack.c.bf16 %v78, %v71
    %v184 = vpack.c.bf16 %v79, %v72
    %v185 = vpack.c.bf16 %v80, %v73
    %v186 = vpack.c.bf16 %v81, %v74
    %v187 = vpack.c.bf16 %v82, %v75
    %v188 = vpack.c.bf16 %v83, %v76
    %v189 = vpack.c.bf16 %v91, %v84
    %v190 = vpack.c.bf16 %v92, %v85
    %v191 = vpack.c.bf16 %v93, %v86
    %v192 = vpack.c.bf16 %v94, %v87
    %v193 = vpack.c.bf16 %v95, %v88
    %v194 = vpack.c.bf16 %v96, %v89
    %v195 = vpack.c.bf16 %v97, %v90
    %v196 = vpack.c.bf16 %v105, %v98
    %v197 = vpack.c.bf16 %v106, %v99
    %v198 = vpack.c.bf16 %v107, %v100
    %v199 = vpack.c.bf16 %v108, %v101
    %v200 = vpack.c.bf16 %v109, %v102
    %v201 = vpack.c.bf16 %v110, %v103
    %v202 = vpack.c.bf16 %v111, %v104
    %v203 = vpack.c.bf16 %v119, %v112
    %v204 = vpack.c.bf16 %v120, %v113
    %v205 = vpack.c.bf16 %v121, %v114
    %v206 = vpack.c.bf16 %v122, %v115
    %v207 = vpack.c.bf16 %v123, %v116
    %v208 = vpack.c.bf16 %v124, %v117
    %v209 = vpack.c.bf16 %v125, %v118
    %v210 = vpack.c.bf16 %v133, %v126
    %v211 = vpack.c.bf16 %v134, %v127
    %v212 = vpack.c.bf16 %v135, %v128
    %v213 = vpack.c.bf16 %v136, %v129
    %v214 = vpack.c.bf16 %v137, %v130
    %v215 = vpack.c.bf16 %v138, %v131
    %v216 = vpack.c.bf16 %v139, %v132
    %v217 = vpack.c.bf16 %v147, %v140
    %v218 = vpack.c.bf16 %v148, %v141
    %v219 = vpack.c.bf16 %v149, %v142
    %v220 = vpack.c.bf16 %v150, %v143
    %v221 = vpack.c.bf16 %v151, %v144
    %v222 = vpack.c.bf16 %v152, %v145
    %v223 = vpack.c.bf16 %v153, %v146
    %v224 = vpack.c.bf16 %v161, %v154
    %v225 = vpack.c.bf16 %v162, %v155
    %v226 = vpack.c.bf16 %v163, %v156
    %v227 = vpack.c.bf16 %v164, %v157
    %v228 = vpack.c.bf16 %v165, %v158
    %v229 = vpack.c.bf16 %v166, %v159
    %v230 = vpack.c.bf16 %v167, %v160
    %v231 = vpack.c.bf16 %v175, %v168
    %v232 = vpack.c.bf16 %v176, %v169
    %v233 = vpack.c.bf16 %v177, %v170
    %v234 = vpack.c.bf16 %v178, %v171
    %v235 = vpack.c.bf16 %v179, %v172
    %v236 = vpack.c.bf16 %v180, %v173
    %v237 = vpack.c.bf16 %v181, %v174
    %v238 = vld [vmem:[#allocation5] sm:$0xff]
    %v239 = vld [vmem:[#allocation5 + $0x8] sm:$0xff]
    %v240 = vld [vmem:[#allocation5 + $0x10] sm:$0xff]
    %v241 = vld [vmem:[#allocation5 + $0x18] sm:$0xff]
    %v242 = vld [vmem:[#allocation5 + $0x20] sm:$0xff]
    %v243 = vld [vmem:[#allocation5 + $0x28] sm:$0xff]
    %v244 = vld [vmem:[#allocation5 + $0x30] sm:$0xff]
    %v245 = vld [vmem:[#allocation5 + $0x38] sm:$0xff]
    %v246 = vld [vmem:[#allocation5 + $0x40] sm:$0xff]
    %v247 = vld [vmem:[#allocation5 + $0x48] sm:$0xff]
    %v248 = vld [vmem:[#allocation5 + $0x50] sm:$0xff]
    %v249 = vld [vmem:[#allocation5 + $0x58] sm:$0xff]
    %v250 = vld [vmem:[#allocation5 + $0x60] sm:$0xff]
    %v251 = vld [vmem:[#allocation5 + $0x68] sm:$0xff]
    %v252 = vld [vmem:[#allocation5 + $0x70] sm:$0xff]
    %v253 = vld [vmem:[#allocation5 + $0x78] sm:$0xff]
    %v254 = vld [vmem:[#allocation5 + $0x80] sm:$0xff]
    %v255 = vld [vmem:[#allocation5 + $0x88] sm:$0xff]
    %v256 = vld [vmem:[#allocation5 + $0x90] sm:$0xff]
    %v257 = vld [vmem:[#allocation5 + $0x98] sm:$0xff]
    %v258 = vld [vmem:[#allocation5 + $0xa0] sm:$0xff]
    %v259 = vld [vmem:[#allocation5 + $0xa8] sm:$0xff]
    %v260 = vld [vmem:[#allocation5 + $0xb0] sm:$0xff]
    %v261 = vld [vmem:[#allocation5 + $0xb8] sm:$0xff]
    %v262 = vld [vmem:[#allocation5 + $0xc0] sm:$0xff]
    %v263 = vld [vmem:[#allocation5 + $0xc8] sm:$0xff]
    %v264 = vld [vmem:[#allocation5 + $0xd0] sm:$0xff]
    %v265 = vld [vmem:[#allocation5 + $0xd8] sm:$0xff]
    %v266 = vld [vmem:[#allocation5 + $0xe0] sm:$0xff]
    %v267 = vld [vmem:[#allocation5 + $0xe8] sm:$0xff]
    %v268 = vld [vmem:[#allocation5 + $0xf0] sm:$0xff]
    %v269 = vld [vmem:[#allocation5 + $0xf8] sm:$0xff]
    %v270 = vld [vmem:[#allocation5 + $0x100] sm:$0xff]
    %v271 = vld [vmem:[#allocation5 + $0x108] sm:$0xff]
    %v272 = vld [vmem:[#allocation5 + $0x110] sm:$0xff]
    %v273 = vld [vmem:[#allocation5 + $0x118] sm:$0xff]
    %v274 = vld [vmem:[#allocation5 + $0x120] sm:$0xff]
    %v275 = vld [vmem:[#allocation5 + $0x128] sm:$0xff]
    %v276 = vld [vmem:[#allocation5 + $0x130] sm:$0xff]
    %v277 = vld [vmem:[#allocation5 + $0x138] sm:$0xff]
    %v278 = vld [vmem:[#allocation5 + $0x140] sm:$0xff]
    %v279 = vld [vmem:[#allocation5 + $0x148] sm:$0xff]
    %v280 = vld [vmem:[#allocation5 + $0x150] sm:$0xff]
    %v281 = vld [vmem:[#allocation5 + $0x158] sm:$0xff]
    %v282 = vld [vmem:[#allocation5 + $0x160] sm:$0xff]
    %v283 = vld [vmem:[#allocation5 + $0x168] sm:$0xff]
    %v284 = vld [vmem:[#allocation5 + $0x170] sm:$0xff]
    %v285 = vld [vmem:[#allocation5 + $0x178] sm:$0xff]
    %v286 = vld [vmem:[#allocation5 + $0x180] sm:$0xff]
    %v287 = vld [vmem:[#allocation5 + $0x188] sm:$0xff]
    %v288 = vld [vmem:[#allocation5 + $0x190] sm:$0xff]
    %v289 = vld [vmem:[#allocation5 + $0x198] sm:$0xff]
    %v290 = vld [vmem:[#allocation5 + $0x1a0] sm:$0xff]
    %v291 = vld [vmem:[#allocation5 + $0x1a8] sm:$0xff]
    %v292 = vld [vmem:[#allocation5 + $0x1b0] sm:$0xff]
    %v293 = vld [vmem:[#allocation5 + $0x1b8] sm:$0xff]
    %v294 = vld [vmem:[#allocation5 + $0x1c0] sm:$0xff]
    %v295 = vld [vmem:[#allocation5 + $0x1c8] sm:$0xff]
    %v296 = vld [vmem:[#allocation5 + $0x1d0] sm:$0xff]
    %v297 = vld [vmem:[#allocation5 + $0x1d8] sm:$0xff]
    %v298 = vld [vmem:[#allocation5 + $0x1e0] sm:$0xff]
    %v299 = vld [vmem:[#allocation5 + $0x1e8] sm:$0xff]
    %v300 = vld [vmem:[#allocation5 + $0x1f0] sm:$0xff]
    %v301 = vld [vmem:[#allocation5 + $0x1f8] sm:$0xff]
    %v302 = vld [vmem:[#allocation5 + $0x200] sm:$0xff]
    %v303 = vld [vmem:[#allocation5 + $0x208] sm:$0xff]
    %v304 = vld [vmem:[#allocation5 + $0x210] sm:$0xff]
    %v305 = vld [vmem:[#allocation5 + $0x218] sm:$0xff]
    %v306 = vld [vmem:[#allocation5 + $0x220] sm:$0xff]
    %v307 = vld [vmem:[#allocation5 + $0x228] sm:$0xff]
    %v308 = vld [vmem:[#allocation5 + $0x230] sm:$0xff]
    %v309 = vld [vmem:[#allocation5 + $0x238] sm:$0xff]
    %v310 = vld [vmem:[#allocation5 + $0x240] sm:$0xff]
    %v311 = vld [vmem:[#allocation5 + $0x248] sm:$0xff]
    %v312 = vld [vmem:[#allocation5 + $0x250] sm:$0xff]
    %v313 = vld [vmem:[#allocation5 + $0x258] sm:$0xff]
    %v314 = vld [vmem:[#allocation5 + $0x260] sm:$0xff]
    %v315 = vld [vmem:[#allocation5 + $0x268] sm:$0xff]
    %v316 = vld [vmem:[#allocation5 + $0x270] sm:$0xff]
    %v317 = vld [vmem:[#allocation5 + $0x278] sm:$0xff]
    %v318 = vld [vmem:[#allocation5 + $0x280] sm:$0xff]
    %v319 = vld [vmem:[#allocation5 + $0x288] sm:$0xff]
    %v320 = vld [vmem:[#allocation5 + $0x290] sm:$0xff]
    %v321 = vld [vmem:[#allocation5 + $0x298] sm:$0xff]
    %v322 = vld [vmem:[#allocation5 + $0x2a0] sm:$0xff]
    %v323 = vld [vmem:[#allocation5 + $0x2a8] sm:$0xff]
    %v324 = vld [vmem:[#allocation5 + $0x2b0] sm:$0xff]
    %v325 = vld [vmem:[#allocation5 + $0x2b8] sm:$0xff]
    %v326 = vld [vmem:[#allocation5 + $0x2c0] sm:$0xff]
    %v327 = vld [vmem:[#allocation5 + $0x2c8] sm:$0xff]
    %v328 = vld [vmem:[#allocation5 + $0x2d0] sm:$0xff]
    %v329 = vld [vmem:[#allocation5 + $0x2d8] sm:$0xff]
    %v330 = vld [vmem:[#allocation5 + $0x2e0] sm:$0xff]
    %v331 = vld [vmem:[#allocation5 + $0x2e8] sm:$0xff]
    %v332 = vld [vmem:[#allocation5 + $0x2f0] sm:$0xff]
    %v333 = vld [vmem:[#allocation5 + $0x2f8] sm:$0xff]
    %v334 = vld [vmem:[#allocation5 + $0x300] sm:$0xff]
    %v335 = vld [vmem:[#allocation5 + $0x308] sm:$0xff]
    %v336 = vld [vmem:[#allocation5 + $0x310] sm:$0xff]
    %v337 = vld [vmem:[#allocation5 + $0x318] sm:$0xff]
    %v338 = vld [vmem:[#allocation5 + $0x320] sm:$0xff]
    %v339 = vld [vmem:[#allocation5 + $0x328] sm:$0xff]
    %v340 = vld [vmem:[#allocation5 + $0x330] sm:$0xff]
    %v341 = vld [vmem:[#allocation5 + $0x338] sm:$0xff]
    %v342 = vld [vmem:[#allocation5 + $0x340] sm:$0xff]
    %v343 = vld [vmem:[#allocation5 + $0x348] sm:$0xff]
    %v344 = vld [vmem:[#allocation5 + $0x350] sm:$0xff]
    %v345 = vld [vmem:[#allocation5 + $0x358] sm:$0xff]
    %v346 = vld [vmem:[#allocation5 + $0x360] sm:$0xff]
    %v347 = vld [vmem:[#allocation5 + $0x368] sm:$0xff]
    %v348 = vld [vmem:[#allocation5 + $0x370] sm:$0xff]
    %v349 = vld [vmem:[#allocation5 + $0x378] sm:$0xff]
    %v350 = vld [vmem:[#allocation5 + $0x380] sm:$0xff]
    %v351 = vld [vmem:[#allocation5 + $0x388] sm:$0xff]
    %v352 = vld [vmem:[#allocation5 + $0x390] sm:$0xff]
    %v353 = vld [vmem:[#allocation5 + $0x398] sm:$0xff]
    %v354 = vld [vmem:[#allocation5 + $0x3a0] sm:$0xff]
    %v355 = vld [vmem:[#allocation5 + $0x3a8] sm:$0xff]
    %v356 = vld [vmem:[#allocation5 + $0x3b0] sm:$0xff]
    %v357 = vld [vmem:[#allocation5 + $0x3b8] sm:$0xff]
    %v358 = vld [vmem:[#allocation5 + $0x3c0] sm:$0xff]
    %v359 = vld [vmem:[#allocation5 + $0x3c8] sm:$0xff]
    %v360 = vld [vmem:[#allocation5 + $0x3d0] sm:$0xff]
    %v361 = vld [vmem:[#allocation5 + $0x3d8] sm:$0xff]
    %v362 = vld [vmem:[#allocation5 + $0x3e0] sm:$0xff]
    %v363 = vld [vmem:[#allocation5 + $0x3e8] sm:$0xff]
    %v364 = vld [vmem:[#allocation5 + $0x3f0] sm:$0xff]
    %v365 = vld [vmem:[#allocation5 + $0x3f8] sm:$0xff]
    %v366 = vld [vmem:[#allocation5 + $0x400] sm:$0xff]
    %v367 = vld [vmem:[#allocation5 + $0x408] sm:$0xff]
    %v368 = vld [vmem:[#allocation5 + $0x410] sm:$0xff]
    %v369 = vld [vmem:[#allocation5 + $0x418] sm:$0xff]
    %v370 = vld [vmem:[#allocation5 + $0x420] sm:$0xff]
    %v371 = vld [vmem:[#allocation5 + $0x428] sm:$0xff]
    %v372 = vld [vmem:[#allocation5 + $0x430] sm:$0xff]
    %v373 = vld [vmem:[#allocation5 + $0x438] sm:$0xff]
    %v374 = vld [vmem:[#allocation5 + $0x440] sm:$0xff]
    %v375 = vld [vmem:[#allocation5 + $0x448] sm:$0xff]
    %v376 = vld [vmem:[#allocation5 + $0x450] sm:$0xff]
    %v377 = vld [vmem:[#allocation5 + $0x458] sm:$0xff]
    %v378 = vld [vmem:[#allocation5 + $0x460] sm:$0xff]
    %v379 = vld [vmem:[#allocation5 + $0x468] sm:$0xff]
    %v380 = vld [vmem:[#allocation5 + $0x470] sm:$0xff]
    %v381 = vld [vmem:[#allocation5 + $0x478] sm:$0xff]
    %v382 = vld [vmem:[#allocation5 + $0x480] sm:$0xff]
    %v383 = vld [vmem:[#allocation5 + $0x488] sm:$0xff]
    %v384 = vld [vmem:[#allocation5 + $0x490] sm:$0xff]
    %v385 = vld [vmem:[#allocation5 + $0x498] sm:$0xff]
    %v386 = vld [vmem:[#allocation5 + $0x4a0] sm:$0xff]
    %v387 = vld [vmem:[#allocation5 + $0x4a8] sm:$0xff]
    %v388 = vld [vmem:[#allocation5 + $0x4b0] sm:$0xff]
    %v389 = vld [vmem:[#allocation5 + $0x4b8] sm:$0xff]
    %v390 = vld [vmem:[#allocation5 + $0x4c0] sm:$0xff]
    %v391 = vld [vmem:[#allocation5 + $0x4c8] sm:$0xff]
    %v392 = vld [vmem:[#allocation5 + $0x4d0] sm:$0xff]
    %v393 = vld [vmem:[#allocation5 + $0x4d8] sm:$0xff]
    %v394 = vld [vmem:[#allocation5 + $0x4e0] sm:$0xff]
    %v395 = vld [vmem:[#allocation5 + $0x4e8] sm:$0xff]
    %v396 = vld [vmem:[#allocation5 + $0x4f0] sm:$0xff]
    %v397 = vld [vmem:[#allocation5 + $0x4f8] sm:$0xff]
    %v398 = vld [vmem:[#allocation5 + $0x500] sm:$0xff]
    %v399 = vld [vmem:[#allocation5 + $0x508] sm:$0xff]
    %v400 = vld [vmem:[#allocation5 + $0x510] sm:$0xff]
    %v401 = vld [vmem:[#allocation5 + $0x518] sm:$0xff]
    %v402 = vld [vmem:[#allocation5 + $0x520] sm:$0xff]
    %v403 = vld [vmem:[#allocation5 + $0x528] sm:$0xff]
    %v404 = vld [vmem:[#allocation5 + $0x530] sm:$0xff]
    %v405 = vld [vmem:[#allocation5 + $0x538] sm:$0xff]
    %v406 = vld [vmem:[#allocation5 + $0x540] sm:$0xff]
    %v407 = vld [vmem:[#allocation5 + $0x548] sm:$0xff]
    %v408 = vld [vmem:[#allocation5 + $0x550] sm:$0xff]
    %v409 = vld [vmem:[#allocation5 + $0x558] sm:$0xff]
    %v410 = vld [vmem:[#allocation5 + $0x560] sm:$0xff]
    %v411 = vld [vmem:[#allocation5 + $0x568] sm:$0xff]
    %v412 = vld [vmem:[#allocation5 + $0x570] sm:$0xff]
    %v413 = vld [vmem:[#allocation5 + $0x578] sm:$0xff]
    %v414 = vld [vmem:[#allocation5 + $0x580] sm:$0xff]
    %v415 = vld [vmem:[#allocation5 + $0x588] sm:$0xff]
    %v416 = vld [vmem:[#allocation5 + $0x590] sm:$0xff]
    %v417 = vld [vmem:[#allocation5 + $0x598] sm:$0xff]
    %v418 = vld [vmem:[#allocation5 + $0x5a0] sm:$0xff]
    %v419 = vld [vmem:[#allocation5 + $0x5a8] sm:$0xff]
    %v420 = vld [vmem:[#allocation5 + $0x5b0] sm:$0xff]
    %v421 = vld [vmem:[#allocation5 + $0x5b8] sm:$0xff]
    %v422 = vld [vmem:[#allocation5 + $0x5c0] sm:$0xff]
    %v423 = vld [vmem:[#allocation5 + $0x5c8] sm:$0xff]
    %v424 = vld [vmem:[#allocation5 + $0x5d0] sm:$0xff]
    %v425 = vld [vmem:[#allocation5 + $0x5d8] sm:$0xff]
    %v426 = vld [vmem:[#allocation5 + $0x5e0] sm:$0xff]
    %v427 = vld [vmem:[#allocation5 + $0x5e8] sm:$0xff]
    %v428 = vld [vmem:[#allocation5 + $0x5f0] sm:$0xff]
    %v429 = vld [vmem:[#allocation5 + $0x5f8] sm:$0xff]
    %v430 = vld [vmem:[#allocation5 + $0x600] sm:$0xff]
    %v431 = vld [vmem:[#allocation5 + $0x608] sm:$0xff]
    %v432 = vld [vmem:[#allocation5 + $0x610] sm:$0xff]
    %v433 = vld [vmem:[#allocation5 + $0x618] sm:$0xff]
    %v434 = vld [vmem:[%s2] sm:$0xf]
    %v436 = vlaneseq
    %v437 = vshrl.u32 %v436, 7
    %v438 = vsub.s32 0, %v437
    %v439 = vrot.slane %v434, %v438
    %v440 = vlaneseq
    %v441 = vshrl.u32 %v440, 7
    %v442 = vsub.s32 1, %v441
    %v443 = vrot.slane %v434, %v442
    %v444 = vlaneseq
    %v445 = vshrl.u32 %v444, 7
    %v446 = vsub.s32 2, %v445
    %v447 = vrot.slane %v434, %v446
    %v448 = vlaneseq
    %v449 = vshrl.u32 %v448, 7
    %v450 = vsub.s32 3, %v449
    %v451 = vrot.slane %v434, %v450
    %v652 = vunpack.c.l.b16 %v238
    %v653 = vunpack.c.h.b16 %v238
    %v654 = vunpack.c.l.b16 %v239
    %v655 = vunpack.c.h.b16 %v239
    %v656 = vunpack.c.l.b16 %v240
    %v657 = vunpack.c.h.b16 %v240
    %v658 = vunpack.c.l.b16 %v241
    %v659 = vunpack.c.h.b16 %v241
    %v660 = vunpack.c.l.b16 %v242
    %v661 = vunpack.c.h.b16 %v242
    %v662 = vunpack.c.l.b16 %v243
    %v663 = vunpack.c.h.b16 %v243
    %v664 = vunpack.c.l.b16 %v244
    %v665 = vunpack.c.h.b16 %v244
    %v666 = vunpack.c.l.b16 %v245
    %v667 = vunpack.c.h.b16 %v245
    %v668 = vunpack.c.l.b16 %v246
    %v669 = vunpack.c.h.b16 %v246
    %v670 = vunpack.c.l.b16 %v247
    %v671 = vunpack.c.h.b16 %v247
    %v672 = vunpack.c.l.b16 %v248
    %v673 = vunpack.c.h.b16 %v248
    %v674 = vunpack.c.l.b16 %v249
    %v675 = vunpack.c.h.b16 %v249
    %v676 = vunpack.c.l.b16 %v250
    %v677 = vunpack.c.h.b16 %v250
    %v678 = vunpack.c.l.b16 %v251
    %v679 = vunpack.c.h.b16 %v251
    %v680 = vunpack.c.l.b16 %v252
    %v681 = vunpack.c.h.b16 %v252
    %v682 = vunpack.c.l.b16 %v253
    %v683 = vunpack.c.h.b16 %v253
    %v684 = vunpack.c.l.b16 %v254
    %v685 = vunpack.c.h.b16 %v254
    %v686 = vunpack.c.l.b16 %v255
    %v687 = vunpack.c.h.b16 %v255
    %v688 = vunpack.c.l.b16 %v256
    %v689 = vunpack.c.h.b16 %v256
    %v690 = vunpack.c.l.b16 %v257
    %v691 = vunpack.c.h.b16 %v257
    %v692 = vunpack.c.l.b16 %v258
    %v693 = vunpack.c.h.b16 %v258
    %v694 = vunpack.c.l.b16 %v259
    %v695 = vunpack.c.h.b16 %v259
    %v696 = vunpack.c.l.b16 %v260
    %v697 = vunpack.c.h.b16 %v260
    %v698 = vunpack.c.l.b16 %v261
    %v699 = vunpack.c.h.b16 %v261
    %v700 = vunpack.c.l.b16 %v262
    %v701 = vunpack.c.h.b16 %v262
    %v702 = vunpack.c.l.b16 %v263
    %v703 = vunpack.c.h.b16 %v263
    %v704 = vunpack.c.l.b16 %v264
    %v705 = vunpack.c.h.b16 %v264
    %v706 = vunpack.c.l.b16 %v265
    %v707 = vunpack.c.h.b16 %v265
    %v708 = vunpack.c.l.b16 %v266
    %v709 = vunpack.c.h.b16 %v266
    %v710 = vunpack.c.l.b16 %v267
    %v711 = vunpack.c.h.b16 %v267
    %v712 = vunpack.c.l.b16 %v268
    %v713 = vunpack.c.h.b16 %v268
    %v714 = vunpack.c.l.b16 %v269
    %v715 = vunpack.c.h.b16 %v269
    %v716 = vunpack.c.l.b16 %v270
    %v717 = vunpack.c.h.b16 %v270
    %v718 = vunpack.c.l.b16 %v271
    %v719 = vunpack.c.h.b16 %v271
    %v720 = vunpack.c.l.b16 %v272
    %v721 = vunpack.c.h.b16 %v272
    %v722 = vunpack.c.l.b16 %v273
    %v723 = vunpack.c.h.b16 %v273
    %v724 = vunpack.c.l.b16 %v274
    %v725 = vunpack.c.h.b16 %v274
    %v726 = vunpack.c.l.b16 %v275
    %v727 = vunpack.c.h.b16 %v275
    %v728 = vunpack.c.l.b16 %v276
    %v729 = vunpack.c.h.b16 %v276
    %v730 = vunpack.c.l.b16 %v277
    %v731 = vunpack.c.h.b16 %v277
    %v732 = vunpack.c.l.b16 %v278
    %v733 = vunpack.c.h.b16 %v278
    %v734 = vunpack.c.l.b16 %v279
    %v735 = vunpack.c.h.b16 %v279
    %v736 = vunpack.c.l.b16 %v280
    %v737 = vunpack.c.h.b16 %v280
    %v738 = vunpack.c.l.b16 %v281
    %v739 = vunpack.c.h.b16 %v281
    %v740 = vunpack.c.l.b16 %v282
    %v741 = vunpack.c.h.b16 %v282
    %v742 = vunpack.c.l.b16 %v283
    %v743 = vunpack.c.h.b16 %v283
    %v744 = vunpack.c.l.b16 %v284
    %v745 = vunpack.c.h.b16 %v284
    %v746 = vunpack.c.l.b16 %v285
    %v747 = vunpack.c.h.b16 %v285
    %v748 = vunpack.c.l.b16 %v286
    %v749 = vunpack.c.h.b16 %v286
    %v750 = vunpack.c.l.b16 %v287
    %v751 = vunpack.c.h.b16 %v287
    %v752 = vunpack.c.l.b16 %v288
    %v753 = vunpack.c.h.b16 %v288
    %v754 = vunpack.c.l.b16 %v289
    %v755 = vunpack.c.h.b16 %v289
    %v756 = vunpack.c.l.b16 %v290
    %v757 = vunpack.c.h.b16 %v290
    %v758 = vunpack.c.l.b16 %v291
    %v759 = vunpack.c.h.b16 %v291
    %v760 = vunpack.c.l.b16 %v292
    %v761 = vunpack.c.h.b16 %v292
    %v762 = vunpack.c.l.b16 %v293
    %v763 = vunpack.c.h.b16 %v293
    %v764 = vunpack.c.l.b16 %v294
    %v765 = vunpack.c.h.b16 %v294
    %v766 = vunpack.c.l.b16 %v295
    %v767 = vunpack.c.h.b16 %v295
    %v768 = vunpack.c.l.b16 %v296
    %v769 = vunpack.c.h.b16 %v296
    %v770 = vunpack.c.l.b16 %v297
    %v771 = vunpack.c.h.b16 %v297
    %v772 = vunpack.c.l.b16 %v298
    %v773 = vunpack.c.h.b16 %v298
    %v774 = vunpack.c.l.b16 %v299
    %v775 = vunpack.c.h.b16 %v299
    %v776 = vunpack.c.l.b16 %v300
    %v777 = vunpack.c.h.b16 %v300
    %v778 = vunpack.c.l.b16 %v301
    %v779 = vunpack.c.h.b16 %v301
    %v780 = vunpack.c.l.b16 %v302
    %v781 = vunpack.c.h.b16 %v302
    %v782 = vunpack.c.l.b16 %v303
    %v783 = vunpack.c.h.b16 %v303
    %v784 = vunpack.c.l.b16 %v304
    %v785 = vunpack.c.h.b16 %v304
    %v786 = vunpack.c.l.b16 %v305
    %v787 = vunpack.c.h.b16 %v305
    %v788 = vunpack.c.l.b16 %v306
    %v789 = vunpack.c.h.b16 %v306
    %v790 = vunpack.c.l.b16 %v307
    %v791 = vunpack.c.h.b16 %v307
    %v792 = vunpack.c.l.b16 %v308
    %v793 = vunpack.c.h.b16 %v308
    %v794 = vunpack.c.l.b16 %v309
    %v795 = vunpack.c.h.b16 %v309
    %v796 = vunpack.c.l.b16 %v310
    %v797 = vunpack.c.h.b16 %v310
    %v798 = vunpack.c.l.b16 %v311
    %v799 = vunpack.c.h.b16 %v311
    %v800 = vunpack.c.l.b16 %v312
    %v801 = vunpack.c.h.b16 %v312
    %v802 = vunpack.c.l.b16 %v313
    %v803 = vunpack.c.h.b16 %v313
    %v804 = vunpack.c.l.b16 %v314
    %v805 = vunpack.c.h.b16 %v314
    %v806 = vunpack.c.l.b16 %v315
    %v807 = vunpack.c.h.b16 %v315
    %v808 = vunpack.c.l.b16 %v316
    %v809 = vunpack.c.h.b16 %v316
    %v810 = vunpack.c.l.b16 %v317
    %v811 = vunpack.c.h.b16 %v317
    %v812 = vunpack.c.l.b16 %v318
    %v813 = vunpack.c.h.b16 %v318
    %v814 = vunpack.c.l.b16 %v319
    %v815 = vunpack.c.h.b16 %v319
    %v816 = vunpack.c.l.b16 %v320
    %v817 = vunpack.c.h.b16 %v320
    %v818 = vunpack.c.l.b16 %v321
    %v819 = vunpack.c.h.b16 %v321
    %v820 = vunpack.c.l.b16 %v322
    %v821 = vunpack.c.h.b16 %v322
    %v822 = vunpack.c.l.b16 %v323
    %v823 = vunpack.c.h.b16 %v323
    %v824 = vunpack.c.l.b16 %v324
    %v825 = vunpack.c.h.b16 %v324
    %v826 = vunpack.c.l.b16 %v325
    %v827 = vunpack.c.h.b16 %v325
    %v828 = vunpack.c.l.b16 %v326
    %v829 = vunpack.c.h.b16 %v326
    %v830 = vunpack.c.l.b16 %v327
    %v831 = vunpack.c.h.b16 %v327
    %v832 = vunpack.c.l.b16 %v328
    %v833 = vunpack.c.h.b16 %v328
    %v834 = vunpack.c.l.b16 %v329
    %v835 = vunpack.c.h.b16 %v329
    %v836 = vunpack.c.l.b16 %v330
    %v837 = vunpack.c.h.b16 %v330
    %v838 = vunpack.c.l.b16 %v331
    %v839 = vunpack.c.h.b16 %v331
    %v840 = vunpack.c.l.b16 %v332
    %v841 = vunpack.c.h.b16 %v332
    %v842 = vunpack.c.l.b16 %v333
    %v843 = vunpack.c.h.b16 %v333
    %v844 = vunpack.c.l.b16 %v334
    %v845 = vunpack.c.h.b16 %v334
    %v846 = vunpack.c.l.b16 %v335
    %v847 = vunpack.c.h.b16 %v335
    %v848 = vunpack.c.l.b16 %v336
    %v849 = vunpack.c.h.b16 %v336
    %v850 = vunpack.c.l.b16 %v337
    %v851 = vunpack.c.h.b16 %v337
    %v852 = vunpack.c.l.b16 %v338
    %v853 = vunpack.c.h.b16 %v338
    %v854 = vunpack.c.l.b16 %v339
    %v855 = vunpack.c.h.b16 %v339
    %v856 = vunpack.c.l.b16 %v340
    %v857 = vunpack.c.h.b16 %v340
    %v858 = vunpack.c.l.b16 %v341
    %v859 = vunpack.c.h.b16 %v341
    %v860 = vunpack.c.l.b16 %v342
    %v861 = vunpack.c.h.b16 %v342
    %v862 = vunpack.c.l.b16 %v343
    %v863 = vunpack.c.h.b16 %v343
    %v864 = vunpack.c.l.b16 %v344
    %v865 = vunpack.c.h.b16 %v344
    %v866 = vunpack.c.l.b16 %v345
    %v867 = vunpack.c.h.b16 %v345
    %v868 = vunpack.c.l.b16 %v346
    %v869 = vunpack.c.h.b16 %v346
    %v870 = vunpack.c.l.b16 %v347
    %v871 = vunpack.c.h.b16 %v347
    %v872 = vunpack.c.l.b16 %v348
    %v873 = vunpack.c.h.b16 %v348
    %v874 = vunpack.c.l.b16 %v349
    %v875 = vunpack.c.h.b16 %v349
    %v876 = vunpack.c.l.b16 %v350
    %v877 = vunpack.c.h.b16 %v350
    %v878 = vunpack.c.l.b16 %v351
    %v879 = vunpack.c.h.b16 %v351
    %v880 = vunpack.c.l.b16 %v352
    %v881 = vunpack.c.h.b16 %v352
    %v882 = vunpack.c.l.b16 %v353
    %v883 = vunpack.c.h.b16 %v353
    %v884 = vunpack.c.l.b16 %v354
    %v885 = vunpack.c.h.b16 %v354
    %v886 = vunpack.c.l.b16 %v355
    %v887 = vunpack.c.h.b16 %v355
    %v888 = vunpack.c.l.b16 %v356
    %v889 = vunpack.c.h.b16 %v356
    %v890 = vunpack.c.l.b16 %v357
    %v891 = vunpack.c.h.b16 %v357
    %v892 = vunpack.c.l.b16 %v358
    %v893 = vunpack.c.h.b16 %v358
    %v894 = vunpack.c.l.b16 %v359
    %v895 = vunpack.c.h.b16 %v359
    %v896 = vunpack.c.l.b16 %v360
    %v897 = vunpack.c.h.b16 %v360
    %v898 = vunpack.c.l.b16 %v361
    %v899 = vunpack.c.h.b16 %v361
    %v900 = vunpack.c.l.b16 %v362
    %v901 = vunpack.c.h.b16 %v362
    %v902 = vunpack.c.l.b16 %v363
    %v903 = vunpack.c.h.b16 %v363
    %v904 = vunpack.c.l.b16 %v364
    %v905 = vunpack.c.h.b16 %v364
    %v906 = vunpack.c.l.b16 %v365
    %v907 = vunpack.c.h.b16 %v365
    %v908 = vunpack.c.l.b16 %v366
    %v909 = vunpack.c.h.b16 %v366
    %v910 = vunpack.c.l.b16 %v367
    %v911 = vunpack.c.h.b16 %v367
    %v912 = vunpack.c.l.b16 %v368
    %v913 = vunpack.c.h.b16 %v368
    %v914 = vunpack.c.l.b16 %v369
    %v915 = vunpack.c.h.b16 %v369
    %v916 = vunpack.c.l.b16 %v370
    %v917 = vunpack.c.h.b16 %v370
    %v918 = vunpack.c.l.b16 %v371
    %v919 = vunpack.c.h.b16 %v371
    %v920 = vunpack.c.l.b16 %v372
    %v921 = vunpack.c.h.b16 %v372
    %v922 = vunpack.c.l.b16 %v373
    %v923 = vunpack.c.h.b16 %v373
    %v924 = vunpack.c.l.b16 %v374
    %v925 = vunpack.c.h.b16 %v374
    %v926 = vunpack.c.l.b16 %v375
    %v927 = vunpack.c.h.b16 %v375
    %v928 = vunpack.c.l.b16 %v376
    %v929 = vunpack.c.h.b16 %v376
    %v930 = vunpack.c.l.b16 %v377
    %v931 = vunpack.c.h.b16 %v377
    %v932 = vunpack.c.l.b16 %v378
    %v933 = vunpack.c.h.b16 %v378
    %v934 = vunpack.c.l.b16 %v379
    %v935 = vunpack.c.h.b16 %v379
    %v936 = vunpack.c.l.b16 %v380
    %v937 = vunpack.c.h.b16 %v380
    %v938 = vunpack.c.l.b16 %v381
    %v939 = vunpack.c.h.b16 %v381
    %v940 = vunpack.c.l.b16 %v382
    %v941 = vunpack.c.h.b16 %v382
    %v942 = vunpack.c.l.b16 %v383
    %v943 = vunpack.c.h.b16 %v383
    %v944 = vunpack.c.l.b16 %v384
    %v945 = vunpack.c.h.b16 %v384
    %v946 = vunpack.c.l.b16 %v385
    %v947 = vunpack.c.h.b16 %v385
    %v948 = vunpack.c.l.b16 %v386
    %v949 = vunpack.c.h.b16 %v386
    %v950 = vunpack.c.l.b16 %v387
    %v951 = vunpack.c.h.b16 %v387
    %v952 = vunpack.c.l.b16 %v388
    %v953 = vunpack.c.h.b16 %v388
    %v954 = vunpack.c.l.b16 %v389
    %v955 = vunpack.c.h.b16 %v389
    %v956 = vunpack.c.l.b16 %v390
    %v957 = vunpack.c.h.b16 %v390
    %v958 = vunpack.c.l.b16 %v391
    %v959 = vunpack.c.h.b16 %v391
    %v960 = vunpack.c.l.b16 %v392
    %v961 = vunpack.c.h.b16 %v392
    %v962 = vunpack.c.l.b16 %v393
    %v963 = vunpack.c.h.b16 %v393
    %v964 = vunpack.c.l.b16 %v394
    %v965 = vunpack.c.h.b16 %v394
    %v966 = vunpack.c.l.b16 %v395
    %v967 = vunpack.c.h.b16 %v395
    %v968 = vunpack.c.l.b16 %v396
    %v969 = vunpack.c.h.b16 %v396
    %v970 = vunpack.c.l.b16 %v397
    %v971 = vunpack.c.h.b16 %v397
    %v972 = vunpack.c.l.b16 %v398
    %v973 = vunpack.c.h.b16 %v398
    %v974 = vunpack.c.l.b16 %v399
    %v975 = vunpack.c.h.b16 %v399
    %v976 = vunpack.c.l.b16 %v400
    %v977 = vunpack.c.h.b16 %v400
    %v978 = vunpack.c.l.b16 %v401
    %v979 = vunpack.c.h.b16 %v401
    %v980 = vunpack.c.l.b16 %v402
    %v981 = vunpack.c.h.b16 %v402
    %v982 = vunpack.c.l.b16 %v403
    %v983 = vunpack.c.h.b16 %v403
    %v984 = vunpack.c.l.b16 %v404
    %v985 = vunpack.c.h.b16 %v404
    %v986 = vunpack.c.l.b16 %v405
    %v987 = vunpack.c.h.b16 %v405
    %v988 = vunpack.c.l.b16 %v406
    %v989 = vunpack.c.h.b16 %v406
    %v990 = vunpack.c.l.b16 %v407
    %v991 = vunpack.c.h.b16 %v407
    %v992 = vunpack.c.l.b16 %v408
    %v993 = vunpack.c.h.b16 %v408
    %v994 = vunpack.c.l.b16 %v409
    %v995 = vunpack.c.h.b16 %v409
    %v996 = vunpack.c.l.b16 %v410
    %v997 = vunpack.c.h.b16 %v410
    %v998 = vunpack.c.l.b16 %v411
    %v999 = vunpack.c.h.b16 %v411
    %v1000 = vunpack.c.l.b16 %v412
    %v1001 = vunpack.c.h.b16 %v412
    %v1002 = vunpack.c.l.b16 %v413
    %v1003 = vunpack.c.h.b16 %v413
    %v1004 = vunpack.c.l.b16 %v414
    %v1005 = vunpack.c.h.b16 %v414
    %v1006 = vunpack.c.l.b16 %v415
    %v1007 = vunpack.c.h.b16 %v415
    %v1008 = vunpack.c.l.b16 %v416
    %v1009 = vunpack.c.h.b16 %v416
    %v1010 = vunpack.c.l.b16 %v417
    %v1011 = vunpack.c.h.b16 %v417
    %v1012 = vunpack.c.l.b16 %v418
    %v1013 = vunpack.c.h.b16 %v418
    %v1014 = vunpack.c.l.b16 %v419
    %v1015 = vunpack.c.h.b16 %v419
    %v1016 = vunpack.c.l.b16 %v420
    %v1017 = vunpack.c.h.b16 %v420
    %v1018 = vunpack.c.l.b16 %v421
    %v1019 = vunpack.c.h.b16 %v421
    %v1020 = vunpack.c.l.b16 %v422
    %v1021 = vunpack.c.h.b16 %v422
    %v1022 = vunpack.c.l.b16 %v423
    %v1023 = vunpack.c.h.b16 %v423
    %v1024 = vunpack.c.l.b16 %v424
    %v1025 = vunpack.c.h.b16 %v424
    %v1026 = vunpack.c.l.b16 %v425
    %v1027 = vunpack.c.h.b16 %v425
    %v1028 = vunpack.c.l.b16 %v426
    %v1029 = vunpack.c.h.b16 %v426
    %v1030 = vunpack.c.l.b16 %v427
    %v1031 = vunpack.c.h.b16 %v427
    %v1032 = vunpack.c.l.b16 %v428
    %v1033 = vunpack.c.h.b16 %v428
    %v1034 = vunpack.c.l.b16 %v429
    %v1035 = vunpack.c.h.b16 %v429
    %v1036 = vunpack.c.l.b16 %v430
    %v1037 = vunpack.c.h.b16 %v430
    %v1038 = vunpack.c.l.b16 %v431
    %v1039 = vunpack.c.h.b16 %v431
    %v1040 = vunpack.c.l.b16 %v432
    %v1041 = vunpack.c.h.b16 %v432
    %v1042 = vunpack.c.l.b16 %v433
    %v1043 = vunpack.c.h.b16 %v433
    %v1044 = vpack.c.b16 %v656, %v652
    %v1045 = vpack.c.b16 %v657, %v653
    %v1046 = vpack.c.b16 %v658, %v654
    %v1047 = vpack.c.b16 %v659, %v655
    %v1048 = vpack.c.b16 %v664, %v660
    %v1049 = vpack.c.b16 %v665, %v661
    %v1050 = vpack.c.b16 %v666, %v662
    %v1051 = vpack.c.b16 %v667, %v663
    %v1052 = vpack.c.b16 %v672, %v668
    %v1053 = vpack.c.b16 %v673, %v669
    %v1054 = vpack.c.b16 %v674, %v670
    %v1055 = vpack.c.b16 %v675, %v671
    %v1056 = vpack.c.b16 %v680, %v676
    %v1057 = vpack.c.b16 %v681, %v677
    %v1058 = vpack.c.b16 %v682, %v678
    %v1059 = vpack.c.b16 %v683, %v679
    %v1060 = vpack.c.b16 %v688, %v684
    %v1061 = vpack.c.b16 %v689, %v685
    %v1062 = vpack.c.b16 %v690, %v686
    %v1063 = vpack.c.b16 %v691, %v687
    %v1064 = vpack.c.b16 %v696, %v692
    %v1065 = vpack.c.b16 %v697, %v693
    %v1066 = vpack.c.b16 %v698, %v694
    %v1067 = vpack.c.b16 %v699, %v695
    %v1068 = vpack.c.b16 %v704, %v700
    %v1069 = vpack.c.b16 %v705, %v701
    %v1070 = vpack.c.b16 %v706, %v702
    %v1071 = vpack.c.b16 %v707, %v703
    %v1072 = vpack.c.b16 %v712, %v708
    %v1073 = vpack.c.b16 %v713, %v709
    %v1074 = vpack.c.b16 %v714, %v710
    %v1075 = vpack.c.b16 %v715, %v711
    %v1076 = vpack.c.b16 %v720, %v716
    %v1077 = vpack.c.b16 %v721, %v717
    %v1078 = vpack.c.b16 %v722, %v718
    %v1079 = vpack.c.b16 %v723, %v719
    %v1080 = vpack.c.b16 %v728, %v724
    %v1081 = vpack.c.b16 %v729, %v725
    %v1082 = vpack.c.b16 %v730, %v726
    %v1083 = vpack.c.b16 %v731, %v727
    %v1084 = vpack.c.b16 %v736, %v732
    %v1085 = vpack.c.b16 %v737, %v733
    %v1086 = vpack.c.b16 %v738, %v734
    %v1087 = vpack.c.b16 %v739, %v735
    %v1088 = vpack.c.b16 %v744, %v740
    %v1089 = vpack.c.b16 %v745, %v741
    %v1090 = vpack.c.b16 %v746, %v742
    %v1091 = vpack.c.b16 %v747, %v743
    %v1092 = vpack.c.b16 %v752, %v748
    %v1093 = vpack.c.b16 %v753, %v749
    %v1094 = vpack.c.b16 %v754, %v750
    %v1095 = vpack.c.b16 %v755, %v751
    %v1096 = vpack.c.b16 %v760, %v756
    %v1097 = vpack.c.b16 %v761, %v757
    %v1098 = vpack.c.b16 %v762, %v758
    %v1099 = vpack.c.b16 %v763, %v759
    %v1100 = vpack.c.b16 %v768, %v764
    %v1101 = vpack.c.b16 %v769, %v765
    %v1102 = vpack.c.b16 %v770, %v766
    %v1103 = vpack.c.b16 %v771, %v767
    %v1104 = vpack.c.b16 %v776, %v772
    %v1105 = vpack.c.b16 %v777, %v773
    %v1106 = vpack.c.b16 %v778, %v774
    %v1107 = vpack.c.b16 %v779, %v775
    %v1108 = vpack.c.b16 %v784, %v780
    %v1109 = vpack.c.b16 %v785, %v781
    %v1110 = vpack.c.b16 %v786, %v782
    %v1111 = vpack.c.b16 %v787, %v783
    %v1112 = vpack.c.b16 %v792, %v788
    %v1113 = vpack.c.b16 %v793, %v789
    %v1114 = vpack.c.b16 %v794, %v790
    %v1115 = vpack.c.b16 %v795, %v791
    %v1116 = vpack.c.b16 %v800, %v796
    %v1117 = vpack.c.b16 %v801, %v797
    %v1118 = vpack.c.b16 %v802, %v798
    %v1119 = vpack.c.b16 %v803, %v799
    %v1120 = vpack.c.b16 %v808, %v804
    %v1121 = vpack.c.b16 %v809, %v805
    %v1122 = vpack.c.b16 %v810, %v806
    %v1123 = vpack.c.b16 %v811, %v807
    %v1124 = vpack.c.b16 %v816, %v812
    %v1125 = vpack.c.b16 %v817, %v813
    %v1126 = vpack.c.b16 %v818, %v814
    %v1127 = vpack.c.b16 %v819, %v815
    %v1128 = vpack.c.b16 %v824, %v820
    %v1129 = vpack.c.b16 %v825, %v821
    %v1130 = vpack.c.b16 %v826, %v822
    %v1131 = vpack.c.b16 %v827, %v823
    %v1132 = vpack.c.b16 %v832, %v828
    %v1133 = vpack.c.b16 %v833, %v829
    %v1134 = vpack.c.b16 %v834, %v830
    %v1135 = vpack.c.b16 %v835, %v831
    %v1136 = vpack.c.b16 %v840, %v836
    %v1137 = vpack.c.b16 %v841, %v837
    %v1138 = vpack.c.b16 %v842, %v838
    %v1139 = vpack.c.b16 %v843, %v839
    %v1140 = vpack.c.b16 %v848, %v844
    %v1141 = vpack.c.b16 %v849, %v845
    %v1142 = vpack.c.b16 %v850, %v846
    %v1143 = vpack.c.b16 %v851, %v847
    %v1144 = vpack.c.b16 %v856, %v852
    %v1145 = vpack.c.b16 %v857, %v853
    %v1146 = vpack.c.b16 %v858, %v854
    %v1147 = vpack.c.b16 %v859, %v855
    %v1148 = vpack.c.b16 %v864, %v860
    %v1149 = vpack.c.b16 %v865, %v861
    %v1150 = vpack.c.b16 %v866, %v862
    %v1151 = vpack.c.b16 %v867, %v863
    %v1152 = vpack.c.b16 %v872, %v868
    %v1153 = vpack.c.b16 %v873, %v869
    %v1154 = vpack.c.b16 %v874, %v870
    %v1155 = vpack.c.b16 %v875, %v871
    %v1156 = vpack.c.b16 %v880, %v876
    %v1157 = vpack.c.b16 %v881, %v877
    %v1158 = vpack.c.b16 %v882, %v878
    %v1159 = vpack.c.b16 %v883, %v879
    %v1160 = vpack.c.b16 %v888, %v884
    %v1161 = vpack.c.b16 %v889, %v885
    %v1162 = vpack.c.b16 %v890, %v886
    %v1163 = vpack.c.b16 %v891, %v887
    %v1164 = vpack.c.b16 %v896, %v892
    %v1165 = vpack.c.b16 %v897, %v893
    %v1166 = vpack.c.b16 %v898, %v894
    %v1167 = vpack.c.b16 %v899, %v895
    %v1168 = vpack.c.b16 %v904, %v900
    %v1169 = vpack.c.b16 %v905, %v901
    %v1170 = vpack.c.b16 %v906, %v902
    %v1171 = vpack.c.b16 %v907, %v903
    %v1172 = vpack.c.b16 %v912, %v908
    %v1173 = vpack.c.b16 %v913, %v909
    %v1174 = vpack.c.b16 %v914, %v910
    %v1175 = vpack.c.b16 %v915, %v911
    %v1176 = vpack.c.b16 %v920, %v916
    %v1177 = vpack.c.b16 %v921, %v917
    %v1178 = vpack.c.b16 %v922, %v918
    %v1179 = vpack.c.b16 %v923, %v919
    %v1180 = vpack.c.b16 %v928, %v924
    %v1181 = vpack.c.b16 %v929, %v925
    %v1182 = vpack.c.b16 %v930, %v926
    %v1183 = vpack.c.b16 %v931, %v927
    %v1184 = vpack.c.b16 %v936, %v932
    %v1185 = vpack.c.b16 %v937, %v933
    %v1186 = vpack.c.b16 %v938, %v934
    %v1187 = vpack.c.b16 %v939, %v935
    %v1188 = vpack.c.b16 %v944, %v940
    %v1189 = vpack.c.b16 %v945, %v941
    %v1190 = vpack.c.b16 %v946, %v942
    %v1191 = vpack.c.b16 %v947, %v943
    %v1192 = vpack.c.b16 %v952, %v948
    %v1193 = vpack.c.b16 %v953, %v949
    %v1194 = vpack.c.b16 %v954, %v950
    %v1195 = vpack.c.b16 %v955, %v951
    %v1196 = vpack.c.b16 %v960, %v956
    %v1197 = vpack.c.b16 %v961, %v957
    %v1198 = vpack.c.b16 %v962, %v958
    %v1199 = vpack.c.b16 %v963, %v959
    %v1200 = vpack.c.b16 %v968, %v964
    %v1201 = vpack.c.b16 %v969, %v965
    %v1202 = vpack.c.b16 %v970, %v966
    %v1203 = vpack.c.b16 %v971, %v967
    %v1204 = vpack.c.b16 %v976, %v972
    %v1205 = vpack.c.b16 %v977, %v973
    %v1206 = vpack.c.b16 %v978, %v974
    %v1207 = vpack.c.b16 %v979, %v975
    %v1208 = vpack.c.b16 %v984, %v980
    %v1209 = vpack.c.b16 %v985, %v981
    %v1210 = vpack.c.b16 %v986, %v982
    %v1211 = vpack.c.b16 %v987, %v983
    %v1212 = vpack.c.b16 %v992, %v988
    %v1213 = vpack.c.b16 %v993, %v989
    %v1214 = vpack.c.b16 %v994, %v990
    %v1215 = vpack.c.b16 %v995, %v991
    %v1216 = vpack.c.b16 %v1000, %v996
    %v1217 = vpack.c.b16 %v1001, %v997
    %v1218 = vpack.c.b16 %v1002, %v998
    %v1219 = vpack.c.b16 %v1003, %v999
    %v1220 = vpack.c.b16 %v1008, %v1004
    %v1221 = vpack.c.b16 %v1009, %v1005
    %v1222 = vpack.c.b16 %v1010, %v1006
    %v1223 = vpack.c.b16 %v1011, %v1007
    %v1224 = vpack.c.b16 %v1016, %v1012
    %v1225 = vpack.c.b16 %v1017, %v1013
    %v1226 = vpack.c.b16 %v1018, %v1014
    %v1227 = vpack.c.b16 %v1019, %v1015
    %v1228 = vpack.c.b16 %v1024, %v1020
    %v1229 = vpack.c.b16 %v1025, %v1021
    %v1230 = vpack.c.b16 %v1026, %v1022
    %v1231 = vpack.c.b16 %v1027, %v1023
    %v1232 = vpack.c.b16 %v1032, %v1028
    %v1233 = vpack.c.b16 %v1033, %v1029
    %v1234 = vpack.c.b16 %v1034, %v1030
    %v1235 = vpack.c.b16 %v1035, %v1031
    %v1236 = vpack.c.b16 %v1040, %v1036
    %v1237 = vpack.c.b16 %v1041, %v1037
    %v1238 = vpack.c.b16 %v1042, %v1038
    %v1239 = vpack.c.b16 %v1043, %v1039
    %vm1436 = vcmask 130048
    %v1438 = vsel %vm1436, %v188, 0
    %v1441 = vsel %vm1436, %v195, 0
    %v1444 = vsel %vm1436, %v202, 0
    %v1447 = vsel %vm1436, %v209, 0
    %v1450 = vsel %vm1436, %v216, 0
    %v1453 = vsel %vm1436, %v223, 0
    %v1456 = vsel %vm1436, %v230, 0
    %v1459 = vsel %vm1436, %v237, 0
    %1461 = vmatprep.subr.bf16.mxu0 %v1045
    %1462 = vmatpush1.bf16.msra.mxu0 %v1044
    %1463 = vmatprep.subr.bf16.mxu0 %v1049
    %1464 = vmatpush1.bf16.msra.mxu0 %v1048
    %1465 = vmatprep.subr.bf16.mxu0 %v1053
    %1466 = vmatpush1.bf16.msra.mxu0 %v1052
    %1467 = vmatprep.subr.bf16.mxu0 %v1057
    %1468 = vmatpush1.bf16.msra.mxu0 %v1056
    %1469 = vmatprep.subr.bf16.mxu0 %v1061
    %1470 = vmatpush1.bf16.msra.mxu0 %v1060
    %1471 = vmatprep.subr.bf16.mxu0 %v1065
    %1472 = vmatpush1.bf16.msra.mxu0 %v1064
    %1473 = vmatprep.subr.bf16.mxu0 %v1069
    %1474 = vmatpush1.bf16.msra.mxu0 %v1068
    %1475 = vmatprep.subr.bf16.mxu0 %v1073
    %1476 = vmatpush1.bf16.msra.mxu0 %v1072
    %1477 = vmatprep.subr.bf16.mxu0 %v1077
    %1478 = vmatpush1.bf16.msra.mxu0 %v1076
    %1479 = vmatprep.subr.bf16.mxu0 %v1081
    %1480 = vmatpush1.bf16.msra.mxu0 %v1080
    %1481 = vmatprep.subr.bf16.mxu0 %v1085
    %1482 = vmatpush1.bf16.msra.mxu0 %v1084
    %1483 = vmatprep.subr.bf16.mxu0 %v1089
    %1484 = vmatpush1.bf16.msra.mxu0 %v1088
    %1485 = vmatprep.subr.bf16.mxu0 %v1093
    %1486 = vmatpush1.bf16.msra.mxu0 %v1092
    %1487 = vmatprep.subr.bf16.mxu0 %v1097
    %1488 = vmatpush1.bf16.msra.mxu0 %v1096
    %1489 = vmatprep.subr.bf16.mxu0 %v1101
    %1490 = vmatpush1.bf16.msra.mxu0 %v1100
    %1491 = vmatprep.subr.bf16.mxu0 %v1105
    %1492 = vmatpush1.bf16.msra.mxu0 %v1104
    %1493 = vmatprep.mubr.bf16.mxu0 %v183
    %1494 = vmatmul.mubr.bf16.gmra.mrb[0].mxu0 %v182
    %v1495 = vpop.f32.mrb[0].mxu0
    %v1496 = vadd.f32 %v439, %v1495
    %v1497 = vpop.f32.mrb[0].mxu0
    %v1498 = vadd.f32 %v443, %v1497
    %v1499 = vpop.f32.mrb[0].mxu0
    %v1500 = vadd.f32 %v439, %v1499
    %v1501 = vpop.f32.mrb[0].mxu0
    %v1502 = vadd.f32 %v443, %v1501
    %1503 = vmatprep.mubr.bf16.mxu0 %v190
    %1504 = vmatmul.mubr.bf16.gmra.mrb[0].mxu0 %v189
    %v1505 = vpop.f32.mrb[0].mxu0
    %v1506 = vadd.f32 %v439, %v1505
    %v1507 = vpop.f32.mrb[0].mxu0
    %v1508 = vadd.f32 %v443, %v1507
    %v1509 = vpop.f32.mrb[0].mxu0
    %v1510 = vadd.f32 %v439, %v1509
    %v1511 = vpop.f32.mrb[0].mxu0
    %v1512 = vadd.f32 %v443, %v1511
    %1513 = vmatprep.mubr.bf16.mxu0 %v197
    %1514 = vmatmul.mubr.bf16.gmra.mrb[0].mxu0 %v196
    %v1515 = vpop.f32.mrb[0].mxu0
    %v1516 = vadd.f32 %v439, %v1515
    %v1517 = vpop.f32.mrb[0].mxu0
    %v1518 = vadd.f32 %v443, %v1517
    %v1519 = vpop.f32.mrb[0].mxu0
    %v1520 = vadd.f32 %v439, %v1519
    %v1521 = vpop.f32.mrb[0].mxu0
    %v1522 = vadd.f32 %v443, %v1521
    %1523 = vmatprep.mubr.bf16.mxu0 %v204
    %1524 = vmatmul.mubr.bf16.gmra.mrb[0].mxu0 %v203
    %v1525 = vpop.f32.mrb[0].mxu0
    %v1526 = vadd.f32 %v439, %v1525
    %v1527 = vpop.f32.mrb[0].mxu0
    %v1528 = vadd.f32 %v443, %v1527
    %v1529 = vpop.f32.mrb[0].mxu0
    %v1530 = vadd.f32 %v439, %v1529
    %v1531 = vpop.f32.mrb[0].mxu0
    %v1532 = vadd.f32 %v443, %v1531
    %1533 = vmatprep.mubr.bf16.mxu0 %v211
    %1534 = vmatmul.mubr.bf16.gmra.mrb[0].mxu0 %v210
    %v1535 = vpop.f32.mrb[0].mxu0
    %v1536 = vadd.f32 %v439, %v1535
    %v1537 = vpop.f32.mrb[0].mxu0
    %v1538 = vadd.f32 %v443, %v1537
    %v1539 = vpop.f32.mrb[0].mxu0
    %v1540 = vadd.f32 %v439, %v1539
    %v1541 = vpop.f32.mrb[0].mxu0
    %v1542 = vadd.f32 %v443, %v1541
    %1543 = vmatprep.mubr.bf16.mxu0 %v218
    %1544 = vmatmul.mubr.bf16.gmra.mrb[0].mxu0 %v217
    %v1545 = vpop.f32.mrb[0].mxu0
    %v1546 = vadd.f32 %v439, %v1545
    %v1547 = vpop.f32.mrb[0].mxu0
    %v1548 = vadd.f32 %v443, %v1547
    %v1549 = vpop.f32.mrb[0].mxu0
    %v1550 = vadd.f32 %v439, %v1549
    %v1551 = vpop.f32.mrb[0].mxu0
    %v1552 = vadd.f32 %v443, %v1551
    %1553 = vmatprep.mubr.bf16.mxu0 %v225
    %1554 = vmatmul.mubr.bf16.gmra.mrb[0].mxu0 %v224
    %v1555 = vpop.f32.mrb[0].mxu0
    %v1556 = vadd.f32 %v439, %v1555
    %v1557 = vpop.f32.mrb[0].mxu0
    %v1558 = vadd.f32 %v443, %v1557
    %v1559 = vpop.f32.mrb[0].mxu0
    %v1560 = vadd.f32 %v439, %v1559
    %v1561 = vpop.f32.mrb[0].mxu0
    %v1562 = vadd.f32 %v443, %v1561
    %1563 = vmatprep.mubr.bf16.mxu0 %v232
    %1564 = vmatmul.mubr.bf16.gmra.mrb[0].mxu0 %v231
    %v1565 = vpop.f32.mrb[0].mxu0
    %v1566 = vadd.f32 %v439, %v1565
    %v1567 = vpop.f32.mrb[0].mxu0
    %v1568 = vadd.f32 %v443, %v1567
    %v1569 = vpop.f32.mrb[0].mxu0
    %v1570 = vadd.f32 %v439, %v1569
    %v1571 = vpop.f32.mrb[0].mxu0
    %v1572 = vadd.f32 %v443, %v1571
    %1573 = vdwg.mxu0
    %1574 = vmatprep.subr.bf16.mxu0 %v1109
    %1575 = vmatpush1.bf16.msra.mxu0 %v1108
    %1576 = vmatprep.subr.bf16.mxu0 %v1113
    %1577 = vmatpush1.bf16.msra.mxu0 %v1112
    %1578 = vmatprep.subr.bf16.mxu0 %v1117
    %1579 = vmatpush1.bf16.msra.mxu0 %v1116
    %1580 = vmatprep.subr.bf16.mxu0 %v1121
    %1581 = vmatpush1.bf16.msra.mxu0 %v1120
    %1582 = vmatprep.subr.bf16.mxu0 %v1125
    %1583 = vmatpush1.bf16.msra.mxu0 %v1124
    %1584 = vmatprep.subr.bf16.mxu0 %v1129
    %1585 = vmatpush1.bf16.msra.mxu0 %v1128
    %1586 = vmatprep.subr.bf16.mxu0 %v1133
    %1587 = vmatpush1.bf16.msra.mxu0 %v1132
    %1588 = vmatprep.subr.bf16.mxu0 %v1137
    %1589 = vmatpush1.bf16.msra.mxu0 %v1136
    %1590 = vmatprep.subr.bf16.mxu0 %v1141
    %1591 = vmatpush1.bf16.msra.mxu0 %v1140
    %1592 = vmatprep.subr.bf16.mxu0 %v1145
    %1593 = vmatpush1.bf16.msra.mxu0 %v1144
    %1594 = vmatprep.subr.bf16.mxu0 %v1149
    %1595 = vmatpush1.bf16.msra.mxu0 %v1148
    %1596 = vmatprep.subr.bf16.mxu0 %v1153
    %1597 = vmatpush1.bf16.msra.mxu0 %v1152
    %1598 = vmatprep.subr.bf16.mxu0 %v1157
    %1599 = vmatpush1.bf16.msra.mxu0 %v1156
    %1600 = vmatprep.subr.bf16.mxu0 %v1161
    %1601 = vmatpush1.bf16.msra.mxu0 %v1160
    %1602 = vmatprep.subr.bf16.mxu0 %v1165
    %1603 = vmatpush1.bf16.msra.mxu0 %v1164
    %1604 = vmatprep.subr.bf16.mxu0 %v1169
    %1605 = vmatpush1.bf16.msra.mxu0 %v1168
    %1606 = vmatprep.mubr.bf16.mxu0 %v185
    %1607 = vmatmul.mubr.bf16.gmra.mrb[0].mxu0 %v184
    %v1608 = vpop.f32.mrb[0].mxu0
    %v1609 = vadd.f32 %v1496, %v1608
    %v1610 = vpop.f32.mrb[0].mxu0
    %v1611 = vadd.f32 %v1498, %v1610
    %v1612 = vpop.f32.mrb[0].mxu0
    %v1613 = vadd.f32 %v1500, %v1612
    %v1614 = vpop.f32.mrb[0].mxu0
    %v1615 = vadd.f32 %v1502, %v1614
    %1616 = vmatprep.mubr.bf16.mxu0 %v192
    %1617 = vmatmul.mubr.bf16.gmra.mrb[0].mxu0 %v191
    %v1618 = vpop.f32.mrb[0].mxu0
    %v1619 = vadd.f32 %v1506, %v1618
    %v1620 = vpop.f32.mrb[0].mxu0
    %v1621 = vadd.f32 %v1508, %v1620
    %v1622 = vpop.f32.mrb[0].mxu0
    %v1623 = vadd.f32 %v1510, %v1622
    %v1624 = vpop.f32.mrb[0].mxu0
    %v1625 = vadd.f32 %v1512, %v1624
    %1626 = vmatprep.mubr.bf16.mxu0 %v199
    %1627 = vmatmul.mubr.bf16.gmra.mrb[0].mxu0 %v198
    %v1628 = vpop.f32.mrb[0].mxu0
    %v1629 = vadd.f32 %v1516, %v1628
    %v1630 = vpop.f32.mrb[0].mxu0
    %v1631 = vadd.f32 %v1518, %v1630
    %v1632 = vpop.f32.mrb[0].mxu0
    %v1633 = vadd.f32 %v1520, %v1632
    %v1634 = vpop.f32.mrb[0].mxu0
    %v1635 = vadd.f32 %v1522, %v1634
    %1636 = vmatprep.mubr.bf16.mxu0 %v206
    %1637 = vmatmul.mubr.bf16.gmra.mrb[0].mxu0 %v205
    %v1638 = vpop.f32.mrb[0].mxu0
    %v1639 = vadd.f32 %v1526, %v1638
    %v1640 = vpop.f32.mrb[0].mxu0
    %v1641 = vadd.f32 %v1528, %v1640
    %v1642 = vpop.f32.mrb[0].mxu0
    %v1643 = vadd.f32 %v1530, %v1642
    %v1644 = vpop.f32.mrb[0].mxu0
    %v1645 = vadd.f32 %v1532, %v1644
    %1646 = vmatprep.mubr.bf16.mxu0 %v213
    %1647 = vmatmul.mubr.bf16.gmra.mrb[0].mxu0 %v212
    %v1648 = vpop.f32.mrb[0].mxu0
    %v1649 = vadd.f32 %v1536, %v1648
    %v1650 = vpop.f32.mrb[0].mxu0
    %v1651 = vadd.f32 %v1538, %v1650
    %v1652 = vpop.f32.mrb[0].mxu0
    %v1653 = vadd.f32 %v1540, %v1652
    %v1654 = vpop.f32.mrb[0].mxu0
    %v1655 = vadd.f32 %v1542, %v1654
    %1656 = vmatprep.mubr.bf16.mxu0 %v220
    %1657 = vmatmul.mubr.bf16.gmra.mrb[0].mxu0 %v219
    %v1658 = vpop.f32.mrb[0].mxu0
    %v1659 = vadd.f32 %v1546, %v1658
    %v1660 = vpop.f32.mrb[0].mxu0
    %v1661 = vadd.f32 %v1548, %v1660
    %v1662 = vpop.f32.mrb[0].mxu0
    %v1663 = vadd.f32 %v1550, %v1662
    %v1664 = vpop.f32.mrb[0].mxu0
    %v1665 = vadd.f32 %v1552, %v1664
    %1666 = vmatprep.mubr.bf16.mxu0 %v227
    %1667 = vmatmul.mubr.bf16.gmra.mrb[0].mxu0 %v226
    %v1668 = vpop.f32.mrb[0].mxu0
    %v1669 = vadd.f32 %v1556, %v1668
    %v1670 = vpop.f32.mrb[0].mxu0
    %v1671 = vadd.f32 %v1558, %v1670
    %v1672 = vpop.f32.mrb[0].mxu0
    %v1673 = vadd.f32 %v1560, %v1672
    %v1674 = vpop.f32.mrb[0].mxu0
    %v1675 = vadd.f32 %v1562, %v1674
    %1676 = vmatprep.mubr.bf16.mxu0 %v234
    %1677 = vmatmul.mubr.bf16.gmra.mrb[0].mxu0 %v233
    %v1678 = vpop.f32.mrb[0].mxu0
    %v1679 = vadd.f32 %v1566, %v1678
    %v1680 = vpop.f32.mrb[0].mxu0
    %v1681 = vadd.f32 %v1568, %v1680
    %v1682 = vpop.f32.mrb[0].mxu0
    %v1683 = vadd.f32 %v1570, %v1682
    %v1684 = vpop.f32.mrb[0].mxu0
    %v1685 = vadd.f32 %v1572, %v1684
    %1686 = vdwg.mxu0
    %1687 = vmatprep.subr.bf16.mxu0 %v1173
    %1688 = vmatpush1.bf16.msra.mxu0 %v1172
    %1689 = vmatprep.subr.bf16.mxu0 %v1177
    %1690 = vmatpush1.bf16.msra.mxu0 %v1176
    %1691 = vmatprep.subr.bf16.mxu0 %v1181
    %1692 = vmatpush1.bf16.msra.mxu0 %v1180
    %1693 = vmatprep.subr.bf16.mxu0 %v1185
    %1694 = vmatpush1.bf16.msra.mxu0 %v1184
    %1695 = vmatprep.subr.bf16.mxu0 %v1189
    %1696 = vmatpush1.bf16.msra.mxu0 %v1188
    %1697 = vmatprep.subr.bf16.mxu0 %v1193
    %1698 = vmatpush1.bf16.msra.mxu0 %v1192
    %1699 = vmatprep.subr.bf16.mxu0 %v1197
    %1700 = vmatpush1.bf16.msra.mxu0 %v1196
    %1701 = vmatprep.subr.bf16.mxu0 %v1201
    %1702 = vmatpush1.bf16.msra.mxu0 %v1200
    %1703 = vmatprep.subr.bf16.mxu0 %v1205
    %1704 = vmatpush1.bf16.msra.mxu0 %v1204
    %1705 = vmatprep.subr.bf16.mxu0 %v1209
    %1706 = vmatpush1.bf16.msra.mxu0 %v1208
    %1707 = vmatprep.subr.bf16.mxu0 %v1213
    %1708 = vmatpush1.bf16.msra.mxu0 %v1212
    %1709 = vmatprep.subr.bf16.mxu0 %v1217
    %1710 = vmatpush1.bf16.msra.mxu0 %v1216
    %1711 = vmatprep.subr.bf16.mxu0 %v1221
    %1712 = vmatpush1.bf16.msra.mxu0 %v1220
    %1713 = vmatprep.subr.bf16.mxu0 %v1225
    %1714 = vmatpush1.bf16.msra.mxu0 %v1224
    %1715 = vmatprep.subr.bf16.mxu0 %v1229
    %1716 = vmatpush1.bf16.msra.mxu0 %v1228
    %1717 = vmatprep.subr.bf16.mxu0 %v1233
    %1718 = vmatpush1.bf16.msra.mxu0 %v1232
    %1719 = vmatprep.mubr.bf16.mxu0 %v187
    %1720 = vmatmul.mubr.bf16.gmra.mrb[0].mxu0 %v186
    %v1721 = vpop.f32.mrb[0].mxu0
    %v1722 = vadd.f32 %v1609, %v1721
    %v1723 = vpop.f32.mrb[0].mxu0
    %v1724 = vadd.f32 %v1611, %v1723
    %v1725 = vpop.f32.mrb[0].mxu0
    %v1726 = vadd.f32 %v1613, %v1725
    %v1727 = vpop.f32.mrb[0].mxu0
    %v1728 = vadd.f32 %v1615, %v1727
    %1729 = vmatprep.mubr.bf16.mxu0 %v194
    %1730 = vmatmul.mubr.bf16.gmra.mrb[0].mxu0 %v193
    %v1731 = vpop.f32.mrb[0].mxu0
    %v1732 = vadd.f32 %v1619, %v1731
    %v1733 = vpop.f32.mrb[0].mxu0
    %v1734 = vadd.f32 %v1621, %v1733
    %v1735 = vpop.f32.mrb[0].mxu0
    %v1736 = vadd.f32 %v1623, %v1735
    %v1737 = vpop.f32.mrb[0].mxu0
    %v1738 = vadd.f32 %v1625, %v1737
    %1739 = vmatprep.mubr.bf16.mxu0 %v201
    %1740 = vmatmul.mubr.bf16.gmra.mrb[0].mxu0 %v200
    %v1741 = vpop.f32.mrb[0].mxu0
    %v1742 = vadd.f32 %v1629, %v1741
    %v1743 = vpop.f32.mrb[0].mxu0
    %v1744 = vadd.f32 %v1631, %v1743
    %v1745 = vpop.f32.mrb[0].mxu0
    %v1746 = vadd.f32 %v1633, %v1745
    %v1747 = vpop.f32.mrb[0].mxu0
    %v1748 = vadd.f32 %v1635, %v1747
    %1749 = vmatprep.mubr.bf16.mxu0 %v208
    %1750 = vmatmul.mubr.bf16.gmra.mrb[0].mxu0 %v207
    %v1751 = vpop.f32.mrb[0].mxu0
    %v1752 = vadd.f32 %v1639, %v1751
    %v1753 = vpop.f32.mrb[0].mxu0
    %v1754 = vadd.f32 %v1641, %v1753
    %v1755 = vpop.f32.mrb[0].mxu0
    %v1756 = vadd.f32 %v1643, %v1755
    %v1757 = vpop.f32.mrb[0].mxu0
    %v1758 = vadd.f32 %v1645, %v1757
    %1759 = vmatprep.mubr.bf16.mxu0 %v215
    %1760 = vmatmul.mubr.bf16.gmra.mrb[0].mxu0 %v214
    %v1761 = vpop.f32.mrb[0].mxu0
    %v1762 = vadd.f32 %v1649, %v1761
    %v1763 = vpop.f32.mrb[0].mxu0
    %v1764 = vadd.f32 %v1651, %v1763
    %v1765 = vpop.f32.mrb[0].mxu0
    %v1766 = vadd.f32 %v1653, %v1765
    %v1767 = vpop.f32.mrb[0].mxu0
    %v1768 = vadd.f32 %v1655, %v1767
    %1769 = vmatprep.mubr.bf16.mxu0 %v222
    %1770 = vmatmul.mubr.bf16.gmra.mrb[0].mxu0 %v221
    %v1771 = vpop.f32.mrb[0].mxu0
    %v1772 = vadd.f32 %v1659, %v1771
    %v1773 = vpop.f32.mrb[0].mxu0
    %v1774 = vadd.f32 %v1661, %v1773
    %v1775 = vpop.f32.mrb[0].mxu0
    %v1776 = vadd.f32 %v1663, %v1775
    %v1777 = vpop.f32.mrb[0].mxu0
    %v1778 = vadd.f32 %v1665, %v1777
    %1779 = vmatprep.mubr.bf16.mxu0 %v229
    %1780 = vmatmul.mubr.bf16.gmra.mrb[0].mxu0 %v228
    %v1781 = vpop.f32.mrb[0].mxu0
    %v1782 = vadd.f32 %v1669, %v1781
    %v1783 = vpop.f32.mrb[0].mxu0
    %v1784 = vadd.f32 %v1671, %v1783
    %v1785 = vpop.f32.mrb[0].mxu0
    %v1786 = vadd.f32 %v1673, %v1785
    %v1787 = vpop.f32.mrb[0].mxu0
    %v1788 = vadd.f32 %v1675, %v1787
    %1789 = vmatprep.mubr.bf16.mxu0 %v236
    %1790 = vmatmul.mubr.bf16.gmra.mrb[0].mxu0 %v235
    %v1791 = vpop.f32.mrb[0].mxu0
    %v1792 = vadd.f32 %v1679, %v1791
    %v1793 = vpop.f32.mrb[0].mxu0
    %v1794 = vadd.f32 %v1681, %v1793
    %v1795 = vpop.f32.mrb[0].mxu0
    %v1796 = vadd.f32 %v1683, %v1795
    %v1797 = vpop.f32.mrb[0].mxu0
    %v1798 = vadd.f32 %v1685, %v1797
    %1799 = vdwg.mxu0
    %1800 = vmatprep.subr.bf16.mxu0 %v1237
    %1801 = vmatpush1.bf16.msra.mxu0 %v1236
    %1802 = vmatprep.subr.bf16.mxu0 0
    %1803 = vmatpush1.bf16.msra.mxu0 0
    %1804 = vmatprep.subr.bf16.mxu0 0
    %1805 = vmatpush1.bf16.msra.mxu0 0
    %1806 = vmatprep.subr.bf16.mxu0 0
    %1807 = vmatpush1.bf16.msra.mxu0 0
    %1808 = vmatprep.subr.bf16.mxu0 0
    %1809 = vmatpush1.bf16.msra.mxu0 0
    %1810 = vmatprep.subr.bf16.mxu0 0
    %1811 = vmatpush1.bf16.msra.mxu0 0
    %1812 = vmatprep.subr.bf16.mxu0 0
    %1813 = vmatpush1.bf16.msra.mxu0 0
    %1814 = vmatprep.subr.bf16.mxu0 0
    %1815 = vmatpush1.bf16.msra.mxu0 0
    %1816 = vmatprep.subr.bf16.mxu0 0
    %1817 = vmatpush1.bf16.msra.mxu0 0
    %1818 = vmatprep.subr.bf16.mxu0 0
    %1819 = vmatpush1.bf16.msra.mxu0 0
    %1820 = vmatprep.subr.bf16.mxu0 0
    %1821 = vmatpush1.bf16.msra.mxu0 0
    %1822 = vmatprep.subr.bf16.mxu0 0
    %1823 = vmatpush1.bf16.msra.mxu0 0
    %1824 = vmatprep.subr.bf16.mxu0 0
    %1825 = vmatpush1.bf16.msra.mxu0 0
    %1826 = vmatprep.subr.bf16.mxu0 0
    %1827 = vmatpush1.bf16.msra.mxu0 0
    %1828 = vmatprep.subr.bf16.mxu0 0
    %1829 = vmatpush1.bf16.msra.mxu0 0
    %1830 = vmatprep.subr.bf16.mxu0 0
    %1831 = vmatpush1.bf16.msra.mxu0 0
    %1832 = vmatprep.mubr.bf16.mxu0 0
    %1833 = vmatmul.mubr.bf16.gmra.mrb[0].mxu0 %v1438
    %v1834 = vpop.f32.mrb[0].mxu0
    %v1835 = vadd.f32 %v1722, %v1834
    %v1836 = vpop.f32.mrb[0].mxu0
    %v1837 = vadd.f32 %v1724, %v1836
    %v1838 = vpop.f32.mrb[0].mxu0
    %v1839 = vadd.f32 %v1726, %v1838
    %v1840 = vpop.f32.mrb[0].mxu0
    %v1841 = vadd.f32 %v1728, %v1840
    %1842 = vmatprep.mubr.bf16.mxu0 0
    %1843 = vmatmul.mubr.bf16.gmra.mrb[0].mxu0 %v1441
    %v1844 = vpop.f32.mrb[0].mxu0
    %v1845 = vadd.f32 %v1732, %v1844
    %v1846 = vpop.f32.mrb[0].mxu0
    %v1847 = vadd.f32 %v1734, %v1846
    %v1848 = vpop.f32.mrb[0].mxu0
    %v1849 = vadd.f32 %v1736, %v1848
    %v1850 = vpop.f32.mrb[0].mxu0
    %v1851 = vadd.f32 %v1738, %v1850
    %1852 = vmatprep.mubr.bf16.mxu0 0
    %1853 = vmatmul.mubr.bf16.gmra.mrb[0].mxu0 %v1444
    %v1854 = vpop.f32.mrb[0].mxu0
    %v1855 = vadd.f32 %v1742, %v1854
    %v1856 = vpop.f32.mrb[0].mxu0
    %v1857 = vadd.f32 %v1744, %v1856
    %v1858 = vpop.f32.mrb[0].mxu0
    %v1859 = vadd.f32 %v1746, %v1858
    %v1860 = vpop.f32.mrb[0].mxu0
    %v1861 = vadd.f32 %v1748, %v1860
    %1862 = vmatprep.mubr.bf16.mxu0 0
    %1863 = vmatmul.mubr.bf16.gmra.mrb[0].mxu0 %v1447
    %v1864 = vpop.f32.mrb[0].mxu0
    %v1865 = vadd.f32 %v1752, %v1864
    %v1866 = vpop.f32.mrb[0].mxu0
    %v1867 = vadd.f32 %v1754, %v1866
    %v1868 = vpop.f32.mrb[0].mxu0
    %v1869 = vadd.f32 %v1756, %v1868
    %v1870 = vpop.f32.mrb[0].mxu0
    %v1871 = vadd.f32 %v1758, %v1870
    %1872 = vmatprep.mubr.bf16.mxu0 0
    %1873 = vmatmul.mubr.bf16.gmra.mrb[0].mxu0 %v1450
    %v1874 = vpop.f32.mrb[0].mxu0
    %v1875 = vadd.f32 %v1762, %v1874
    %v1876 = vpop.f32.mrb[0].mxu0
    %v1877 = vadd.f32 %v1764, %v1876
    %v1878 = vpop.f32.mrb[0].mxu0
    %v1879 = vadd.f32 %v1766, %v1878
    %v1880 = vpop.f32.mrb[0].mxu0
    %v1881 = vadd.f32 %v1768, %v1880
    %1882 = vmatprep.mubr.bf16.mxu0 0
    %1883 = vmatmul.mubr.bf16.gmra.mrb[0].mxu0 %v1453
    %v1884 = vpop.f32.mrb[0].mxu0
    %v1885 = vadd.f32 %v1772, %v1884
    %v1886 = vpop.f32.mrb[0].mxu0
    %v1887 = vadd.f32 %v1774, %v1886
    %v1888 = vpop.f32.mrb[0].mxu0
    %v1889 = vadd.f32 %v1776, %v1888
    %v1890 = vpop.f32.mrb[0].mxu0
    %v1891 = vadd.f32 %v1778, %v1890
    %1892 = vmatprep.mubr.bf16.mxu0 0
    %1893 = vmatmul.mubr.bf16.gmra.mrb[0].mxu0 %v1456
    %v1894 = vpop.f32.mrb[0].mxu0
    %v1895 = vadd.f32 %v1782, %v1894
    %v1896 = vpop.f32.mrb[0].mxu0
    %v1897 = vadd.f32 %v1784, %v1896
    %v1898 = vpop.f32.mrb[0].mxu0
    %v1899 = vadd.f32 %v1786, %v1898
    %v1900 = vpop.f32.mrb[0].mxu0
    %v1901 = vadd.f32 %v1788, %v1900
    %1902 = vmatprep.mubr.bf16.mxu0 0
    %1903 = vmatmul.mubr.bf16.gmra.mrb[0].mxu0 %v1459
    %v1904 = vpop.f32.mrb[0].mxu0
    %v1905 = vadd.f32 %v1792, %v1904
    %v1906 = vpop.f32.mrb[0].mxu0
    %v1907 = vadd.f32 %v1794, %v1906
    %v1908 = vpop.f32.mrb[0].mxu0
    %v1909 = vadd.f32 %v1796, %v1908
    %v1910 = vpop.f32.mrb[0].mxu0
    %v1911 = vadd.f32 %v1798, %v1910
    %1912 = vdwg.mxu0
    %1913 = vmatprep.subr.bf16.mxu0 %v1047
    %1914 = vmatpush1.bf16.msra.mxu0 %v1046
    %1915 = vmatprep.subr.bf16.mxu0 %v1051
    %1916 = vmatpush1.bf16.msra.mxu0 %v1050
    %1917 = vmatprep.subr.bf16.mxu0 %v1055
    %1918 = vmatpush1.bf16.msra.mxu0 %v1054
    %1919 = vmatprep.subr.bf16.mxu0 %v1059
    %1920 = vmatpush1.bf16.msra.mxu0 %v1058
    %1921 = vmatprep.subr.bf16.mxu0 %v1063
    %1922 = vmatpush1.bf16.msra.mxu0 %v1062
    %1923 = vmatprep.subr.bf16.mxu0 %v1067
    %1924 = vmatpush1.bf16.msra.mxu0 %v1066
    %1925 = vmatprep.subr.bf16.mxu0 %v1071
    %1926 = vmatpush1.bf16.msra.mxu0 %v1070
    %1927 = vmatprep.subr.bf16.mxu0 %v1075
    %1928 = vmatpush1.bf16.msra.mxu0 %v1074
    %1929 = vmatprep.subr.bf16.mxu0 %v1079
    %1930 = vmatpush1.bf16.msra.mxu0 %v1078
    %1931 = vmatprep.subr.bf16.mxu0 %v1083
    %1932 = vmatpush1.bf16.msra.mxu0 %v1082
    %1933 = vmatprep.subr.bf16.mxu0 %v1087
    %1934 = vmatpush1.bf16.msra.mxu0 %v1086
    %1935 = vmatprep.subr.bf16.mxu0 %v1091
    %1936 = vmatpush1.bf16.msra.mxu0 %v1090
    %1937 = vmatprep.subr.bf16.mxu0 %v1095
    %1938 = vmatpush1.bf16.msra.mxu0 %v1094
    %1939 = vmatprep.subr.bf16.mxu0 %v1099
    %1940 = vmatpush1.bf16.msra.mxu0 %v1098
    %1941 = vmatprep.subr.bf16.mxu0 %v1103
    %1942 = vmatpush1.bf16.msra.mxu0 %v1102
    %1943 = vmatprep.subr.bf16.mxu0 %v1107
    %1944 = vmatpush1.bf16.msra.mxu0 %v1106
    %1945 = vmatprep.mubr.bf16.mxu0 %v183
    %1946 = vmatmul.mubr.bf16.gmra.mrb[0].mxu0 %v182
    %v1947 = vpop.f32.mrb[0].mxu0
    %v1948 = vadd.f32 %v447, %v1947
    %v1949 = vpop.f32.mrb[0].mxu0
    %v1950 = vadd.f32 %v451, %v1949
    %v1951 = vpop.f32.mrb[0].mxu0
    %v1952 = vadd.f32 %v447, %v1951
    %v1953 = vpop.f32.mrb[0].mxu0
    %v1954 = vadd.f32 %v451, %v1953
    %1955 = vmatprep.mubr.bf16.mxu0 %v190
    %1956 = vmatmul.mubr.bf16.gmra.mrb[0].mxu0 %v189
    %v1957 = vpop.f32.mrb[0].mxu0
    %v1958 = vadd.f32 %v447, %v1957
    %v1959 = vpop.f32.mrb[0].mxu0
    %v1960 = vadd.f32 %v451, %v1959
    %v1961 = vpop.f32.mrb[0].mxu0
    %v1962 = vadd.f32 %v447, %v1961
    %v1963 = vpop.f32.mrb[0].mxu0
    %v1964 = vadd.f32 %v451, %v1963
    %1965 = vmatprep.mubr.bf16.mxu0 %v197
    %1966 = vmatmul.mubr.bf16.gmra.mrb[0].mxu0 %v196
    %v1967 = vpop.f32.mrb[0].mxu0
    %v1968 = vadd.f32 %v447, %v1967
    %v1969 = vpop.f32.mrb[0].mxu0
    %v1970 = vadd.f32 %v451, %v1969
    %v1971 = vpop.f32.mrb[0].mxu0
    %v1972 = vadd.f32 %v447, %v1971
    %v1973 = vpop.f32.mrb[0].mxu0
    %v1974 = vadd.f32 %v451, %v1973
    %1975 = vmatprep.mubr.bf16.mxu0 %v204
    %1976 = vmatmul.mubr.bf16.gmra.mrb[0].mxu0 %v203
    %v1977 = vpop.f32.mrb[0].mxu0
    %v1978 = vadd.f32 %v447, %v1977
    %v1979 = vpop.f32.mrb[0].mxu0
    %v1980 = vadd.f32 %v451, %v1979
    %v1981 = vpop.f32.mrb[0].mxu0
    %v1982 = vadd.f32 %v447, %v1981
    %v1983 = vpop.f32.mrb[0].mxu0
    %v1984 = vadd.f32 %v451, %v1983
    %1985 = vmatprep.mubr.bf16.mxu0 %v211
    %1986 = vmatmul.mubr.bf16.gmra.mrb[0].mxu0 %v210
    %v1987 = vpop.f32.mrb[0].mxu0
    %v1988 = vadd.f32 %v447, %v1987
    %v1989 = vpop.f32.mrb[0].mxu0
    %v1990 = vadd.f32 %v451, %v1989
    %v1991 = vpop.f32.mrb[0].mxu0
    %v1992 = vadd.f32 %v447, %v1991
    %v1993 = vpop.f32.mrb[0].mxu0
    %v1994 = vadd.f32 %v451, %v1993
    %1995 = vmatprep.mubr.bf16.mxu0 %v218
    %1996 = vmatmul.mubr.bf16.gmra.mrb[0].mxu0 %v217
    %v1997 = vpop.f32.mrb[0].mxu0
    %v1998 = vadd.f32 %v447, %v1997
    %v1999 = vpop.f32.mrb[0].mxu0
    %v2000 = vadd.f32 %v451, %v1999
    %v2001 = vpop.f32.mrb[0].mxu0
    %v2002 = vadd.f32 %v447, %v2001
    %v2003 = vpop.f32.mrb[0].mxu0
    %v2004 = vadd.f32 %v451, %v2003
    %2005 = vmatprep.mubr.bf16.mxu0 %v225
    %2006 = vmatmul.mubr.bf16.gmra.mrb[0].mxu0 %v224
    %v2007 = vpop.f32.mrb[0].mxu0
    %v2008 = vadd.f32 %v447, %v2007
    %v2009 = vpop.f32.mrb[0].mxu0
    %v2010 = vadd.f32 %v451, %v2009
    %v2011 = vpop.f32.mrb[0].mxu0
    %v2012 = vadd.f32 %v447, %v2011
    %v2013 = vpop.f32.mrb[0].mxu0
    %v2014 = vadd.f32 %v451, %v2013
    %2015 = vmatprep.mubr.bf16.mxu0 %v232
    %2016 = vmatmul.mubr.bf16.gmra.mrb[0].mxu0 %v231
    %v2017 = vpop.f32.mrb[0].mxu0
    %v2018 = vadd.f32 %v447, %v2017
    %v2019 = vpop.f32.mrb[0].mxu0
    %v2020 = vadd.f32 %v451, %v2019
    %v2021 = vpop.f32.mrb[0].mxu0
    %v2022 = vadd.f32 %v447, %v2021
    %v2023 = vpop.f32.mrb[0].mxu0
    %v2024 = vadd.f32 %v451, %v2023
    %2025 = vdwg.mxu0
    %2026 = vmatprep.subr.bf16.mxu0 %v1111
    %2027 = vmatpush1.bf16.msra.mxu0 %v1110
    %2028 = vmatprep.subr.bf16.mxu0 %v1115
    %2029 = vmatpush1.bf16.msra.mxu0 %v1114
    %2030 = vmatprep.subr.bf16.mxu0 %v1119
    %2031 = vmatpush1.bf16.msra.mxu0 %v1118
    %2032 = vmatprep.subr.bf16.mxu0 %v1123
    %2033 = vmatpush1.bf16.msra.mxu0 %v1122
    %2034 = vmatprep.subr.bf16.mxu0 %v1127
    %2035 = vmatpush1.bf16.msra.mxu0 %v1126
    %2036 = vmatprep.subr.bf16.mxu0 %v1131
    %2037 = vmatpush1.bf16.msra.mxu0 %v1130
    %2038 = vmatprep.subr.bf16.mxu0 %v1135
    %2039 = vmatpush1.bf16.msra.mxu0 %v1134
    %2040 = vmatprep.subr.bf16.mxu0 %v1139
    %2041 = vmatpush1.bf16.msra.mxu0 %v1138
    %2042 = vmatprep.subr.bf16.mxu0 %v1143
    %2043 = vmatpush1.bf16.msra.mxu0 %v1142
    %2044 = vmatprep.subr.bf16.mxu0 %v1147
    %2045 = vmatpush1.bf16.msra.mxu0 %v1146
    %2046 = vmatprep.subr.bf16.mxu0 %v1151
    %2047 = vmatpush1.bf16.msra.mxu0 %v1150
    %2048 = vmatprep.subr.bf16.mxu0 %v1155
    %2049 = vmatpush1.bf16.msra.mxu0 %v1154
    %2050 = vmatprep.subr.bf16.mxu0 %v1159
    %2051 = vmatpush1.bf16.msra.mxu0 %v1158
    %2052 = vmatprep.subr.bf16.mxu0 %v1163
    %2053 = vmatpush1.bf16.msra.mxu0 %v1162
    %2054 = vmatprep.subr.bf16.mxu0 %v1167
    %2055 = vmatpush1.bf16.msra.mxu0 %v1166
    %2056 = vmatprep.subr.bf16.mxu0 %v1171
    %2057 = vmatpush1.bf16.msra.mxu0 %v1170
    %2058 = vmatprep.mubr.bf16.mxu0 %v185
    %2059 = vmatmul.mubr.bf16.gmra.mrb[0].mxu0 %v184
    %v2060 = vpop.f32.mrb[0].mxu0
    %v2061 = vadd.f32 %v1948, %v2060
    %v2062 = vpop.f32.mrb[0].mxu0
    %v2063 = vadd.f32 %v1950, %v2062
    %v2064 = vpop.f32.mrb[0].mxu0
    %v2065 = vadd.f32 %v1952, %v2064
    %v2066 = vpop.f32.mrb[0].mxu0
    %v2067 = vadd.f32 %v1954, %v2066
    %2068 = vmatprep.mubr.bf16.mxu0 %v192
    %2069 = vmatmul.mubr.bf16.gmra.mrb[0].mxu0 %v191
    %v2070 = vpop.f32.mrb[0].mxu0
    %v2071 = vadd.f32 %v1958, %v2070
    %v2072 = vpop.f32.mrb[0].mxu0
    %v2073 = vadd.f32 %v1960, %v2072
    %v2074 = vpop.f32.mrb[0].mxu0
    %v2075 = vadd.f32 %v1962, %v2074
    %v2076 = vpop.f32.mrb[0].mxu0
    %v2077 = vadd.f32 %v1964, %v2076
    %2078 = vmatprep.mubr.bf16.mxu0 %v199
    %2079 = vmatmul.mubr.bf16.gmra.mrb[0].mxu0 %v198
    %v2080 = vpop.f32.mrb[0].mxu0
    %v2081 = vadd.f32 %v1968, %v2080
    %v2082 = vpop.f32.mrb[0].mxu0
    %v2083 = vadd.f32 %v1970, %v2082
    %v2084 = vpop.f32.mrb[0].mxu0
    %v2085 = vadd.f32 %v1972, %v2084
    %v2086 = vpop.f32.mrb[0].mxu0
    %v2087 = vadd.f32 %v1974, %v2086
    %2088 = vmatprep.mubr.bf16.mxu0 %v206
    %2089 = vmatmul.mubr.bf16.gmra.mrb[0].mxu0 %v205
    %v2090 = vpop.f32.mrb[0].mxu0
    %v2091 = vadd.f32 %v1978, %v2090
    %v2092 = vpop.f32.mrb[0].mxu0
    %v2093 = vadd.f32 %v1980, %v2092
    %v2094 = vpop.f32.mrb[0].mxu0
    %v2095 = vadd.f32 %v1982, %v2094
    %v2096 = vpop.f32.mrb[0].mxu0
    %v2097 = vadd.f32 %v1984, %v2096
    %2098 = vmatprep.mubr.bf16.mxu0 %v213
    %2099 = vmatmul.mubr.bf16.gmra.mrb[0].mxu0 %v212
    %v2100 = vpop.f32.mrb[0].mxu0
    %v2101 = vadd.f32 %v1988, %v2100
    %v2102 = vpop.f32.mrb[0].mxu0
    %v2103 = vadd.f32 %v1990, %v2102
    %v2104 = vpop.f32.mrb[0].mxu0
    %v2105 = vadd.f32 %v1992, %v2104
    %v2106 = vpop.f32.mrb[0].mxu0
    %v2107 = vadd.f32 %v1994, %v2106
    %2108 = vmatprep.mubr.bf16.mxu0 %v220
    %2109 = vmatmul.mubr.bf16.gmra.mrb[0].mxu0 %v219
    %v2110 = vpop.f32.mrb[0].mxu0
    %v2111 = vadd.f32 %v1998, %v2110
    %v2112 = vpop.f32.mrb[0].mxu0
    %v2113 = vadd.f32 %v2000, %v2112
    %v2114 = vpop.f32.mrb[0].mxu0
    %v2115 = vadd.f32 %v2002, %v2114
    %v2116 = vpop.f32.mrb[0].mxu0
    %v2117 = vadd.f32 %v2004, %v2116
    %2118 = vmatprep.mubr.bf16.mxu0 %v227
    %2119 = vmatmul.mubr.bf16.gmra.mrb[0].mxu0 %v226
    %v2120 = vpop.f32.mrb[0].mxu0
    %v2121 = vadd.f32 %v2008, %v2120
    %v2122 = vpop.f32.mrb[0].mxu0
    %v2123 = vadd.f32 %v2010, %v2122
    %v2124 = vpop.f32.mrb[0].mxu0
    %v2125 = vadd.f32 %v2012, %v2124
    %v2126 = vpop.f32.mrb[0].mxu0
    %v2127 = vadd.f32 %v2014, %v2126
    %2128 = vmatprep.mubr.bf16.mxu0 %v234
    %2129 = vmatmul.mubr.bf16.gmra.mrb[0].mxu0 %v233
    %v2130 = vpop.f32.mrb[0].mxu0
    %v2131 = vadd.f32 %v2018, %v2130
    %v2132 = vpop.f32.mrb[0].mxu0
    %v2133 = vadd.f32 %v2020, %v2132
    %v2134 = vpop.f32.mrb[0].mxu0
    %v2135 = vadd.f32 %v2022, %v2134
    %v2136 = vpop.f32.mrb[0].mxu0
    %v2137 = vadd.f32 %v2024, %v2136
    %2138 = vdwg.mxu0
    %2139 = vmatprep.subr.bf16.mxu0 %v1175
    %2140 = vmatpush1.bf16.msra.mxu0 %v1174
    %2141 = vmatprep.subr.bf16.mxu0 %v1179
    %2142 = vmatpush1.bf16.msra.mxu0 %v1178
    %2143 = vmatprep.subr.bf16.mxu0 %v1183
    %2144 = vmatpush1.bf16.msra.mxu0 %v1182
    %2145 = vmatprep.subr.bf16.mxu0 %v1187
    %2146 = vmatpush1.bf16.msra.mxu0 %v1186
    %2147 = vmatprep.subr.bf16.mxu0 %v1191
    %2148 = vmatpush1.bf16.msra.mxu0 %v1190
    %2149 = vmatprep.subr.bf16.mxu0 %v1195
    %2150 = vmatpush1.bf16.msra.mxu0 %v1194
    %2151 = vmatprep.subr.bf16.mxu0 %v1199
    %2152 = vmatpush1.bf16.msra.mxu0 %v1198
    %2153 = vmatprep.subr.bf16.mxu0 %v1203
    %2154 = vmatpush1.bf16.msra.mxu0 %v1202
    %2155 = vmatprep.subr.bf16.mxu0 %v1207
    %2156 = vmatpush1.bf16.msra.mxu0 %v1206
    %2157 = vmatprep.subr.bf16.mxu0 %v1211
    %2158 = vmatpush1.bf16.msra.mxu0 %v1210
    %2159 = vmatprep.subr.bf16.mxu0 %v1215
    %2160 = vmatpush1.bf16.msra.mxu0 %v1214
    %2161 = vmatprep.subr.bf16.mxu0 %v1219
    %2162 = vmatpush1.bf16.msra.mxu0 %v1218
    %2163 = vmatprep.subr.bf16.mxu0 %v1223
    %2164 = vmatpush1.bf16.msra.mxu0 %v1222
    %2165 = vmatprep.subr.bf16.mxu0 %v1227
    %2166 = vmatpush1.bf16.msra.mxu0 %v1226
    %2167 = vmatprep.subr.bf16.mxu0 %v1231
    %2168 = vmatpush1.bf16.msra.mxu0 %v1230
    %2169 = vmatprep.subr.bf16.mxu0 %v1235
    %2170 = vmatpush1.bf16.msra.mxu0 %v1234
    %2171 = vmatprep.mubr.bf16.mxu0 %v187
    %2172 = vmatmul.mubr.bf16.gmra.mrb[0].mxu0 %v186
    %v2173 = vpop.f32.mrb[0].mxu0
    %v2174 = vadd.f32 %v2061, %v2173
    %v2175 = vpop.f32.mrb[0].mxu0
    %v2176 = vadd.f32 %v2063, %v2175
    %v2177 = vpop.f32.mrb[0].mxu0
    %v2178 = vadd.f32 %v2065, %v2177
    %v2179 = vpop.f32.mrb[0].mxu0
    %v2180 = vadd.f32 %v2067, %v2179
    %2181 = vmatprep.mubr.bf16.mxu0 %v194
    %2182 = vmatmul.mubr.bf16.gmra.mrb[0].mxu0 %v193
    %v2183 = vpop.f32.mrb[0].mxu0
    %v2184 = vadd.f32 %v2071, %v2183
    %v2185 = vpop.f32.mrb[0].mxu0
    %v2186 = vadd.f32 %v2073, %v2185
    %v2187 = vpop.f32.mrb[0].mxu0
    %v2188 = vadd.f32 %v2075, %v2187
    %v2189 = vpop.f32.mrb[0].mxu0
    %v2190 = vadd.f32 %v2077, %v2189
    %2191 = vmatprep.mubr.bf16.mxu0 %v201
    %2192 = vmatmul.mubr.bf16.gmra.mrb[0].mxu0 %v200
    %v2193 = vpop.f32.mrb[0].mxu0
    %v2194 = vadd.f32 %v2081, %v2193
    %v2195 = vpop.f32.mrb[0].mxu0
    %v2196 = vadd.f32 %v2083, %v2195
    %v2197 = vpop.f32.mrb[0].mxu0
    %v2198 = vadd.f32 %v2085, %v2197
    %v2199 = vpop.f32.mrb[0].mxu0
    %v2200 = vadd.f32 %v2087, %v2199
    %2201 = vmatprep.mubr.bf16.mxu0 %v208
    %2202 = vmatmul.mubr.bf16.gmra.mrb[0].mxu0 %v207
    %v2203 = vpop.f32.mrb[0].mxu0
    %v2204 = vadd.f32 %v2091, %v2203
    %v2205 = vpop.f32.mrb[0].mxu0
    %v2206 = vadd.f32 %v2093, %v2205
    %v2207 = vpop.f32.mrb[0].mxu0
    %v2208 = vadd.f32 %v2095, %v2207
    %v2209 = vpop.f32.mrb[0].mxu0
    %v2210 = vadd.f32 %v2097, %v2209
    %2211 = vmatprep.mubr.bf16.mxu0 %v215
    %2212 = vmatmul.mubr.bf16.gmra.mrb[0].mxu0 %v214
    %v2213 = vpop.f32.mrb[0].mxu0
    %v2214 = vadd.f32 %v2101, %v2213
    %v2215 = vpop.f32.mrb[0].mxu0
    %v2216 = vadd.f32 %v2103, %v2215
    %v2217 = vpop.f32.mrb[0].mxu0
    %v2218 = vadd.f32 %v2105, %v2217
    %v2219 = vpop.f32.mrb[0].mxu0
    %v2220 = vadd.f32 %v2107, %v2219
    %2221 = vmatprep.mubr.bf16.mxu0 %v222
    %2222 = vmatmul.mubr.bf16.gmra.mrb[0].mxu0 %v221
    %v2223 = vpop.f32.mrb[0].mxu0
    %v2224 = vadd.f32 %v2111, %v2223
    %v2225 = vpop.f32.mrb[0].mxu0
    %v2226 = vadd.f32 %v2113, %v2225
    %v2227 = vpop.f32.mrb[0].mxu0
    %v2228 = vadd.f32 %v2115, %v2227
    %v2229 = vpop.f32.mrb[0].mxu0
    %v2230 = vadd.f32 %v2117, %v2229
    %2231 = vmatprep.mubr.bf16.mxu0 %v229
    %2232 = vmatmul.mubr.bf16.gmra.mrb[0].mxu0 %v228
    %v2233 = vpop.f32.mrb[0].mxu0
    %v2234 = vadd.f32 %v2121, %v2233
    %v2235 = vpop.f32.mrb[0].mxu0
    %v2236 = vadd.f32 %v2123, %v2235
    %v2237 = vpop.f32.mrb[0].mxu0
    %v2238 = vadd.f32 %v2125, %v2237
    %v2239 = vpop.f32.mrb[0].mxu0
    %v2240 = vadd.f32 %v2127, %v2239
    %2241 = vmatprep.mubr.bf16.mxu0 %v236
    %2242 = vmatmul.mubr.bf16.gmra.mrb[0].mxu0 %v235
    %v2243 = vpop.f32.mrb[0].mxu0
    %v2244 = vadd.f32 %v2131, %v2243
    %v2245 = vpop.f32.mrb[0].mxu0
    %v2246 = vadd.f32 %v2133, %v2245
    %v2247 = vpop.f32.mrb[0].mxu0
    %v2248 = vadd.f32 %v2135, %v2247
    %v2249 = vpop.f32.mrb[0].mxu0
    %v2250 = vadd.f32 %v2137, %v2249
    %2251 = vdwg.mxu0
    %2252 = vmatprep.subr.bf16.mxu0 %v1239
    %2253 = vmatpush1.bf16.msra.mxu0 %v1238
    %2254 = vmatprep.subr.bf16.mxu0 0
    %2255 = vmatpush1.bf16.msra.mxu0 0
    %2256 = vmatprep.subr.bf16.mxu0 0
    %2257 = vmatpush1.bf16.msra.mxu0 0
    %2258 = vmatprep.subr.bf16.mxu0 0
    %2259 = vmatpush1.bf16.msra.mxu0 0
    %2260 = vmatprep.subr.bf16.mxu0 0
    %2261 = vmatpush1.bf16.msra.mxu0 0
    %2262 = vmatprep.subr.bf16.mxu0 0
    %2263 = vmatpush1.bf16.msra.mxu0 0
    %2264 = vmatprep.subr.bf16.mxu0 0
    %2265 = vmatpush1.bf16.msra.mxu0 0
    %2266 = vmatprep.subr.bf16.mxu0 0
    %2267 = vmatpush1.bf16.msra.mxu0 0
    %2268 = vmatprep.subr.bf16.mxu0 0
    %2269 = vmatpush1.bf16.msra.mxu0 0
    %2270 = vmatprep.subr.bf16.mxu0 0
    %2271 = vmatpush1.bf16.msra.mxu0 0
    %2272 = vmatprep.subr.bf16.mxu0 0
    %2273 = vmatpush1.bf16.msra.mxu0 0
    %2274 = vmatprep.subr.bf16.mxu0 0
    %2275 = vmatpush1.bf16.msra.mxu0 0
    %2276 = vmatprep.subr.bf16.mxu0 0
    %2277 = vmatpush1.bf16.msra.mxu0 0
    %2278 = vmatprep.subr.bf16.mxu0 0
    %2279 = vmatpush1.bf16.msra.mxu0 0
    %2280 = vmatprep.subr.bf16.mxu0 0
    %2281 = vmatpush1.bf16.msra.mxu0 0
    %2282 = vmatprep.subr.bf16.mxu0 0
    %2283 = vmatpush1.bf16.msra.mxu0 0
    %2284 = vmatprep.mubr.bf16.mxu0 0
    %2285 = vmatmul.mubr.bf16.gmra.mrb[0].mxu0 %v1438
    %v2286 = vpop.f32.mrb[0].mxu0
    %v2287 = vadd.f32 %v2174, %v2286
    %v2288 = vpop.f32.mrb[0].mxu0
    %v2289 = vadd.f32 %v2176, %v2288
    %v2290 = vpop.f32.mrb[0].mxu0
    %v2291 = vadd.f32 %v2178, %v2290
    %v2292 = vpop.f32.mrb[0].mxu0
    %v2293 = vadd.f32 %v2180, %v2292
    %2294 = vmatprep.mubr.bf16.mxu0 0
    %2295 = vmatmul.mubr.bf16.gmra.mrb[0].mxu0 %v1441
    %v2296 = vpop.f32.mrb[0].mxu0
    %v2297 = vadd.f32 %v2184, %v2296
    %v2298 = vpop.f32.mrb[0].mxu0
    %v2299 = vadd.f32 %v2186, %v2298
    %v2300 = vpop.f32.mrb[0].mxu0
    %v2301 = vadd.f32 %v2188, %v2300
    %v2302 = vpop.f32.mrb[0].mxu0
    %v2303 = vadd.f32 %v2190, %v2302
    %2304 = vmatprep.mubr.bf16.mxu0 0
    %2305 = vmatmul.mubr.bf16.gmra.mrb[0].mxu0 %v1444
    %v2306 = vpop.f32.mrb[0].mxu0
    %v2307 = vadd.f32 %v2194, %v2306
    %v2308 = vpop.f32.mrb[0].mxu0
    %v2309 = vadd.f32 %v2196, %v2308
    %v2310 = vpop.f32.mrb[0].mxu0
    %v2311 = vadd.f32 %v2198, %v2310
    %v2312 = vpop.f32.mrb[0].mxu0
    %v2313 = vadd.f32 %v2200, %v2312
    %2314 = vmatprep.mubr.bf16.mxu0 0
    %2315 = vmatmul.mubr.bf16.gmra.mrb[0].mxu0 %v1447
    %v2316 = vpop.f32.mrb[0].mxu0
    %v2317 = vadd.f32 %v2204, %v2316
    %v2318 = vpop.f32.mrb[0].mxu0
    %v2319 = vadd.f32 %v2206, %v2318
    %v2320 = vpop.f32.mrb[0].mxu0
    %v2321 = vadd.f32 %v2208, %v2320
    %v2322 = vpop.f32.mrb[0].mxu0
    %v2323 = vadd.f32 %v2210, %v2322
    %2324 = vmatprep.mubr.bf16.mxu0 0
    %2325 = vmatmul.mubr.bf16.gmra.mrb[0].mxu0 %v1450
    %v2326 = vpop.f32.mrb[0].mxu0
    %v2327 = vadd.f32 %v2214, %v2326
    %v2328 = vpop.f32.mrb[0].mxu0
    %v2329 = vadd.f32 %v2216, %v2328
    %v2330 = vpop.f32.mrb[0].mxu0
    %v2331 = vadd.f32 %v2218, %v2330
    %v2332 = vpop.f32.mrb[0].mxu0
    %v2333 = vadd.f32 %v2220, %v2332
    %2334 = vmatprep.mubr.bf16.mxu0 0
    %2335 = vmatmul.mubr.bf16.gmra.mrb[0].mxu0 %v1453
    %v2336 = vpop.f32.mrb[0].mxu0
    %v2337 = vadd.f32 %v2224, %v2336
    %v2338 = vpop.f32.mrb[0].mxu0
    %v2339 = vadd.f32 %v2226, %v2338
    %v2340 = vpop.f32.mrb[0].mxu0
    %v2341 = vadd.f32 %v2228, %v2340
    %v2342 = vpop.f32.mrb[0].mxu0
    %v2343 = vadd.f32 %v2230, %v2342
    %2344 = vmatprep.mubr.bf16.mxu0 0
    %2345 = vmatmul.mubr.bf16.gmra.mrb[0].mxu0 %v1456
    %v2346 = vpop.f32.mrb[0].mxu0
    %v2347 = vadd.f32 %v2234, %v2346
    %v2348 = vpop.f32.mrb[0].mxu0
    %v2349 = vadd.f32 %v2236, %v2348
    %v2350 = vpop.f32.mrb[0].mxu0
    %v2351 = vadd.f32 %v2238, %v2350
    %v2352 = vpop.f32.mrb[0].mxu0
    %v2353 = vadd.f32 %v2240, %v2352
    %2354 = vmatprep.mubr.bf16.mxu0 0
    %2355 = vmatmul.mubr.bf16.gmra.mrb[0].mxu0 %v1459
    %v2356 = vpop.f32.mrb[0].mxu0
    %v2357 = vadd.f32 %v2244, %v2356
    %v2358 = vpop.f32.mrb[0].mxu0
    %v2359 = vadd.f32 %v2246, %v2358
    %v2360 = vpop.f32.mrb[0].mxu0
    %v2361 = vadd.f32 %v2248, %v2360
    %v2362 = vpop.f32.mrb[0].mxu0
    %v2363 = vadd.f32 %v2250, %v2362
    %2364 = vdwg.mxu0
    %v2365 = vmul.f32 %v1835, 0.2
    %v2366 = vmul.f32 %v1837, 0.2
    %v2367 = vmul.f32 %v2287, 0.2
    %v2368 = vmul.f32 %v2289, 0.2
    %v2369 = vmul.f32 %v1839, 0.2
    %v2370 = vmul.f32 %v1841, 0.2
    %v2371 = vmul.f32 %v2291, 0.2
    %v2372 = vmul.f32 %v2293, 0.2
    %v2373 = vmul.f32 %v1845, 0.2
    %v2374 = vmul.f32 %v1847, 0.2
    %v2375 = vmul.f32 %v2297, 0.2
    %v2376 = vmul.f32 %v2299, 0.2
    %v2377 = vmul.f32 %v1849, 0.2
    %v2378 = vmul.f32 %v1851, 0.2
    %v2379 = vmul.f32 %v2301, 0.2
    %v2380 = vmul.f32 %v2303, 0.2
    %v2381 = vmul.f32 %v1855, 0.2
    %v2382 = vmul.f32 %v1857, 0.2
    %v2383 = vmul.f32 %v2307, 0.2
    %v2384 = vmul.f32 %v2309, 0.2
    %v2385 = vmul.f32 %v1859, 0.2
    %v2386 = vmul.f32 %v1861, 0.2
    %v2387 = vmul.f32 %v2311, 0.2
    %v2388 = vmul.f32 %v2313, 0.2
    %v2389 = vmul.f32 %v1865, 0.2
    %v2390 = vmul.f32 %v1867, 0.2
    %v2391 = vmul.f32 %v2317, 0.2
    %v2392 = vmul.f32 %v2319, 0.2
    %v2393 = vmul.f32 %v1869, 0.2
    %v2394 = vmul.f32 %v1871, 0.2
    %v2395 = vmul.f32 %v2321, 0.2
    %v2396 = vmul.f32 %v2323, 0.2
    %v2397 = vmul.f32 %v1875, 0.2
    %v2398 = vmul.f32 %v1877, 0.2
    %v2399 = vmul.f32 %v2327, 0.2
    %v2400 = vmul.f32 %v2329, 0.2
    %v2401 = vmul.f32 %v1879, 0.2
    %v2402 = vmul.f32 %v1881, 0.2
    %v2403 = vmul.f32 %v2331, 0.2
    %v2404 = vmul.f32 %v2333, 0.2
    %v2405 = vmul.f32 %v1885, 0.2
    %v2406 = vmul.f32 %v1887, 0.2
    %v2407 = vmul.f32 %v2337, 0.2
    %v2408 = vmul.f32 %v2339, 0.2
    %v2409 = vmul.f32 %v1889, 0.2
    %v2410 = vmul.f32 %v1891, 0.2
    %v2411 = vmul.f32 %v2341, 0.2
    %v2412 = vmul.f32 %v2343, 0.2
    %v2413 = vmul.f32 %v1895, 0.2
    %v2414 = vmul.f32 %v1897, 0.2
    %v2415 = vmul.f32 %v2347, 0.2
    %v2416 = vmul.f32 %v2349, 0.2
    %v2417 = vmul.f32 %v1899, 0.2
    %v2418 = vmul.f32 %v1901, 0.2
    %v2419 = vmul.f32 %v2351, 0.2
    %v2420 = vmul.f32 %v2353, 0.2
    %v2421 = vmul.f32 %v1905, 0.2
    %v2422 = vmul.f32 %v1907, 0.2
    %v2423 = vmul.f32 %v2357, 0.2
    %v2424 = vmul.f32 %v2359, 0.2
    %v2425 = vmul.f32 %v1909, 0.2
    %v2426 = vmul.f32 %v1911, 0.2
    %v2427 = vmul.f32 %v2361, 0.2
    %v2428 = vmul.f32 %v2363, 0.2
    %v2429 = vmax.f32 %v1835, %v2365
    %v2430 = vmax.f32 %v1837, %v2366
    %v2431 = vmax.f32 %v2287, %v2367
    %v2432 = vmax.f32 %v2289, %v2368
    %v2433 = vmax.f32 %v1839, %v2369
    %v2434 = vmax.f32 %v1841, %v2370
    %v2435 = vmax.f32 %v2291, %v2371
    %v2436 = vmax.f32 %v2293, %v2372
    %v2437 = vmax.f32 %v1845, %v2373
    %v2438 = vmax.f32 %v1847, %v2374
    %v2439 = vmax.f32 %v2297, %v2375
    %v2440 = vmax.f32 %v2299, %v2376
    %v2441 = vmax.f32 %v1849, %v2377
    %v2442 = vmax.f32 %v1851, %v2378
    %v2443 = vmax.f32 %v2301, %v2379
    %v2444 = vmax.f32 %v2303, %v2380
    %v2445 = vmax.f32 %v1855, %v2381
    %v2446 = vmax.f32 %v1857, %v2382
    %v2447 = vmax.f32 %v2307, %v2383
    %v2448 = vmax.f32 %v2309, %v2384
    %v2449 = vmax.f32 %v1859, %v2385
    %v2450 = vmax.f32 %v1861, %v2386
    %v2451 = vmax.f32 %v2311, %v2387
    %v2452 = vmax.f32 %v2313, %v2388
    %v2453 = vmax.f32 %v1865, %v2389
    %v2454 = vmax.f32 %v1867, %v2390
    %v2455 = vmax.f32 %v2317, %v2391
    %v2456 = vmax.f32 %v2319, %v2392
    %v2457 = vmax.f32 %v1869, %v2393
    %v2458 = vmax.f32 %v1871, %v2394
    %v2459 = vmax.f32 %v2321, %v2395
    %v2460 = vmax.f32 %v2323, %v2396
    %v2461 = vmax.f32 %v1875, %v2397
    %v2462 = vmax.f32 %v1877, %v2398
    %v2463 = vmax.f32 %v2327, %v2399
    %v2464 = vmax.f32 %v2329, %v2400
    %v2465 = vmax.f32 %v1879, %v2401
    %v2466 = vmax.f32 %v1881, %v2402
    %v2467 = vmax.f32 %v2331, %v2403
    %v2468 = vmax.f32 %v2333, %v2404
    %v2469 = vmax.f32 %v1885, %v2405
    %v2470 = vmax.f32 %v1887, %v2406
    %v2471 = vmax.f32 %v2337, %v2407
    %v2472 = vmax.f32 %v2339, %v2408
    %v2473 = vmax.f32 %v1889, %v2409
    %v2474 = vmax.f32 %v1891, %v2410
    %v2475 = vmax.f32 %v2341, %v2411
    %v2476 = vmax.f32 %v2343, %v2412
    %v2477 = vmax.f32 %v1895, %v2413
    %v2478 = vmax.f32 %v1897, %v2414
    %v2479 = vmax.f32 %v2347, %v2415
    %v2480 = vmax.f32 %v2349, %v2416
    %v2481 = vmax.f32 %v1899, %v2417
    %v2482 = vmax.f32 %v1901, %v2418
    %v2483 = vmax.f32 %v2351, %v2419
    %v2484 = vmax.f32 %v2353, %v2420
    %v2485 = vmax.f32 %v1905, %v2421
    %v2486 = vmax.f32 %v1907, %v2422
    %v2487 = vmax.f32 %v2357, %v2423
    %v2488 = vmax.f32 %v2359, %v2424
    %v2489 = vmax.f32 %v1909, %v2425
    %v2490 = vmax.f32 %v1911, %v2426
    %v2491 = vmax.f32 %v2361, %v2427
    %v2492 = vmax.f32 %v2363, %v2428
    %v2493 = vpack.c.bf16 %v2433, %v2429
    %v2494 = vpack.c.bf16 %v2434, %v2430
    %v2495 = vpack.c.bf16 %v2435, %v2431
    %v2496 = vpack.c.bf16 %v2436, %v2432
    %v2497 = vpack.c.bf16 %v2441, %v2437
    %v2498 = vpack.c.bf16 %v2442, %v2438
    %v2499 = vpack.c.bf16 %v2443, %v2439
    %v2500 = vpack.c.bf16 %v2444, %v2440
    %v2501 = vpack.c.bf16 %v2449, %v2445
    %v2502 = vpack.c.bf16 %v2450, %v2446
    %v2503 = vpack.c.bf16 %v2451, %v2447
    %v2504 = vpack.c.bf16 %v2452, %v2448
    %v2505 = vpack.c.bf16 %v2457, %v2453
    %v2506 = vpack.c.bf16 %v2458, %v2454
    %v2507 = vpack.c.bf16 %v2459, %v2455
    %v2508 = vpack.c.bf16 %v2460, %v2456
    %v2509 = vpack.c.bf16 %v2465, %v2461
    %v2510 = vpack.c.bf16 %v2466, %v2462
    %v2511 = vpack.c.bf16 %v2467, %v2463
    %v2512 = vpack.c.bf16 %v2468, %v2464
    %v2513 = vpack.c.bf16 %v2473, %v2469
    %v2514 = vpack.c.bf16 %v2474, %v2470
    %v2515 = vpack.c.bf16 %v2475, %v2471
    %v2516 = vpack.c.bf16 %v2476, %v2472
    %v2517 = vpack.c.bf16 %v2481, %v2477
    %v2518 = vpack.c.bf16 %v2482, %v2478
    %v2519 = vpack.c.bf16 %v2483, %v2479
    %v2520 = vpack.c.bf16 %v2484, %v2480
    %v2521 = vpack.c.bf16 %v2489, %v2485
    %v2522 = vpack.c.bf16 %v2490, %v2486
    %v2523 = vpack.c.bf16 %v2491, %v2487
    %v2524 = vpack.c.bf16 %v2492, %v2488
    %v2525 = vld [vmem:[#allocation7] sm:$0xff]
    %v2526 = vld [vmem:[#allocation7 + $0x8] sm:$0xff]
    %v2527 = vld [vmem:[#allocation7 + $0x10] sm:$0xff]
    %v2528 = vld [vmem:[#allocation7 + $0x18] sm:$0xff]
    %v2529 = vld [vmem:[#allocation7 + $0x20] sm:$0xff]
    %v2530 = vld [vmem:[#allocation7 + $0x28] sm:$0xff]
    %v2531 = vld [vmem:[#allocation7 + $0x30] sm:$0xff]
    %v2532 = vld [vmem:[#allocation7 + $0x38] sm:$0xff]
    %v2533 = vld [vmem:[#allocation7 + $0x40] sm:$0xff]
    %v2534 = vld [vmem:[#allocation7 + $0x48] sm:$0xff]
    %v2535 = vld [vmem:[#allocation7 + $0x50] sm:$0xff]
    %v2536 = vld [vmem:[#allocation7 + $0x58] sm:$0xff]
    %v2537 = vld [vmem:[#allocation7 + $0x60] sm:$0xff]
    %v2538 = vld [vmem:[#allocation7 + $0x68] sm:$0xff]
    %v2539 = vld [vmem:[#allocation7 + $0x70] sm:$0xff]
    %v2540 = vld [vmem:[#allocation7 + $0x78] sm:$0xff]
    %v2541 = vld [vmem:[#allocation7 + $0x80] sm:$0xff]
    %v2542 = vld [vmem:[#allocation7 + $0x88] sm:$0xff]
    %v2543 = vld [vmem:[#allocation7 + $0x90] sm:$0xff]
    %v2544 = vld [vmem:[#allocation7 + $0x98] sm:$0xff]
    %v2545 = vld [vmem:[#allocation7 + $0xa0] sm:$0xff]
    %v2546 = vld [vmem:[#allocation7 + $0xa8] sm:$0xff]
    %v2547 = vld [vmem:[#allocation7 + $0xb0] sm:$0xff]
    %v2548 = vld [vmem:[#allocation7 + $0xb8] sm:$0xff]
    %v2549 = vld [vmem:[#allocation7 + $0xc0] sm:$0xff]
    %v2550 = vld [vmem:[#allocation7 + $0xc8] sm:$0xff]
    %v2551 = vld [vmem:[#allocation7 + $0xd0] sm:$0xff]
    %v2552 = vld [vmem:[#allocation7 + $0xd8] sm:$0xff]
    %v2553 = vld [vmem:[#allocation7 + $0xe0] sm:$0xff]
    %v2554 = vld [vmem:[#allocation7 + $0xe8] sm:$0xff]
    %v2555 = vld [vmem:[#allocation7 + $0xf0] sm:$0xff]
    %v2556 = vld [vmem:[#allocation7 + $0xf8] sm:$0xff]
    %v2557 = vld [vmem:[#allocation7 + $0x100] sm:$0xff]
    %v2558 = vld [vmem:[#allocation7 + $0x108] sm:$0xff]
    %v2559 = vld [vmem:[#allocation7 + $0x110] sm:$0xff]
    %v2560 = vld [vmem:[#allocation7 + $0x118] sm:$0xff]
    %v2561 = vld [vmem:[#allocation7 + $0x120] sm:$0xff]
    %v2562 = vld [vmem:[#allocation7 + $0x128] sm:$0xff]
    %v2563 = vld [vmem:[#allocation7 + $0x130] sm:$0xff]
    %v2564 = vld [vmem:[#allocation7 + $0x138] sm:$0xff]
    %v2565 = vld [vmem:[#allocation7 + $0x140] sm:$0xff]
    %v2566 = vld [vmem:[#allocation7 + $0x148] sm:$0xff]
    %v2567 = vld [vmem:[#allocation7 + $0x150] sm:$0xff]
    %v2568 = vld [vmem:[#allocation7 + $0x158] sm:$0xff]
    %v2569 = vld [vmem:[#allocation7 + $0x160] sm:$0xff]
    %v2570 = vld [vmem:[#allocation7 + $0x168] sm:$0xff]
    %v2571 = vld [vmem:[#allocation7 + $0x170] sm:$0xff]
    %v2572 = vld [vmem:[#allocation7 + $0x178] sm:$0xff]
    %v2573 = vld [vmem:[#allocation7 + $0x180] sm:$0xff]
    %v2574 = vld [vmem:[#allocation7 + $0x188] sm:$0xff]
    %v2575 = vld [vmem:[#allocation7 + $0x190] sm:$0xff]
    %v2576 = vld [vmem:[#allocation7 + $0x198] sm:$0xff]
    %v2577 = vld [vmem:[#allocation7 + $0x1a0] sm:$0xff]
    %v2578 = vld [vmem:[#allocation7 + $0x1a8] sm:$0xff]
    %v2579 = vld [vmem:[#allocation7 + $0x1b0] sm:$0xff]
    %v2580 = vld [vmem:[#allocation7 + $0x1b8] sm:$0xff]
    %v2581 = vld [vmem:[#allocation7 + $0x1c0] sm:$0xff]
    %v2582 = vld [vmem:[#allocation7 + $0x1c8] sm:$0xff]
    %v2583 = vld [vmem:[#allocation7 + $0x1d0] sm:$0xff]
    %v2584 = vld [vmem:[#allocation7 + $0x1d8] sm:$0xff]
    %v2585 = vld [vmem:[#allocation7 + $0x1e0] sm:$0xff]
    %v2586 = vld [vmem:[#allocation7 + $0x1e8] sm:$0xff]
    %v2587 = vld [vmem:[#allocation7 + $0x1f0] sm:$0xff]
    %v2588 = vld [vmem:[#allocation7 + $0x1f8] sm:$0xff]
    %v2589 = vld [vmem:[%s4] sm:$0x3]
    %v2591 = vlaneseq
    %v2592 = vshrl.u32 %v2591, 7
    %v2593 = vsub.s32 0, %v2592
    %v2594 = vrot.slane %v2589, %v2593
    %v2595 = vlaneseq
    %v2596 = vshrl.u32 %v2595, 7
    %v2597 = vsub.s32 1, %v2596
    %v2598 = vrot.slane %v2589, %v2597
    %v2665 = vunpack.c.l.b16 %v2525
    %v2666 = vunpack.c.h.b16 %v2525
    %v2667 = vunpack.c.l.b16 %v2526
    %v2668 = vunpack.c.h.b16 %v2526
    %v2669 = vunpack.c.l.b16 %v2527
    %v2670 = vunpack.c.h.b16 %v2527
    %v2671 = vunpack.c.l.b16 %v2528
    %v2672 = vunpack.c.h.b16 %v2528
    %v2673 = vunpack.c.l.b16 %v2529
    %v2674 = vunpack.c.h.b16 %v2529
    %v2675 = vunpack.c.l.b16 %v2530
    %v2676 = vunpack.c.h.b16 %v2530
    %v2677 = vunpack.c.l.b16 %v2531
    %v2678 = vunpack.c.h.b16 %v2531
    %v2679 = vunpack.c.l.b16 %v2532
    %v2680 = vunpack.c.h.b16 %v2532
    %v2681 = vunpack.c.l.b16 %v2533
    %v2682 = vunpack.c.h.b16 %v2533
    %v2683 = vunpack.c.l.b16 %v2534
    %v2684 = vunpack.c.h.b16 %v2534
    %v2685 = vunpack.c.l.b16 %v2535
    %v2686 = vunpack.c.h.b16 %v2535
    %v2687 = vunpack.c.l.b16 %v2536
    %v2688 = vunpack.c.h.b16 %v2536
    %v2689 = vunpack.c.l.b16 %v2537
    %v2690 = vunpack.c.h.b16 %v2537
    %v2691 = vunpack.c.l.b16 %v2538
    %v2692 = vunpack.c.h.b16 %v2538
    %v2693 = vunpack.c.l.b16 %v2539
    %v2694 = vunpack.c.h.b16 %v2539
    %v2695 = vunpack.c.l.b16 %v2540
    %v2696 = vunpack.c.h.b16 %v2540
    %v2697 = vunpack.c.l.b16 %v2541
    %v2698 = vunpack.c.h.b16 %v2541
    %v2699 = vunpack.c.l.b16 %v2542
    %v2700 = vunpack.c.h.b16 %v2542
    %v2701 = vunpack.c.l.b16 %v2543
    %v2702 = vunpack.c.h.b16 %v2543
    %v2703 = vunpack.c.l.b16 %v2544
    %v2704 = vunpack.c.h.b16 %v2544
    %v2705 = vunpack.c.l.b16 %v2545
    %v2706 = vunpack.c.h.b16 %v2545
    %v2707 = vunpack.c.l.b16 %v2546
    %v2708 = vunpack.c.h.b16 %v2546
    %v2709 = vunpack.c.l.b16 %v2547
    %v2710 = vunpack.c.h.b16 %v2547
    %v2711 = vunpack.c.l.b16 %v2548
    %v2712 = vunpack.c.h.b16 %v2548
    %v2713 = vunpack.c.l.b16 %v2549
    %v2714 = vunpack.c.h.b16 %v2549
    %v2715 = vunpack.c.l.b16 %v2550
    %v2716 = vunpack.c.h.b16 %v2550
    %v2717 = vunpack.c.l.b16 %v2551
    %v2718 = vunpack.c.h.b16 %v2551
    %v2719 = vunpack.c.l.b16 %v2552
    %v2720 = vunpack.c.h.b16 %v2552
    %v2721 = vunpack.c.l.b16 %v2553
    %v2722 = vunpack.c.h.b16 %v2553
    %v2723 = vunpack.c.l.b16 %v2554
    %v2724 = vunpack.c.h.b16 %v2554
    %v2725 = vunpack.c.l.b16 %v2555
    %v2726 = vunpack.c.h.b16 %v2555
    %v2727 = vunpack.c.l.b16 %v2556
    %v2728 = vunpack.c.h.b16 %v2556
    %v2729 = vunpack.c.l.b16 %v2557
    %v2730 = vunpack.c.h.b16 %v2557
    %v2731 = vunpack.c.l.b16 %v2558
    %v2732 = vunpack.c.h.b16 %v2558
    %v2733 = vunpack.c.l.b16 %v2559
    %v2734 = vunpack.c.h.b16 %v2559
    %v2735 = vunpack.c.l.b16 %v2560
    %v2736 = vunpack.c.h.b16 %v2560
    %v2737 = vunpack.c.l.b16 %v2561
    %v2738 = vunpack.c.h.b16 %v2561
    %v2739 = vunpack.c.l.b16 %v2562
    %v2740 = vunpack.c.h.b16 %v2562
    %v2741 = vunpack.c.l.b16 %v2563
    %v2742 = vunpack.c.h.b16 %v2563
    %v2743 = vunpack.c.l.b16 %v2564
    %v2744 = vunpack.c.h.b16 %v2564
    %v2745 = vunpack.c.l.b16 %v2565
    %v2746 = vunpack.c.h.b16 %v2565
    %v2747 = vunpack.c.l.b16 %v2566
    %v2748 = vunpack.c.h.b16 %v2566
    %v2749 = vunpack.c.l.b16 %v2567
    %v2750 = vunpack.c.h.b16 %v2567
    %v2751 = vunpack.c.l.b16 %v2568
    %v2752 = vunpack.c.h.b16 %v2568
    %v2753 = vunpack.c.l.b16 %v2569
    %v2754 = vunpack.c.h.b16 %v2569
    %v2755 = vunpack.c.l.b16 %v2570
    %v2756 = vunpack.c.h.b16 %v2570
    %v2757 = vunpack.c.l.b16 %v2571
    %v2758 = vunpack.c.h.b16 %v2571
    %v2759 = vunpack.c.l.b16 %v2572
    %v2760 = vunpack.c.h.b16 %v2572
    %v2761 = vunpack.c.l.b16 %v2573
    %v2762 = vunpack.c.h.b16 %v2573
    %v2763 = vunpack.c.l.b16 %v2574
    %v2764 = vunpack.c.h.b16 %v2574
    %v2765 = vunpack.c.l.b16 %v2575
    %v2766 = vunpack.c.h.b16 %v2575
    %v2767 = vunpack.c.l.b16 %v2576
    %v2768 = vunpack.c.h.b16 %v2576
    %v2769 = vunpack.c.l.b16 %v2577
    %v2770 = vunpack.c.h.b16 %v2577
    %v2771 = vunpack.c.l.b16 %v2578
    %v2772 = vunpack.c.h.b16 %v2578
    %v2773 = vunpack.c.l.b16 %v2579
    %v2774 = vunpack.c.h.b16 %v2579
    %v2775 = vunpack.c.l.b16 %v2580
    %v2776 = vunpack.c.h.b16 %v2580
    %v2777 = vunpack.c.l.b16 %v2581
    %v2778 = vunpack.c.h.b16 %v2581
    %v2779 = vunpack.c.l.b16 %v2582
    %v2780 = vunpack.c.h.b16 %v2582
    %v2781 = vunpack.c.l.b16 %v2583
    %v2782 = vunpack.c.h.b16 %v2583
    %v2783 = vunpack.c.l.b16 %v2584
    %v2784 = vunpack.c.h.b16 %v2584
    %v2785 = vunpack.c.l.b16 %v2585
    %v2786 = vunpack.c.h.b16 %v2585
    %v2787 = vunpack.c.l.b16 %v2586
    %v2788 = vunpack.c.h.b16 %v2586
    %v2789 = vunpack.c.l.b16 %v2587
    %v2790 = vunpack.c.h.b16 %v2587
    %v2791 = vunpack.c.l.b16 %v2588
    %v2792 = vunpack.c.h.b16 %v2588
    %v2793 = vpack.c.b16 %v2667, %v2665
    %v2794 = vpack.c.b16 %v2668, %v2666
    %v2795 = vpack.c.b16 %v2671, %v2669
    %v2796 = vpack.c.b16 %v2672, %v2670
    %v2797 = vpack.c.b16 %v2675, %v2673
    %v2798 = vpack.c.b16 %v2676, %v2674
    %v2799 = vpack.c.b16 %v2679, %v2677
    %v2800 = vpack.c.b16 %v2680, %v2678
    %v2801 = vpack.c.b16 %v2683, %v2681
    %v2802 = vpack.c.b16 %v2684, %v2682
    %v2803 = vpack.c.b16 %v2687, %v2685
    %v2804 = vpack.c.b16 %v2688, %v2686
    %v2805 = vpack.c.b16 %v2691, %v2689
    %v2806 = vpack.c.b16 %v2692, %v2690
    %v2807 = vpack.c.b16 %v2695, %v2693
    %v2808 = vpack.c.b16 %v2696, %v2694
    %v2809 = vpack.c.b16 %v2699, %v2697
    %v2810 = vpack.c.b16 %v2700, %v2698
    %v2811 = vpack.c.b16 %v2703, %v2701
    %v2812 = vpack.c.b16 %v2704, %v2702
    %v2813 = vpack.c.b16 %v2707, %v2705
    %v2814 = vpack.c.b16 %v2708, %v2706
    %v2815 = vpack.c.b16 %v2711, %v2709
    %v2816 = vpack.c.b16 %v2712, %v2710
    %v2817 = vpack.c.b16 %v2715, %v2713
    %v2818 = vpack.c.b16 %v2716, %v2714
    %v2819 = vpack.c.b16 %v2719, %v2717
    %v2820 = vpack.c.b16 %v2720, %v2718
    %v2821 = vpack.c.b16 %v2723, %v2721
    %v2822 = vpack.c.b16 %v2724, %v2722
    %v2823 = vpack.c.b16 %v2727, %v2725
    %v2824 = vpack.c.b16 %v2728, %v2726
    %v2825 = vpack.c.b16 %v2731, %v2729
    %v2826 = vpack.c.b16 %v2732, %v2730
    %v2827 = vpack.c.b16 %v2735, %v2733
    %v2828 = vpack.c.b16 %v2736, %v2734
    %v2829 = vpack.c.b16 %v2739, %v2737
    %v2830 = vpack.c.b16 %v2740, %v2738
    %v2831 = vpack.c.b16 %v2743, %v2741
    %v2832 = vpack.c.b16 %v2744, %v2742
    %v2833 = vpack.c.b16 %v2747, %v2745
    %v2834 = vpack.c.b16 %v2748, %v2746
    %v2835 = vpack.c.b16 %v2751, %v2749
    %v2836 = vpack.c.b16 %v2752, %v2750
    %v2837 = vpack.c.b16 %v2755, %v2753
    %v2838 = vpack.c.b16 %v2756, %v2754
    %v2839 = vpack.c.b16 %v2759, %v2757
    %v2840 = vpack.c.b16 %v2760, %v2758
    %v2841 = vpack.c.b16 %v2763, %v2761
    %v2842 = vpack.c.b16 %v2764, %v2762
    %v2843 = vpack.c.b16 %v2767, %v2765
    %v2844 = vpack.c.b16 %v2768, %v2766
    %v2845 = vpack.c.b16 %v2771, %v2769
    %v2846 = vpack.c.b16 %v2772, %v2770
    %v2847 = vpack.c.b16 %v2775, %v2773
    %v2848 = vpack.c.b16 %v2776, %v2774
    %v2849 = vpack.c.b16 %v2779, %v2777
    %v2850 = vpack.c.b16 %v2780, %v2778
    %v2851 = vpack.c.b16 %v2783, %v2781
    %v2852 = vpack.c.b16 %v2784, %v2782
    %v2853 = vpack.c.b16 %v2787, %v2785
    %v2854 = vpack.c.b16 %v2788, %v2786
    %v2855 = vpack.c.b16 %v2791, %v2789
    %v2856 = vpack.c.b16 %v2792, %v2790
    %2921 = vmatprep.subr.bf16.mxu0 %v2794
    %2922 = vmatpush1.bf16.msra.mxu0 %v2793
    %2923 = vmatprep.subr.bf16.mxu0 %v2796
    %2924 = vmatpush1.bf16.msra.mxu0 %v2795
    %2925 = vmatprep.subr.bf16.mxu0 %v2798
    %2926 = vmatpush1.bf16.msra.mxu0 %v2797
    %2927 = vmatprep.subr.bf16.mxu0 %v2800
    %2928 = vmatpush1.bf16.msra.mxu0 %v2799
    %2929 = vmatprep.subr.bf16.mxu0 %v2802
    %2930 = vmatpush1.bf16.msra.mxu0 %v2801
    %2931 = vmatprep.subr.bf16.mxu0 %v2804
    %2932 = vmatpush1.bf16.msra.mxu0 %v2803
    %2933 = vmatprep.subr.bf16.mxu0 %v2806
    %2934 = vmatpush1.bf16.msra.mxu0 %v2805
    %2935 = vmatprep.subr.bf16.mxu0 %v2808
    %2936 = vmatpush1.bf16.msra.mxu0 %v2807
    %2937 = vmatprep.subr.bf16.mxu0 %v2810
    %2938 = vmatpush1.bf16.msra.mxu0 %v2809
    %2939 = vmatprep.subr.bf16.mxu0 %v2812
    %2940 = vmatpush1.bf16.msra.mxu0 %v2811
    %2941 = vmatprep.subr.bf16.mxu0 %v2814
    %2942 = vmatpush1.bf16.msra.mxu0 %v2813
    %2943 = vmatprep.subr.bf16.mxu0 %v2816
    %2944 = vmatpush1.bf16.msra.mxu0 %v2815
    %2945 = vmatprep.subr.bf16.mxu0 %v2818
    %2946 = vmatpush1.bf16.msra.mxu0 %v2817
    %2947 = vmatprep.subr.bf16.mxu0 %v2820
    %2948 = vmatpush1.bf16.msra.mxu0 %v2819
    %2949 = vmatprep.subr.bf16.mxu0 %v2822
    %2950 = vmatpush1.bf16.msra.mxu0 %v2821
    %2951 = vmatprep.subr.bf16.mxu0 %v2824
    %2952 = vmatpush1.bf16.msra.mxu0 %v2823
    %2953 = vmatprep.mubr.bf16.mxu0 %v2494
    %2954 = vmatmul.mubr.bf16.gmra.mrb[0].mxu0 %v2493
    %v2955 = vpop.f32.mrb[0].mxu0
    %v2956 = vadd.f32 %v2594, %v2955
    %v2957 = vpop.f32.mrb[0].mxu0
    %v2958 = vadd.f32 %v2598, %v2957
    %v2959 = vpop.f32.mrb[0].mxu0
    %v2960 = vadd.f32 %v2594, %v2959
    %v2961 = vpop.f32.mrb[0].mxu0
    %v2962 = vadd.f32 %v2598, %v2961
    %2963 = vmatprep.mubr.bf16.mxu0 %v2498
    %2964 = vmatmul.mubr.bf16.gmra.mrb[0].mxu0 %v2497
    %v2965 = vpop.f32.mrb[0].mxu0
    %v2966 = vadd.f32 %v2594, %v2965
    %v2967 = vpop.f32.mrb[0].mxu0
    %v2968 = vadd.f32 %v2598, %v2967
    %v2969 = vpop.f32.mrb[0].mxu0
    %v2970 = vadd.f32 %v2594, %v2969
    %v2971 = vpop.f32.mrb[0].mxu0
    %v2972 = vadd.f32 %v2598, %v2971
    %2973 = vmatprep.mubr.bf16.mxu0 %v2502
    %2974 = vmatmul.mubr.bf16.gmra.mrb[0].mxu0 %v2501
    %v2975 = vpop.f32.mrb[0].mxu0
    %v2976 = vadd.f32 %v2594, %v2975
    %v2977 = vpop.f32.mrb[0].mxu0
    %v2978 = vadd.f32 %v2598, %v2977
    %v2979 = vpop.f32.mrb[0].mxu0
    %v2980 = vadd.f32 %v2594, %v2979
    %v2981 = vpop.f32.mrb[0].mxu0
    %v2982 = vadd.f32 %v2598, %v2981
    %2983 = vmatprep.mubr.bf16.mxu0 %v2506
    %2984 = vmatmul.mubr.bf16.gmra.mrb[0].mxu0 %v2505
    %v2985 = vpop.f32.mrb[0].mxu0
    %v2986 = vadd.f32 %v2594, %v2985
    %v2987 = vpop.f32.mrb[0].mxu0
    %v2988 = vadd.f32 %v2598, %v2987
    %v2989 = vpop.f32.mrb[0].mxu0
    %v2990 = vadd.f32 %v2594, %v2989
    %v2991 = vpop.f32.mrb[0].mxu0
    %v2992 = vadd.f32 %v2598, %v2991
    %2993 = vmatprep.mubr.bf16.mxu0 %v2510
    %2994 = vmatmul.mubr.bf16.gmra.mrb[0].mxu0 %v2509
    %v2995 = vpop.f32.mrb[0].mxu0
    %v2996 = vadd.f32 %v2594, %v2995
    %v2997 = vpop.f32.mrb[0].mxu0
    %v2998 = vadd.f32 %v2598, %v2997
    %v2999 = vpop.f32.mrb[0].mxu0
    %v3000 = vadd.f32 %v2594, %v2999
    %v3001 = vpop.f32.mrb[0].mxu0
    %v3002 = vadd.f32 %v2598, %v3001
    %3003 = vmatprep.mubr.bf16.mxu0 %v2514
    %3004 = vmatmul.mubr.bf16.gmra.mrb[0].mxu0 %v2513
    %v3005 = vpop.f32.mrb[0].mxu0
    %v3006 = vadd.f32 %v2594, %v3005
    %v3007 = vpop.f32.mrb[0].mxu0
    %v3008 = vadd.f32 %v2598, %v3007
    %v3009 = vpop.f32.mrb[0].mxu0
    %v3010 = vadd.f32 %v2594, %v3009
    %v3011 = vpop.f32.mrb[0].mxu0
    %v3012 = vadd.f32 %v2598, %v3011
    %3013 = vmatprep.mubr.bf16.mxu0 %v2518
    %3014 = vmatmul.mubr.bf16.gmra.mrb[0].mxu0 %v2517
    %v3015 = vpop.f32.mrb[0].mxu0
    %v3016 = vadd.f32 %v2594, %v3015
    %v3017 = vpop.f32.mrb[0].mxu0
    %v3018 = vadd.f32 %v2598, %v3017
    %v3019 = vpop.f32.mrb[0].mxu0
    %v3020 = vadd.f32 %v2594, %v3019
    %v3021 = vpop.f32.mrb[0].mxu0
    %v3022 = vadd.f32 %v2598, %v3021
    %3023 = vmatprep.mubr.bf16.mxu0 %v2522
    %3024 = vmatmul.mubr.bf16.gmra.mrb[0].mxu0 %v2521
    %v3025 = vpop.f32.mrb[0].mxu0
    %v3026 = vadd.f32 %v2594, %v3025
    %v3027 = vpop.f32.mrb[0].mxu0
    %v3028 = vadd.f32 %v2598, %v3027
    %v3029 = vpop.f32.mrb[0].mxu0
    %v3030 = vadd.f32 %v2594, %v3029
    %v3031 = vpop.f32.mrb[0].mxu0
    %v3032 = vadd.f32 %v2598, %v3031
    %3033 = vdwg.mxu0
    %3034 = vmatprep.subr.bf16.mxu0 %v2826
    %3035 = vmatpush1.bf16.msra.mxu0 %v2825
    %3036 = vmatprep.subr.bf16.mxu0 %v2828
    %3037 = vmatpush1.bf16.msra.mxu0 %v2827
    %3038 = vmatprep.subr.bf16.mxu0 %v2830
    %3039 = vmatpush1.bf16.msra.mxu0 %v2829
    %3040 = vmatprep.subr.bf16.mxu0 %v2832
    %3041 = vmatpush1.bf16.msra.mxu0 %v2831
    %3042 = vmatprep.subr.bf16.mxu0 %v2834
    %3043 = vmatpush1.bf16.msra.mxu0 %v2833
    %3044 = vmatprep.subr.bf16.mxu0 %v2836
    %3045 = vmatpush1.bf16.msra.mxu0 %v2835
    %3046 = vmatprep.subr.bf16.mxu0 %v2838
    %3047 = vmatpush1.bf16.msra.mxu0 %v2837
    %3048 = vmatprep.subr.bf16.mxu0 %v2840
    %3049 = vmatpush1.bf16.msra.mxu0 %v2839
    %3050 = vmatprep.subr.bf16.mxu0 %v2842
    %3051 = vmatpush1.bf16.msra.mxu0 %v2841
    %3052 = vmatprep.subr.bf16.mxu0 %v2844
    %3053 = vmatpush1.bf16.msra.mxu0 %v2843
    %3054 = vmatprep.subr.bf16.mxu0 %v2846
    %3055 = vmatpush1.bf16.msra.mxu0 %v2845
    %3056 = vmatprep.subr.bf16.mxu0 %v2848
    %3057 = vmatpush1.bf16.msra.mxu0 %v2847
    %3058 = vmatprep.subr.bf16.mxu0 %v2850
    %3059 = vmatpush1.bf16.msra.mxu0 %v2849
    %3060 = vmatprep.subr.bf16.mxu0 %v2852
    %3061 = vmatpush1.bf16.msra.mxu0 %v2851
    %3062 = vmatprep.subr.bf16.mxu0 %v2854
    %3063 = vmatpush1.bf16.msra.mxu0 %v2853
    %3064 = vmatprep.subr.bf16.mxu0 %v2856
    %3065 = vmatpush1.bf16.msra.mxu0 %v2855
    %3066 = vmatprep.mubr.bf16.mxu0 %v2496
    %3067 = vmatmul.mubr.bf16.gmra.mrb[0].mxu0 %v2495
    %v3068 = vpop.f32.mrb[0].mxu0
    %v3069 = vadd.f32 %v2956, %v3068
    %v3070 = vpop.f32.mrb[0].mxu0
    %v3071 = vadd.f32 %v2958, %v3070
    %v3072 = vpop.f32.mrb[0].mxu0
    %v3073 = vadd.f32 %v2960, %v3072
    %v3074 = vpop.f32.mrb[0].mxu0
    %v3075 = vadd.f32 %v2962, %v3074
    %3076 = vmatprep.mubr.bf16.mxu0 %v2500
    %3077 = vmatmul.mubr.bf16.gmra.mrb[0].mxu0 %v2499
    %v3078 = vpop.f32.mrb[0].mxu0
    %v3079 = vadd.f32 %v2966, %v3078
    %v3080 = vpop.f32.mrb[0].mxu0
    %v3081 = vadd.f32 %v2968, %v3080
    %v3082 = vpop.f32.mrb[0].mxu0
    %v3083 = vadd.f32 %v2970, %v3082
    %v3084 = vpop.f32.mrb[0].mxu0
    %v3085 = vadd.f32 %v2972, %v3084
    %3086 = vmatprep.mubr.bf16.mxu0 %v2504
    %3087 = vmatmul.mubr.bf16.gmra.mrb[0].mxu0 %v2503
    %v3088 = vpop.f32.mrb[0].mxu0
    %v3089 = vadd.f32 %v2976, %v3088
    %v3090 = vpop.f32.mrb[0].mxu0
    %v3091 = vadd.f32 %v2978, %v3090
    %v3092 = vpop.f32.mrb[0].mxu0
    %v3093 = vadd.f32 %v2980, %v3092
    %v3094 = vpop.f32.mrb[0].mxu0
    %v3095 = vadd.f32 %v2982, %v3094
    %3096 = vmatprep.mubr.bf16.mxu0 %v2508
    %3097 = vmatmul.mubr.bf16.gmra.mrb[0].mxu0 %v2507
    %v3098 = vpop.f32.mrb[0].mxu0
    %v3099 = vadd.f32 %v2986, %v3098
    %v3100 = vpop.f32.mrb[0].mxu0
    %v3101 = vadd.f32 %v2988, %v3100
    %v3102 = vpop.f32.mrb[0].mxu0
    %v3103 = vadd.f32 %v2990, %v3102
    %v3104 = vpop.f32.mrb[0].mxu0
    %v3105 = vadd.f32 %v2992, %v3104
    %3106 = vmatprep.mubr.bf16.mxu0 %v2512
    %3107 = vmatmul.mubr.bf16.gmra.mrb[0].mxu0 %v2511
    %v3108 = vpop.f32.mrb[0].mxu0
    %v3109 = vadd.f32 %v2996, %v3108
    %v3110 = vpop.f32.mrb[0].mxu0
    %v3111 = vadd.f32 %v2998, %v3110
    %v3112 = vpop.f32.mrb[0].mxu0
    %v3113 = vadd.f32 %v3000, %v3112
    %v3114 = vpop.f32.mrb[0].mxu0
    %v3115 = vadd.f32 %v3002, %v3114
    %3116 = vmatprep.mubr.bf16.mxu0 %v2516
    %3117 = vmatmul.mubr.bf16.gmra.mrb[0].mxu0 %v2515
    %v3118 = vpop.f32.mrb[0].mxu0
    %v3119 = vadd.f32 %v3006, %v3118
    %v3120 = vpop.f32.mrb[0].mxu0
    %v3121 = vadd.f32 %v3008, %v3120
    %v3122 = vpop.f32.mrb[0].mxu0
    %v3123 = vadd.f32 %v3010, %v3122
    %v3124 = vpop.f32.mrb[0].mxu0
    %v3125 = vadd.f32 %v3012, %v3124
    %3126 = vmatprep.mubr.bf16.mxu0 %v2520
    %3127 = vmatmul.mubr.bf16.gmra.mrb[0].mxu0 %v2519
    %v3128 = vpop.f32.mrb[0].mxu0
    %v3129 = vadd.f32 %v3016, %v3128
    %v3130 = vpop.f32.mrb[0].mxu0
    %v3131 = vadd.f32 %v3018, %v3130
    %v3132 = vpop.f32.mrb[0].mxu0
    %v3133 = vadd.f32 %v3020, %v3132
    %v3134 = vpop.f32.mrb[0].mxu0
    %v3135 = vadd.f32 %v3022, %v3134
    %3136 = vmatprep.mubr.bf16.mxu0 %v2524
    %3137 = vmatmul.mubr.bf16.gmra.mrb[0].mxu0 %v2523
    %v3138 = vpop.f32.mrb[0].mxu0
    %v3139 = vadd.f32 %v3026, %v3138
    %v3140 = vpop.f32.mrb[0].mxu0
    %v3141 = vadd.f32 %v3028, %v3140
    %v3142 = vpop.f32.mrb[0].mxu0
    %v3143 = vadd.f32 %v3030, %v3142
    %v3144 = vpop.f32.mrb[0].mxu0
    %v3145 = vadd.f32 %v3032, %v3144
    %3146 = vdwg.mxu0
    %v3147 = vmul.f32 %v3069, 0.2
    %v3148 = vmul.f32 %v3071, 0.2
    %v3149 = vmul.f32 %v3073, 0.2
    %v3150 = vmul.f32 %v3075, 0.2
    %v3151 = vmul.f32 %v3079, 0.2
    %v3152 = vmul.f32 %v3081, 0.2
    %v3153 = vmul.f32 %v3083, 0.2
    %v3154 = vmul.f32 %v3085, 0.2
    %v3155 = vmul.f32 %v3089, 0.2
    %v3156 = vmul.f32 %v3091, 0.2
    %v3157 = vmul.f32 %v3093, 0.2
    %v3158 = vmul.f32 %v3095, 0.2
    %v3159 = vmul.f32 %v3099, 0.2
    %v3160 = vmul.f32 %v3101, 0.2
    %v3161 = vmul.f32 %v3103, 0.2
    %v3162 = vmul.f32 %v3105, 0.2
    %v3163 = vmul.f32 %v3109, 0.2
    %v3164 = vmul.f32 %v3111, 0.2
    %v3165 = vmul.f32 %v3113, 0.2
    %v3166 = vmul.f32 %v3115, 0.2
    %v3167 = vmul.f32 %v3119, 0.2
    %v3168 = vmul.f32 %v3121, 0.2
    %v3169 = vmul.f32 %v3123, 0.2
    %v3170 = vmul.f32 %v3125, 0.2
    %v3171 = vmul.f32 %v3129, 0.2
    %v3172 = vmul.f32 %v3131, 0.2
    %v3173 = vmul.f32 %v3133, 0.2
    %v3174 = vmul.f32 %v3135, 0.2
    %v3175 = vmul.f32 %v3139, 0.2
    %v3176 = vmul.f32 %v3141, 0.2
    %v3177 = vmul.f32 %v3143, 0.2
    %v3178 = vmul.f32 %v3145, 0.2
    %v3179 = vmax.f32 %v3069, %v3147
    %v3180 = vmax.f32 %v3071, %v3148
    %v3181 = vmax.f32 %v3073, %v3149
    %v3182 = vmax.f32 %v3075, %v3150
    %v3183 = vmax.f32 %v3079, %v3151
    %v3184 = vmax.f32 %v3081, %v3152
    %v3185 = vmax.f32 %v3083, %v3153
    %v3186 = vmax.f32 %v3085, %v3154
    %v3187 = vmax.f32 %v3089, %v3155
    %v3188 = vmax.f32 %v3091, %v3156
    %v3189 = vmax.f32 %v3093, %v3157
    %v3190 = vmax.f32 %v3095, %v3158
    %v3191 = vmax.f32 %v3099, %v3159
    %v3192 = vmax.f32 %v3101, %v3160
    %v3193 = vmax.f32 %v3103, %v3161
    %v3194 = vmax.f32 %v3105, %v3162
    %v3195 = vmax.f32 %v3109, %v3163
    %v3196 = vmax.f32 %v3111, %v3164
    %v3197 = vmax.f32 %v3113, %v3165
    %v3198 = vmax.f32 %v3115, %v3166
    %v3199 = vmax.f32 %v3119, %v3167
    %v3200 = vmax.f32 %v3121, %v3168
    %v3201 = vmax.f32 %v3123, %v3169
    %v3202 = vmax.f32 %v3125, %v3170
    %v3203 = vmax.f32 %v3129, %v3171
    %v3204 = vmax.f32 %v3131, %v3172
    %v3205 = vmax.f32 %v3133, %v3173
    %v3206 = vmax.f32 %v3135, %v3174
    %v3207 = vmax.f32 %v3139, %v3175
    %v3208 = vmax.f32 %v3141, %v3176
    %v3209 = vmax.f32 %v3143, %v3177
    %v3210 = vmax.f32 %v3145, %v3178
    %v3211 = vld [vmem:[%s5] sm:$0x3]
    %v3213 = vlaneseq
    %v3214 = vshrl.u32 %v3213, 7
    %v3215 = vsub.s32 0, %v3214
    %v3216 = vrot.slane %v3211, %v3215
    %v3217 = vlaneseq
    %v3218 = vshrl.u32 %v3217, 7
    %v3219 = vsub.s32 1, %v3218
    %v3220 = vrot.slane %v3211, %v3219
    %v3223 = vmul.f32 %v3179, %v3216
    %v3224 = vmul.f32 %v3180, %v3220
    %v3225 = vmul.f32 %v3181, %v3216
    %v3226 = vmul.f32 %v3182, %v3220
    %v3227 = vmul.f32 %v3183, %v3216
    %v3228 = vmul.f32 %v3184, %v3220
    %v3229 = vmul.f32 %v3185, %v3216
    %v3230 = vmul.f32 %v3186, %v3220
    %v3231 = vmul.f32 %v3187, %v3216
    %v3232 = vmul.f32 %v3188, %v3220
    %v3233 = vmul.f32 %v3189, %v3216
    %v3234 = vmul.f32 %v3190, %v3220
    %v3235 = vmul.f32 %v3191, %v3216
    %v3236 = vmul.f32 %v3192, %v3220
    %v3237 = vmul.f32 %v3193, %v3216
    %v3238 = vmul.f32 %v3194, %v3220
    %v3239 = vmul.f32 %v3195, %v3216
    %v3240 = vmul.f32 %v3196, %v3220
    %v3241 = vmul.f32 %v3197, %v3216
    %v3242 = vmul.f32 %v3198, %v3220
    %v3243 = vmul.f32 %v3199, %v3216
    %v3244 = vmul.f32 %v3200, %v3220
    %v3245 = vmul.f32 %v3201, %v3216
    %v3246 = vmul.f32 %v3202, %v3220
    %v3247 = vmul.f32 %v3203, %v3216
    %v3248 = vmul.f32 %v3204, %v3220
    %v3249 = vmul.f32 %v3205, %v3216
    %v3250 = vmul.f32 %v3206, %v3220
    %v3251 = vmul.f32 %v3207, %v3216
    %v3252 = vmul.f32 %v3208, %v3220
    %v3253 = vmul.f32 %v3209, %v3216
    %v3254 = vmul.f32 %v3210, %v3220
    %v3255 = vadd.f32 %v3223, %v3224
    %3256 = vadd.xlane.f32.xlu0 %v3255
    %v3257 = vpop.xlane.xlu0 %3256
    %v3258 = vadd.f32 %v3225, %v3226
    %3259 = vadd.xlane.f32.xlu0 %v3258
    %v3260 = vpop.xlane.xlu0 %3259
    %v3261 = vadd.f32 %v3227, %v3228
    %3262 = vadd.xlane.f32.xlu0 %v3261
    %v3263 = vpop.xlane.xlu0 %3262
    %v3264 = vadd.f32 %v3229, %v3230
    %3265 = vadd.xlane.f32.xlu0 %v3264
    %v3266 = vpop.xlane.xlu0 %3265
    %v3267 = vadd.f32 %v3231, %v3232
    %3268 = vadd.xlane.f32.xlu0 %v3267
    %v3269 = vpop.xlane.xlu0 %3268
    %v3270 = vadd.f32 %v3233, %v3234
    %3271 = vadd.xlane.f32.xlu0 %v3270
    %v3272 = vpop.xlane.xlu0 %3271
    %v3273 = vadd.f32 %v3235, %v3236
    %3274 = vadd.xlane.f32.xlu0 %v3273
    %v3275 = vpop.xlane.xlu0 %3274
    %v3276 = vadd.f32 %v3237, %v3238
    %3277 = vadd.xlane.f32.xlu0 %v3276
    %v3278 = vpop.xlane.xlu0 %3277
    %v3279 = vadd.f32 %v3239, %v3240
    %3280 = vadd.xlane.f32.xlu0 %v3279
    %v3281 = vpop.xlane.xlu0 %3280
    %v3282 = vadd.f32 %v3241, %v3242
    %3283 = vadd.xlane.f32.xlu0 %v3282
    %v3284 = vpop.xlane.xlu0 %3283
    %v3285 = vadd.f32 %v3243, %v3244
    %3286 = vadd.xlane.f32.xlu0 %v3285
    %v3287 = vpop.xlane.xlu0 %3286
    %v3288 = vadd.f32 %v3245, %v3246
    %3289 = vadd.xlane.f32.xlu0 %v3288
    %v3290 = vpop.xlane.xlu0 %3289
    %v3291 = vadd.f32 %v3247, %v3248
    %3292 = vadd.xlane.f32.xlu0 %v3291
    %v3293 = vpop.xlane.xlu0 %3292
    %v3294 = vadd.f32 %v3249, %v3250
    %3295 = vadd.xlane.f32.xlu0 %v3294
    %v3296 = vpop.xlane.xlu0 %3295
    %v3297 = vadd.f32 %v3251, %v3252
    %3298 = vadd.xlane.f32.xlu0 %v3297
    %v3299 = vpop.xlane.xlu0 %3298
    %v3300 = vadd.f32 %v3253, %v3254
    %3301 = vadd.xlane.f32.xlu0 %v3300
    %v3302 = vpop.xlane.xlu0 %3301
    %v3303 = vld [vmem:[#allocation2] sm:$0x1]
    %v3305 = vlaneseq
    %v3306 = vshrl.u32 %v3305, 7
    %v3307 = vsub.s32 0, %v3306
    %v3308 = vrot.slane %v3303, %v3307
    %v3310 = vadd.f32 %v3257, %v3308
    %v3311 = vadd.f32 %v3260, %v3308
    %v3312 = vadd.f32 %v3263, %v3308
    %v3313 = vadd.f32 %v3266, %v3308
    %v3314 = vadd.f32 %v3269, %v3308
    %v3315 = vadd.f32 %v3272, %v3308
    %v3316 = vadd.f32 %v3275, %v3308
    %v3317 = vadd.f32 %v3278, %v3308
    %v3318 = vadd.f32 %v3281, %v3308
    %v3319 = vadd.f32 %v3284, %v3308
    %v3320 = vadd.f32 %v3287, %v3308
    %v3321 = vadd.f32 %v3290, %v3308
    %v3322 = vadd.f32 %v3293, %v3308
    %v3323 = vadd.f32 %v3296, %v3308
    %v3324 = vadd.f32 %v3299, %v3308
    %v3325 = vadd.f32 %v3302, %v3308
    %v3326 = vsub.f32 0.0, %v3310
    %v3327 = vsub.f32 0.0, %v3311
    %v3328 = vsub.f32 0.0, %v3312
    %v3329 = vsub.f32 0.0, %v3313
    %v3330 = vsub.f32 0.0, %v3314
    %v3331 = vsub.f32 0.0, %v3315
    %v3332 = vsub.f32 0.0, %v3316
    %v3333 = vsub.f32 0.0, %v3317
    %v3334 = vsub.f32 0.0, %v3318
    %v3335 = vsub.f32 0.0, %v3319
    %v3336 = vsub.f32 0.0, %v3320
    %v3337 = vsub.f32 0.0, %v3321
    %v3338 = vsub.f32 0.0, %v3322
    %v3339 = vsub.f32 0.0, %v3323
    %v3340 = vsub.f32 0.0, %v3324
    %v3341 = vsub.f32 0.0, %v3325
    %v3342 = vmul.f32 %v3326, 1.442695
    %v3343 = vpow.pop %v3342
    %v3344 = vmul.f32 %v3327, 1.442695
    %v3345 = vpow.pop %v3344
    %v3346 = vmul.f32 %v3328, 1.442695
    %v3347 = vpow.pop %v3346
    %v3348 = vmul.f32 %v3329, 1.442695
    %v3349 = vpow.pop %v3348
    %v3350 = vmul.f32 %v3330, 1.442695
    %v3351 = vpow.pop %v3350
    %v3352 = vmul.f32 %v3331, 1.442695
    %v3353 = vpow.pop %v3352
    %v3354 = vmul.f32 %v3332, 1.442695
    %v3355 = vpow.pop %v3354
    %v3356 = vmul.f32 %v3333, 1.442695
    %v3357 = vpow.pop %v3356
    %v3358 = vmul.f32 %v3334, 1.442695
    %v3359 = vpow.pop %v3358
    %v3360 = vmul.f32 %v3335, 1.442695
    %v3361 = vpow.pop %v3360
    %v3362 = vmul.f32 %v3336, 1.442695
    %v3363 = vpow.pop %v3362
    %v3364 = vmul.f32 %v3337, 1.442695
    %v3365 = vpow.pop %v3364
    %v3366 = vmul.f32 %v3338, 1.442695
    %v3367 = vpow.pop %v3366
    %v3368 = vmul.f32 %v3339, 1.442695
    %v3369 = vpow.pop %v3368
    %v3370 = vmul.f32 %v3340, 1.442695
    %v3371 = vpow.pop %v3370
    %v3372 = vmul.f32 %v3341, 1.442695
    %v3373 = vpow.pop %v3372
    %v3374 = vadd.f32 %v3343, 1.0
    %v3375 = vadd.f32 %v3345, 1.0
    %v3376 = vadd.f32 %v3347, 1.0
    %v3377 = vadd.f32 %v3349, 1.0
    %v3378 = vadd.f32 %v3351, 1.0
    %v3379 = vadd.f32 %v3353, 1.0
    %v3380 = vadd.f32 %v3355, 1.0
    %v3381 = vadd.f32 %v3357, 1.0
    %v3382 = vadd.f32 %v3359, 1.0
    %v3383 = vadd.f32 %v3361, 1.0
    %v3384 = vadd.f32 %v3363, 1.0
    %v3385 = vadd.f32 %v3365, 1.0
    %v3386 = vadd.f32 %v3367, 1.0
    %v3387 = vadd.f32 %v3369, 1.0
    %v3388 = vadd.f32 %v3371, 1.0
    %v3389 = vadd.f32 %v3373, 1.0
    %v3390 = vrcp.pop %v3374
    %v3391 = vrcp.pop %v3375
    %v3392 = vrcp.pop %v3376
    %v3393 = vrcp.pop %v3377
    %v3394 = vrcp.pop %v3378
    %v3395 = vrcp.pop %v3379
    %v3396 = vrcp.pop %v3380
    %v3397 = vrcp.pop %v3381
    %v3398 = vrcp.pop %v3382
    %v3399 = vrcp.pop %v3383
    %v3400 = vrcp.pop %v3384
    %v3401 = vrcp.pop %v3385
    %v3402 = vrcp.pop %v3386
    %v3403 = vrcp.pop %v3387
    %v3404 = vrcp.pop %v3388
    %v3405 = vrcp.pop %v3389
    %vm3406 = vcmask 7168
    %3407 = vst.msk [vmem:[%s7] sm:$0xff] %vm3406, %v3390
    %3408 = vst.msk [vmem:[%s7 + $0x8] sm:$0xff] %vm3406, %v3391
    %3409 = vst.msk [vmem:[%s7 + $0x10] sm:$0xff] %vm3406, %v3392
    %3410 = vst.msk [vmem:[%s7 + $0x18] sm:$0xff] %vm3406, %v3393
    %3411 = vst.msk [vmem:[%s7 + $0x20] sm:$0xff] %vm3406, %v3394
    %3412 = vst.msk [vmem:[%s7 + $0x28] sm:$0xff] %vm3406, %v3395
    %3413 = vst.msk [vmem:[%s7 + $0x30] sm:$0xff] %vm3406, %v3396
    %3414 = vst.msk [vmem:[%s7 + $0x38] sm:$0xff] %vm3406, %v3397
    %3415 = vst.msk [vmem:[%s7 + $0x40] sm:$0xff] %vm3406, %v3398
    %3416 = vst.msk [vmem:[%s7 + $0x48] sm:$0xff] %vm3406, %v3399
    %3417 = vst.msk [vmem:[%s7 + $0x50] sm:$0xff] %vm3406, %v3400
    %3418 = vst.msk [vmem:[%s7 + $0x58] sm:$0xff] %vm3406, %v3401
    %3419 = vst.msk [vmem:[%s7 + $0x60] sm:$0xff] %vm3406, %v3402
    %3420 = vst.msk [vmem:[%s7 + $0x68] sm:$0xff] %vm3406, %v3403
    %3421 = vst.msk [vmem:[%s7 + $0x70] sm:$0xff] %vm3406, %v3404
    %3422 = vst.msk [vmem:[%s7 + $0x78] sm:$0xff] %vm3406, %v3405
    // Predicated region
    $region42: #{discriminator_forward.1} parent=1 // pred_check
      _
    $region43: #{discriminator_forward.1} parent=1 // pred_check_branch
      %3424 = sbr.rel (0) target = $region45
    $region44: #{discriminator_forward.1} parent=1 // pred_region
      _
    $region45: #{discriminator_forward.1} parent=1 // pred_fallthru
      _
    // Predicated region
    $region46: #{discriminator_forward.1} parent=1 // pred_check
      _
    $region47: #{discriminator_forward.1} parent=1 // pred_check_branch
      %3426 = sbr.rel (0) target = $region49
    $region48: #{discriminator_forward.1} parent=1 // pred_region
      _
    $region49: #{discriminator_forward.1} parent=1 // pred_fallthru
      _
    %3427 = vsyncpa [#allocation4], 1
    %3428 = vsyncpa [#allocation6], 1

</llo_original>
